<compile_context>
chip_gen: v6e
topology: v6e:2x2x1
jax: 0.10.0
libtpu: 0.0.40
codegen_flags: <defaults>
</compile_context>

<pallas_src>
import math
import jax
import jax.numpy as jnp
from jax.experimental import pallas as pl
from jax.experimental.pallas import tpu as pltpu


def predictor_kernel(x_ref, w_ref, b_ref, wem_ref, be_ref, out_ref):
    # x_ref  : (TB, C, L)  f32   native-layout batch tile
    # w_ref  : (L, C*H)    bf16  per-channel weights concatenated along N (resident)
    # b_ref  : (1, C*H)    f32   concatenated biases (resident)
    # wem_ref: (C, 1, C*H) f32   block-masked encoder weights (resident)
    # be_ref : (1, 1)      f32   encoder bias
    # out_ref: (TB, 1)     f32   per-row prediction
    TB, C, L = x_ref.shape
    HC = w_ref.shape[1]

    w = w_ref[...]            # hoisted loads of the small resident operands
    b = b_ref[...]

    z = jnp.zeros((TB, HC), jnp.float32)
    for c in range(C):        # static 6-iteration loop (unrolled at trace time)
        xc = x_ref[:, c, :].astype(jnp.bfloat16)                        # (TB, L)
        yc = jnp.dot(xc, w, preferred_element_type=jnp.float32) + b     # (TB, HC)
        if c != 1:            # dnn_2 (c == 1) has no ReLU -- static branch, no select
            yc = jnp.maximum(yc, 0.0)
        # wem_ref[c] is zero outside column block c, so cross-channel garbage
        # columns of yc never reach the output; it also carries the encoder weights.
        z = z + yc * wem_ref[c]
    red = jnp.sum(z, axis=-1, keepdims=True)                            # (TB, 1)
    out_ref[...] = red + be_ref[0, 0]


def prepare_params(w_stack, b_stack, w_enc, b_enc):
    """One-time (parameter-load time) preprocessing of the weights."""
    C, L, H = w_stack.shape
    HC = C * H
    # Concatenate per-channel weights along N: w_cat[:, c*H:(c+1)*H] = w_stack[c].
    w_cat = jnp.transpose(w_stack, (1, 0, 2)).reshape(L, HC).astype(jnp.bfloat16)
    b_cat = b_stack.reshape(1, HC).astype(jnp.float32)
    # Block-masked encoder weights: wem[c] keeps only column block c and carries We.
    blk = jnp.repeat(jnp.eye(C, dtype=jnp.float32), H, axis=1)          # (C, HC)
    wem = (blk * w_enc.reshape(1, HC).astype(jnp.float32))[:, None, :]  # (C, 1, HC)
    be = jnp.reshape(b_enc, (1, 1)).astype(jnp.float32)
    return w_cat, b_cat, wem, be


def _round_up(v, m):
    return ((v + m - 1) // m) * m


def _choose_batch_tile(B, L):
    # VMEM budget: 2 double-buffered f32 x tiles of (TB, 8, L) should stay <~32 MiB
    # -> TB <= 512K / L; additionally cap at 256 for v7x's 64 MiB physical VMEM.
    cap = max(8, min(256, ((524288 // max(L, 1)) // 8) * 8))
    if B <= 16:
        return min(cap, _round_up(B, 8))            # tiny batch: one small tile
    if B <= 2 * cap:
        return min(cap, _round_up(pl.cdiv(B, 2), 8))  # two tiles: both v7x TCs busy
    return cap


def predictor_forward(x, prepared_params):
    """x: (B, 6, L) f32, native layout -> (B, 1, 1) f32 (dropout = identity)."""
    w_cat, b_cat, wem, be = prepared_params
    B, C, L = x.shape
    HC = w_cat.shape[1]

    TB = _choose_batch_tile(B, L)
    G = pl.cdiv(B, TB)

    out = pl.pallas_call(
        predictor_kernel,
        out_shape=jax.ShapeDtypeStruct((G * TB, 1), jnp.float32),
        grid=(G,),
        in_specs=[
            pl.BlockSpec((TB, C, L), lambda i: (i, 0, 0)),   # x: batch-tiled, native layout
            pl.BlockSpec((L, HC), lambda i: (0, 0)),         # weights: resident
            pl.BlockSpec((1, HC), lambda i: (0, 0)),
            pl.BlockSpec((C, 1, HC), lambda i: (0, 0, 0)),
            pl.BlockSpec((1, 1), lambda i: (0, 0)),
        ],
        out_specs=pl.BlockSpec((TB, 1), lambda i: (i, 0)),
        compiler_params=pltpu.CompilerParams(
            dimension_semantics=("parallel",),   # batch tiles shard across v7x TCs
            vmem_limit_bytes=48 * 1024 * 1024,
        ),
    )(x, w_cat, b_cat, wem, be)

    # Rows >= B of the last (partial) tile were computed from unspecified padding
    # data; each output row depends only on its own input row, so just drop them.
    return out[:B].reshape(B, 1, 1)


def make_params(key, vect_length):
    """Deterministic PyTorch-style Linear init: U(-1/sqrt(fan_in), 1/sqrt(fan_in))."""
    H = vect_length // 256
    k1, k2, k3, k4 = jax.random.split(key, 4)
    bound_in = 1.0 / math.sqrt(vect_length)
    # per-channel Linear(vect_length, H): stored as (6, L, H) = W^T stacked
    w_stack = jax.random.uniform(k1, (6, vect_length, H), jnp.float32,
                                 minval=-bound_in, maxval=bound_in)
    b_stack = jax.random.uniform(k2, (6, H), jnp.float32,
                                 minval=-bound_in, maxval=bound_in)
    # encoder Linear(6*H, 1): stored as (6*H, 1) = W^T
    bound_enc = 1.0 / math.sqrt(6 * H)
    w_enc = jax.random.uniform(k3, (6 * H, 1), jnp.float32,
                               minval=-bound_enc, maxval=bound_enc)
    b_enc = jax.random.uniform(k4, (1, 1), jnp.float32,
                               minval=-bound_enc, maxval=bound_enc)
    return w_stack, b_stack, w_enc, b_enc


def predictor_reference(x, w_stack, b_stack, w_enc, b_enc):
    """Pure-JAX reference mirroring the PyTorch forward (dropout = identity)."""
    codes = []
    for i in range(6):
        c = x[:, i, :] @ w_stack[i] + b_stack[i]
        if i != 1:
            c = jnp.maximum(c, 0.0)
        codes.append(c)
    code_all = jnp.concatenate(codes, axis=-1)           # (B, 6H)
    out = code_all @ w_enc + b_enc[0, 0]                 # (B, 1)
    return out[:, :, None]                               # (B, 1, 1)


def _run_case(key, B, vect_length):
    kx, kp = jax.random.split(key)
    x = jax.random.normal(kx, (B, 6, vect_length), jnp.float32)
    w_stack, b_stack, w_enc, b_enc = make_params(kp, vect_length)
    prepared = prepare_params(w_stack, b_stack, w_enc, b_enc)

    out = jax.block_until_ready(predictor_forward(x, prepared))
    assert out.shape == (B, 1, 1), out.shape

    # Loose check vs exact f32 reference (x / W are bf16-quantized in the kernel).
    ref_f32 = predictor_reference(x, w_stack, b_stack, w_enc, b_enc)
    assert jnp.allclose(out, ref_f32, atol=2e-2, rtol=2e-2), (out, ref_f32)

    # Tight check vs a reference fed the same bf16-quantized big operands.
    xq = x.astype(jnp.bfloat16).astype(jnp.float32)
    wq = w_stack.astype(jnp.bfloat16).astype(jnp.float32)
    ref_bf16 = predictor_reference(xq, wq, b_stack, w_enc, b_enc)
    assert jnp.allclose(out, ref_bf16, atol=1e-3, rtol=1e-3), (out, ref_bf16)


if __name__ == "__main__":
    key = jax.random.PRNGKey(0)
    k1, k2 = jax.random.split(key)
    # Small-batch single-tile path (TB = 8, padded from B = 4).
    _run_case(k1, B=4, vect_length=1024)
    # Two-tile path with a partial last block (TB = 16, G = 2, B = 24).
    _run_case(k2, B=24, vect_length=512)
    print("KERNEL_OK")
</pallas_src>

<mosaic_0001>
module attributes {stable_mosaic.version = 11 : i64} {
  func.func @predictor_kernel(%arg0: i32, %arg1: memref<8x6x1024xf32, #tpu.memory_space<vmem>>, %arg2: memref<1024x24xbf16, #tpu.memory_space<vmem>>, %arg3: memref<1x24xf32, #tpu.memory_space<vmem>>, %arg4: memref<6x1x24xf32, #tpu.memory_space<vmem>>, %arg5: memref<1x1xf32, #tpu.memory_space<vmem>>, %arg6: memref<8x1xf32, #tpu.memory_space<vmem>>) attributes {dimension_semantics = [#tpu.dimension_semantics<parallel>], iteration_bounds = array<i64: 1>, scalar_prefetch = 0 : i64, scratch_operands = 0 : i64, tpu.core_type = #tpu.core_type<tc>, window_params = [{transform_indices = @transform_0, window_bounds = array<i64: 8, 6, 1024>}, {pipeline_mode = #tpu.pipeline_mode<synchronous>, transform_indices = @transform_1, window_bounds = array<i64: 1024, 24>}, {pipeline_mode = #tpu.pipeline_mode<synchronous>, transform_indices = @transform_2, window_bounds = array<i64: 1, 24>}, {pipeline_mode = #tpu.pipeline_mode<synchronous>, transform_indices = @transform_3, window_bounds = array<i64: 6, 1, 24>}, {pipeline_mode = #tpu.pipeline_mode<synchronous>, transform_indices = @transform_4, window_bounds = array<i64: 1, 1>}, {transform_indices = @transform_5, window_bounds = array<i64: 8, 1>}]} {
    %c0 = arith.constant 0 : index
    %c0_0 = arith.constant 0 : index
    %0 = vector.load %arg2[%c0, %c0_0] : memref<1024x24xbf16, #tpu.memory_space<vmem>>, vector<1024x24xbf16>
    %c0_1 = arith.constant 0 : index
    %c0_2 = arith.constant 0 : index
    %1 = vector.load %arg3[%c0_1, %c0_2] : memref<1x24xf32, #tpu.memory_space<vmem>>, vector<1x24xf32>
    %cst = arith.constant 0.000000e+00 : f32
    %2 = vector.broadcast %cst : f32 to vector<8x24xf32>
    %c0_3 = arith.constant 0 : index
    %c0_4 = arith.constant 0 : index
    %c0_5 = arith.constant 0 : index
    %3 = vector.load %arg1[%c0_3, %c0_4, %c0_5] : memref<8x6x1024xf32, #tpu.memory_space<vmem>>, vector<8x1x1024xf32>
    %4 = vector.shape_cast %3 : vector<8x1x1024xf32> to vector<8x1024xf32>
    %5 = arith.truncf %4 : vector<8x1024xf32> to vector<8x1024xbf16>
    %cst_6 = arith.constant dense<0.000000e+00> : vector<8x24xf32>
    %6 = tpu.matmul %5, %0, %cst_6 {dimension_numbers = #tpu.dot_dimension_numbers<[1], [0], [0], [1], [0, 0, 1, 1], [], []>} : vector<8x1024xbf16>, vector<1024x24xbf16>, vector<8x24xf32> -> vector<8x24xf32>
    %7 = vector.broadcast %1 : vector<1x24xf32> to vector<8x24xf32>
    %8 = arith.addf %6, %7 : vector<8x24xf32>
    %cst_7 = arith.constant 0.000000e+00 : f32
    %9 = vector.broadcast %cst_7 : f32 to vector<8x24xf32>
    %10 = arith.maximumf %8, %9 : vector<8x24xf32>
    %c0_8 = arith.constant 0 : index
    %c0_9 = arith.constant 0 : index
    %c0_10 = arith.constant 0 : index
    %11 = vector.load %arg4[%c0_8, %c0_9, %c0_10] : memref<6x1x24xf32, #tpu.memory_space<vmem>>, vector<1x1x24xf32>
    %12 = vector.shape_cast %11 : vector<1x1x24xf32> to vector<1x24xf32>
    %13 = vector.broadcast %12 : vector<1x24xf32> to vector<8x24xf32>
    %14 = arith.mulf %10, %13 : vector<8x24xf32>
    %15 = arith.addf %2, %14 : vector<8x24xf32>
    %c0_11 = arith.constant 0 : index
    %c1 = arith.constant 1 : index
    %c0_12 = arith.constant 0 : index
    %16 = vector.load %arg1[%c0_11, %c1, %c0_12] : memref<8x6x1024xf32, #tpu.memory_space<vmem>>, vector<8x1x1024xf32>
    %17 = vector.shape_cast %16 : vector<8x1x1024xf32> to vector<8x1024xf32>
    %18 = arith.truncf %17 : vector<8x1024xf32> to vector<8x1024xbf16>
    %cst_13 = arith.constant dense<0.000000e+00> : vector<8x24xf32>
    %19 = tpu.matmul %18, %0, %cst_13 {dimension_numbers = #tpu.dot_dimension_numbers<[1], [0], [0], [1], [0, 0, 1, 1], [], []>} : vector<8x1024xbf16>, vector<1024x24xbf16>, vector<8x24xf32> -> vector<8x24xf32>
    %20 = vector.broadcast %1 : vector<1x24xf32> to vector<8x24xf32>
    %21 = arith.addf %19, %20 : vector<8x24xf32>
    %c1_14 = arith.constant 1 : index
    %c0_15 = arith.constant 0 : index
    %c0_16 = arith.constant 0 : index
    %22 = vector.load %arg4[%c1_14, %c0_15, %c0_16] : memref<6x1x24xf32, #tpu.memory_space<vmem>>, vector<1x1x24xf32>
    %23 = vector.shape_cast %22 : vector<1x1x24xf32> to vector<1x24xf32>
    %24 = vector.broadcast %23 : vector<1x24xf32> to vector<8x24xf32>
    %25 = arith.mulf %21, %24 : vector<8x24xf32>
    %26 = arith.addf %15, %25 : vector<8x24xf32>
    %c0_17 = arith.constant 0 : index
    %c2 = arith.constant 2 : index
    %c0_18 = arith.constant 0 : index
    %27 = vector.load %arg1[%c0_17, %c2, %c0_18] : memref<8x6x1024xf32, #tpu.memory_space<vmem>>, vector<8x1x1024xf32>
    %28 = vector.shape_cast %27 : vector<8x1x1024xf32> to vector<8x1024xf32>
    %29 = arith.truncf %28 : vector<8x1024xf32> to vector<8x1024xbf16>
    %cst_19 = arith.constant dense<0.000000e+00> : vector<8x24xf32>
    %30 = tpu.matmul %29, %0, %cst_19 {dimension_numbers = #tpu.dot_dimension_numbers<[1], [0], [0], [1], [0, 0, 1, 1], [], []>} : vector<8x1024xbf16>, vector<1024x24xbf16>, vector<8x24xf32> -> vector<8x24xf32>
    %31 = vector.broadcast %1 : vector<1x24xf32> to vector<8x24xf32>
    %32 = arith.addf %30, %31 : vector<8x24xf32>
    %cst_20 = arith.constant 0.000000e+00 : f32
    %33 = vector.broadcast %cst_20 : f32 to vector<8x24xf32>
    %34 = arith.maximumf %32, %33 : vector<8x24xf32>
    %c2_21 = arith.constant 2 : index
    %c0_22 = arith.constant 0 : index
    %c0_23 = arith.constant 0 : index
    %35 = vector.load %arg4[%c2_21, %c0_22, %c0_23] : memref<6x1x24xf32, #tpu.memory_space<vmem>>, vector<1x1x24xf32>
    %36 = vector.shape_cast %35 : vector<1x1x24xf32> to vector<1x24xf32>
    %37 = vector.broadcast %36 : vector<1x24xf32> to vector<8x24xf32>
    %38 = arith.mulf %34, %37 : vector<8x24xf32>
    %39 = arith.addf %26, %38 : vector<8x24xf32>
    %c0_24 = arith.constant 0 : index
    %c3 = arith.constant 3 : index
    %c0_25 = arith.constant 0 : index
    %40 = vector.load %arg1[%c0_24, %c3, %c0_25] : memref<8x6x1024xf32, #tpu.memory_space<vmem>>, vector<8x1x1024xf32>
    %41 = vector.shape_cast %40 : vector<8x1x1024xf32> to vector<8x1024xf32>
    %42 = arith.truncf %41 : vector<8x1024xf32> to vector<8x1024xbf16>
    %cst_26 = arith.constant dense<0.000000e+00> : vector<8x24xf32>
    %43 = tpu.matmul %42, %0, %cst_26 {dimension_numbers = #tpu.dot_dimension_numbers<[1], [0], [0], [1], [0, 0, 1, 1], [], []>} : vector<8x1024xbf16>, vector<1024x24xbf16>, vector<8x24xf32> -> vector<8x24xf32>
    %44 = vector.broadcast %1 : vector<1x24xf32> to vector<8x24xf32>
    %45 = arith.addf %43, %44 : vector<8x24xf32>
    %cst_27 = arith.constant 0.000000e+00 : f32
    %46 = vector.broadcast %cst_27 : f32 to vector<8x24xf32>
    %47 = arith.maximumf %45, %46 : vector<8x24xf32>
    %c3_28 = arith.constant 3 : index
    %c0_29 = arith.constant 0 : index
    %c0_30 = arith.constant 0 : index
    %48 = vector.load %arg4[%c3_28, %c0_29, %c0_30] : memref<6x1x24xf32, #tpu.memory_space<vmem>>, vector<1x1x24xf32>
    %49 = vector.shape_cast %48 : vector<1x1x24xf32> to vector<1x24xf32>
    %50 = vector.broadcast %49 : vector<1x24xf32> to vector<8x24xf32>
    %51 = arith.mulf %47, %50 : vector<8x24xf32>
    %52 = arith.addf %39, %51 : vector<8x24xf32>
    %c0_31 = arith.constant 0 : index
    %c4 = arith.constant 4 : index
    %c0_32 = arith.constant 0 : index
    %53 = vector.load %arg1[%c0_31, %c4, %c0_32] : memref<8x6x1024xf32, #tpu.memory_space<vmem>>, vector<8x1x1024xf32>
    %54 = vector.shape_cast %53 : vector<8x1x1024xf32> to vector<8x1024xf32>
    %55 = arith.truncf %54 : vector<8x1024xf32> to vector<8x1024xbf16>
    %cst_33 = arith.constant dense<0.000000e+00> : vector<8x24xf32>
    %56 = tpu.matmul %55, %0, %cst_33 {dimension_numbers = #tpu.dot_dimension_numbers<[1], [0], [0], [1], [0, 0, 1, 1], [], []>} : vector<8x1024xbf16>, vector<1024x24xbf16>, vector<8x24xf32> -> vector<8x24xf32>
    %57 = vector.broadcast %1 : vector<1x24xf32> to vector<8x24xf32>
    %58 = arith.addf %56, %57 : vector<8x24xf32>
    %cst_34 = arith.constant 0.000000e+00 : f32
    %59 = vector.broadcast %cst_34 : f32 to vector<8x24xf32>
    %60 = arith.maximumf %58, %59 : vector<8x24xf32>
    %c4_35 = arith.constant 4 : index
    %c0_36 = arith.constant 0 : index
    %c0_37 = arith.constant 0 : index
    %61 = vector.load %arg4[%c4_35, %c0_36, %c0_37] : memref<6x1x24xf32, #tpu.memory_space<vmem>>, vector<1x1x24xf32>
    %62 = vector.shape_cast %61 : vector<1x1x24xf32> to vector<1x24xf32>
    %63 = vector.broadcast %62 : vector<1x24xf32> to vector<8x24xf32>
    %64 = arith.mulf %60, %63 : vector<8x24xf32>
    %65 = arith.addf %52, %64 : vector<8x24xf32>
    %c0_38 = arith.constant 0 : index
    %c5 = arith.constant 5 : index
    %c0_39 = arith.constant 0 : index
    %66 = vector.load %arg1[%c0_38, %c5, %c0_39] : memref<8x6x1024xf32, #tpu.memory_space<vmem>>, vector<8x1x1024xf32>
    %67 = vector.shape_cast %66 : vector<8x1x1024xf32> to vector<8x1024xf32>
    %68 = arith.truncf %67 : vector<8x1024xf32> to vector<8x1024xbf16>
    %cst_40 = arith.constant dense<0.000000e+00> : vector<8x24xf32>
    %69 = tpu.matmul %68, %0, %cst_40 {dimension_numbers = #tpu.dot_dimension_numbers<[1], [0], [0], [1], [0, 0, 1, 1], [], []>} : vector<8x1024xbf16>, vector<1024x24xbf16>, vector<8x24xf32> -> vector<8x24xf32>
    %70 = vector.broadcast %1 : vector<1x24xf32> to vector<8x24xf32>
    %71 = arith.addf %69, %70 : vector<8x24xf32>
    %cst_41 = arith.constant 0.000000e+00 : f32
    %72 = vector.broadcast %cst_41 : f32 to vector<8x24xf32>
    %73 = arith.maximumf %71, %72 : vector<8x24xf32>
    %c5_42 = arith.constant 5 : index
    %c0_43 = arith.constant 0 : index
    %c0_44 = arith.constant 0 : index
    %74 = vector.load %arg4[%c5_42, %c0_43, %c0_44] : memref<6x1x24xf32, #tpu.memory_space<vmem>>, vector<1x1x24xf32>
    %75 = vector.shape_cast %74 : vector<1x1x24xf32> to vector<1x24xf32>
    %76 = vector.broadcast %75 : vector<1x24xf32> to vector<8x24xf32>
    %77 = arith.mulf %73, %76 : vector<8x24xf32>
    %78 = arith.addf %65, %77 : vector<8x24xf32>
    %cst_45 = arith.constant dense<0.000000e+00> : vector<8xf32>
    %79 = vector.multi_reduction <add>, %78, %cst_45 [1] : vector<8x24xf32> to vector<8xf32>
    %80 = vector.shape_cast %79 : vector<8xf32> to vector<8x1xf32>
    %c0_46 = arith.constant 0 : index
    %c0_47 = arith.constant 0 : index
    %81 = vector.load %arg5[%c0_46, %c0_47] : memref<1x1xf32, #tpu.memory_space<vmem>>, vector<1x1xf32>
    %82 = vector.extract %81[0, 0] : f32 from vector<1x1xf32>
    %83 = vector.broadcast %82 : f32 to vector<8x1xf32>
    %84 = arith.addf %80, %83 : vector<8x1xf32>
    %c0_48 = arith.constant 0 : index
    %c0_49 = arith.constant 0 : index
    %85 = vector.load %arg6[%c0_48, %c0_49] : memref<8x1xf32, #tpu.memory_space<vmem>>, vector<8x1xf32>
    tpu.vector_store %arg6[%c0_48, %c0_49], %84 {strides = array<i32>} : memref<8x1xf32, #tpu.memory_space<vmem>>, vector<8x1xf32>,
    return
  }
  func.func @transform_0(%arg0: i32) -> (i32, i32, i32) {
    %c0_i32 = arith.constant 0 : i32
    %c0_i32_0 = arith.constant 0 : i32
    %c0_i32_1 = arith.constant 0 : i32
    return %arg0, %c0_i32, %c0_i32_0 : i32, i32, i32
  }
  func.func @transform_1(%arg0: i32) -> (i32, i32) {
    %c0_i32 = arith.constant 0 : i32
    %c0_i32_0 = arith.constant 0 : i32
    %c0_i32_1 = arith.constant 0 : i32
    return %c0_i32, %c0_i32_0 : i32, i32
  }
  func.func @transform_2(%arg0: i32) -> (i32, i32) {
    %c0_i32 = arith.constant 0 : i32
    %c0_i32_0 = arith.constant 0 : i32
    %c0_i32_1 = arith.constant 0 : i32
    return %c0_i32, %c0_i32_0 : i32, i32
  }
  func.func @transform_3(%arg0: i32) -> (i32, i32, i32) {
    %c0_i32 = arith.constant 0 : i32
    %c0_i32_0 = arith.constant 0 : i32
    %c0_i32_1 = arith.constant 0 : i32
    %c0_i32_2 = arith.constant 0 : i32
    return %c0_i32, %c0_i32_0, %c0_i32_1 : i32, i32, i32
  }
  func.func @transform_4(%arg0: i32) -> (i32, i32) {
    %c0_i32 = arith.constant 0 : i32
    %c0_i32_0 = arith.constant 0 : i32
    %c0_i32_1 = arith.constant 0 : i32
    return %c0_i32, %c0_i32_0 : i32, i32
  }
  func.func @transform_5(%arg0: i32) -> (i32, i32) {
    %c0_i32 = arith.constant 0 : i32
    %c0_i32_0 = arith.constant 0 : i32
    return %arg0, %c0_i32 : i32, i32
  }
}

</mosaic_0001>

<llo_original>
// kernel: tpu_custom_call.1
$region0: #{tpu_custom_call.1}
  #allocation0 [shape = 'u32[]', space=smem, size = 0x4, offset = 0x4, fixed_abs, tag = 'smem constant byte address 0x4 - core index']
  #allocation1 [shape = 'u32[144,128]{1,0:T(1,128)}', space=vmem, size = 0x12000, scoped, tag = 'internal scratch']
  #allocation2 [shape = 'f32[1,1]{1,0:T(1,128)S(1)}', space=vmem, size = 0x200, scoped, tag = 'scoped memory for tpu_custom_call.1']
  %s0 = inlined_call_operand.vmem [shape: f32[4,6,1024], index: 0, kind: input, shape index: {}]
  %s1 = inlined_call_operand.vmem [shape: bf16[1024,24], index: 1, kind: input, shape index: {}]
  %s2 = inlined_call_operand.vmem [shape: f32[1,24], index: 2, kind: input, shape index: {}]
  %s3 = inlined_call_operand.vmem [shape: f32[6,1,24], index: 3, kind: input, shape index: {}]
  %s4 = inlined_call_operand.<no memory space> [shape: f32[1,1], index: 4, kind: input, shape index: {}]
  %s5 = inlined_call_operand.vmem [shape: f32[8,1], index: 5, kind: output, shape index: {}]
  %s6 = sld [smem:[#allocation0]]
  $region30: #{tpu_custom_call.1} parent=0
    _
  %s8 = ssub.s32 1, %s6
  %s9 = scalar_select 0, %s8, %s6
  %v10 = vstv %s4
  %11 = vst [vmem:[#allocation2] sm:$0x1] %v10
  // Predicated region
  $region2: #{tpu_custom_call.1} parent=0 // pred_check
    _
  $region3: #{tpu_custom_call.1} parent=0 // pred_check_branch
    %13 = sbr.rel (0) target = $region5
  $region4: #{tpu_custom_call.1} parent=0 // pred_region
    _
  $region5: #{tpu_custom_call.1} parent=0 // pred_fallthru
    _
  // Predicated region
  $region6: #{tpu_custom_call.1} parent=0 // pred_check
    _
  $region7: #{tpu_custom_call.1} parent=0 // pred_check_branch
    %15 = sbr.rel (0) target = $region9
  $region8: #{tpu_custom_call.1} parent=0 // pred_region
    _
  $region9: #{tpu_custom_call.1} parent=0 // pred_fallthru
    _
  // Predicated region
  $region10: #{tpu_custom_call.1} parent=0 // pred_check
    _
  $region11: #{tpu_custom_call.1} parent=0 // pred_check_branch
    %17 = sbr.rel (0) target = $region13
  $region12: #{tpu_custom_call.1} parent=0 // pred_region
    _
  $region13: #{tpu_custom_call.1} parent=0 // pred_fallthru
    _
  // Predicated region
  $region14: #{tpu_custom_call.1} parent=0 // pred_check
    _
  $region15: #{tpu_custom_call.1} parent=0 // pred_check_branch
    %19 = sbr.rel (0) target = $region17
  $region16: #{tpu_custom_call.1} parent=0 // pred_region
    _
  $region17: #{tpu_custom_call.1} parent=0 // pred_fallthru
    _
  // Predicated region
  $region18: #{tpu_custom_call.1} parent=0 // pred_check
    _
  $region19: #{tpu_custom_call.1} parent=0 // pred_check_branch
    %21 = sbr.rel (0) target = $region21
  $region20: #{tpu_custom_call.1} parent=0 // pred_region
    _
  $region21: #{tpu_custom_call.1} parent=0 // pred_fallthru
    _
  %v23 = vld [vmem:[%s1] sm:$0xf]
  %v24 = vld [vmem:[%s1 + $0x4] sm:$0xf]
  %v25 = vld [vmem:[%s1 + $0x8] sm:$0xf]
  %v26 = vld [vmem:[%s1 + $0xc] sm:$0xf]
  %v27 = vld [vmem:[%s1 + $0x10] sm:$0xf]
  %v28 = vld [vmem:[%s1 + $0x14] sm:$0xf]
  %v29 = vld [vmem:[%s1 + $0x18] sm:$0xf]
  %v30 = vld [vmem:[%s1 + $0x1c] sm:$0xf]
  %v31 = vld [vmem:[%s1 + $0x20] sm:$0xf]
  %v32 = vld [vmem:[%s1 + $0x24] sm:$0xf]
  %v33 = vld [vmem:[%s1 + $0x28] sm:$0xf]
  %v34 = vld [vmem:[%s1 + $0x2c] sm:$0xf]
  %v35 = vld [vmem:[%s1 + $0x30] sm:$0xf]
  %v36 = vld [vmem:[%s1 + $0x34] sm:$0xf]
  %v37 = vld [vmem:[%s1 + $0x38] sm:$0xf]
  %v38 = vld [vmem:[%s1 + $0x3c] sm:$0xf]
  %v39 = vld [vmem:[%s1 + $0x40] sm:$0xf]
  %v40 = vld [vmem:[%s1 + $0x44] sm:$0xf]
  %v41 = vld [vmem:[%s1 + $0x48] sm:$0xf]
  %v42 = vld [vmem:[%s1 + $0x4c] sm:$0xf]
  %v43 = vld [vmem:[%s1 + $0x50] sm:$0xf]
  %v44 = vld [vmem:[%s1 + $0x54] sm:$0xf]
  %v45 = vld [vmem:[%s1 + $0x58] sm:$0xf]
  %v46 = vld [vmem:[%s1 + $0x5c] sm:$0xf]
  %v47 = vld [vmem:[%s1 + $0x60] sm:$0xf]
  %v48 = vld [vmem:[%s1 + $0x64] sm:$0xf]
  %v49 = vld [vmem:[%s1 + $0x68] sm:$0xf]
  %v50 = vld [vmem:[%s1 + $0x6c] sm:$0xf]
  %v51 = vld [vmem:[%s1 + $0x70] sm:$0xf]
  %v52 = vld [vmem:[%s1 + $0x74] sm:$0xf]
  %v53 = vld [vmem:[%s1 + $0x78] sm:$0xf]
  %v54 = vld [vmem:[%s1 + $0x7c] sm:$0xf]
  %v55 = vld [vmem:[%s1 + $0x80] sm:$0xf]
  %v56 = vld [vmem:[%s1 + $0x84] sm:$0xf]
  %v57 = vld [vmem:[%s1 + $0x88] sm:$0xf]
  %v58 = vld [vmem:[%s1 + $0x8c] sm:$0xf]
  %v59 = vld [vmem:[%s1 + $0x90] sm:$0xf]
  %v60 = vld [vmem:[%s1 + $0x94] sm:$0xf]
  %v61 = vld [vmem:[%s1 + $0x98] sm:$0xf]
  %v62 = vld [vmem:[%s1 + $0x9c] sm:$0xf]
  %v63 = vld [vmem:[%s1 + $0xa0] sm:$0xf]
  %v64 = vld [vmem:[%s1 + $0xa4] sm:$0xf]
  %v65 = vld [vmem:[%s1 + $0xa8] sm:$0xf]
  %v66 = vld [vmem:[%s1 + $0xac] sm:$0xf]
  %v67 = vld [vmem:[%s1 + $0xb0] sm:$0xf]
  %v68 = vld [vmem:[%s1 + $0xb4] sm:$0xf]
  %v69 = vld [vmem:[%s1 + $0xb8] sm:$0xf]
  %v70 = vld [vmem:[%s1 + $0xbc] sm:$0xf]
  %v71 = vld [vmem:[%s1 + $0xc0] sm:$0xf]
  %v72 = vld [vmem:[%s1 + $0xc4] sm:$0xf]
  %v73 = vld [vmem:[%s1 + $0xc8] sm:$0xf]
  %v74 = vld [vmem:[%s1 + $0xcc] sm:$0xf]
  %v75 = vld [vmem:[%s1 + $0xd0] sm:$0xf]
  %v76 = vld [vmem:[%s1 + $0xd4] sm:$0xf]
  %v77 = vld [vmem:[%s1 + $0xd8] sm:$0xf]
  %v78 = vld [vmem:[%s1 + $0xdc] sm:$0xf]
  %v79 = vld [vmem:[%s1 + $0xe0] sm:$0xf]
  %v80 = vld [vmem:[%s1 + $0xe4] sm:$0xf]
  %v81 = vld [vmem:[%s1 + $0xe8] sm:$0xf]
  %v82 = vld [vmem:[%s1 + $0xec] sm:$0xf]
  %v83 = vld [vmem:[%s1 + $0xf0] sm:$0xf]
  %v84 = vld [vmem:[%s1 + $0xf4] sm:$0xf]
  %v85 = vld [vmem:[%s1 + $0xf8] sm:$0xf]
  %v86 = vld [vmem:[%s1 + $0xfc] sm:$0xf]
  %v87 = vld [vmem:[%s1 + $0x100] sm:$0xf]
  %v88 = vld [vmem:[%s1 + $0x104] sm:$0xf]
  %v89 = vld [vmem:[%s1 + $0x108] sm:$0xf]
  %v90 = vld [vmem:[%s1 + $0x10c] sm:$0xf]
  %v91 = vld [vmem:[%s1 + $0x110] sm:$0xf]
  %v92 = vld [vmem:[%s1 + $0x114] sm:$0xf]
  %v93 = vld [vmem:[%s1 + $0x118] sm:$0xf]
  %v94 = vld [vmem:[%s1 + $0x11c] sm:$0xf]
  %v95 = vld [vmem:[%s1 + $0x120] sm:$0xf]
  %v96 = vld [vmem:[%s1 + $0x124] sm:$0xf]
  %v97 = vld [vmem:[%s1 + $0x128] sm:$0xf]
  %v98 = vld [vmem:[%s1 + $0x12c] sm:$0xf]
  %v99 = vld [vmem:[%s1 + $0x130] sm:$0xf]
  %v100 = vld [vmem:[%s1 + $0x134] sm:$0xf]
  %v101 = vld [vmem:[%s1 + $0x138] sm:$0xf]
  %v102 = vld [vmem:[%s1 + $0x13c] sm:$0xf]
  %v103 = vld [vmem:[%s1 + $0x140] sm:$0xf]
  %v104 = vld [vmem:[%s1 + $0x144] sm:$0xf]
  %v105 = vld [vmem:[%s1 + $0x148] sm:$0xf]
  %v106 = vld [vmem:[%s1 + $0x14c] sm:$0xf]
  %v107 = vld [vmem:[%s1 + $0x150] sm:$0xf]
  %v108 = vld [vmem:[%s1 + $0x154] sm:$0xf]
  %v109 = vld [vmem:[%s1 + $0x158] sm:$0xf]
  %v110 = vld [vmem:[%s1 + $0x15c] sm:$0xf]
  %v111 = vld [vmem:[%s1 + $0x160] sm:$0xf]
  %v112 = vld [vmem:[%s1 + $0x164] sm:$0xf]
  %v113 = vld [vmem:[%s1 + $0x168] sm:$0xf]
  %v114 = vld [vmem:[%s1 + $0x16c] sm:$0xf]
  %v115 = vld [vmem:[%s1 + $0x170] sm:$0xf]
  %v116 = vld [vmem:[%s1 + $0x174] sm:$0xf]
  %v117 = vld [vmem:[%s1 + $0x178] sm:$0xf]
  %v118 = vld [vmem:[%s1 + $0x17c] sm:$0xf]
  %v119 = vld [vmem:[%s1 + $0x180] sm:$0xf]
  %v120 = vld [vmem:[%s1 + $0x184] sm:$0xf]
  %v121 = vld [vmem:[%s1 + $0x188] sm:$0xf]
  %v122 = vld [vmem:[%s1 + $0x18c] sm:$0xf]
  %v123 = vld [vmem:[%s1 + $0x190] sm:$0xf]
  %v124 = vld [vmem:[%s1 + $0x194] sm:$0xf]
  %v125 = vld [vmem:[%s1 + $0x198] sm:$0xf]
  %v126 = vld [vmem:[%s1 + $0x19c] sm:$0xf]
  %v127 = vld [vmem:[%s1 + $0x1a0] sm:$0xf]
  %v128 = vld [vmem:[%s1 + $0x1a4] sm:$0xf]
  %v129 = vld [vmem:[%s1 + $0x1a8] sm:$0xf]
  %v130 = vld [vmem:[%s1 + $0x1ac] sm:$0xf]
  %v131 = vld [vmem:[%s1 + $0x1b0] sm:$0xf]
  %v132 = vld [vmem:[%s1 + $0x1b4] sm:$0xf]
  %v133 = vld [vmem:[%s1 + $0x1b8] sm:$0xf]
  %v134 = vld [vmem:[%s1 + $0x1bc] sm:$0xf]
  %v135 = vld [vmem:[%s1 + $0x1c0] sm:$0xf]
  %v136 = vld [vmem:[%s1 + $0x1c4] sm:$0xf]
  %v137 = vld [vmem:[%s1 + $0x1c8] sm:$0xf]
  %v138 = vld [vmem:[%s1 + $0x1cc] sm:$0xf]
  %v139 = vld [vmem:[%s1 + $0x1d0] sm:$0xf]
  %v140 = vld [vmem:[%s1 + $0x1d4] sm:$0xf]
  %v141 = vld [vmem:[%s1 + $0x1d8] sm:$0xf]
  %v142 = vld [vmem:[%s1 + $0x1dc] sm:$0xf]
  %v143 = vld [vmem:[%s1 + $0x1e0] sm:$0xf]
  %v144 = vld [vmem:[%s1 + $0x1e4] sm:$0xf]
  %v145 = vld [vmem:[%s1 + $0x1e8] sm:$0xf]
  %v146 = vld [vmem:[%s1 + $0x1ec] sm:$0xf]
  %v147 = vld [vmem:[%s1 + $0x1f0] sm:$0xf]
  %v148 = vld [vmem:[%s1 + $0x1f4] sm:$0xf]
  %v149 = vld [vmem:[%s1 + $0x1f8] sm:$0xf]
  %v150 = vld [vmem:[%s1 + $0x1fc] sm:$0xf]
  %v151 = vld [vmem:[%s2] sm:$0x1]
  %v152 = vld [vmem:[%s0] ss:$8 sm:$0xf]
  %v153 = vld [vmem:[%s0] ss:$8 sm:$0xf0]
  %v154 = vor.u32 %v152, %v153
  %s155 = scalar_lea.vmem %s0, 64
  %v156 = vld [vmem:[%s155] ss:$8 sm:$0xf]
  %v157 = vld [vmem:[%s155] ss:$8 sm:$0xf0]
  %v158 = vor.u32 %v156, %v157
  %s159 = scalar_lea.vmem %s0, 128
  %v160 = vld [vmem:[%s159] ss:$8 sm:$0xf]
  %v161 = vld [vmem:[%s159] ss:$8 sm:$0xf0]
  %v162 = vor.u32 %v160, %v161
  %s163 = scalar_lea.vmem %s0, 192
  %v164 = vld [vmem:[%s163] ss:$8 sm:$0xf]
  %v165 = vld [vmem:[%s163] ss:$8 sm:$0xf0]
  %v166 = vor.u32 %v164, %v165
  %s167 = scalar_lea.vmem %s0, 256
  %v168 = vld [vmem:[%s167] ss:$8 sm:$0xf]
  %v169 = vld [vmem:[%s167] ss:$8 sm:$0xf0]
  %v170 = vor.u32 %v168, %v169
  %s171 = scalar_lea.vmem %s0, 320
  %v172 = vld [vmem:[%s171] ss:$8 sm:$0xf]
  %v173 = vld [vmem:[%s171] ss:$8 sm:$0xf0]
  %v174 = vor.u32 %v172, %v173
  %s175 = scalar_lea.vmem %s0, 384
  %v176 = vld [vmem:[%s175] ss:$8 sm:$0xf]
  %v177 = vld [vmem:[%s175] ss:$8 sm:$0xf0]
  %v178 = vor.u32 %v176, %v177
  %s179 = scalar_lea.vmem %s0, 448
  %v180 = vld [vmem:[%s179] ss:$8 sm:$0xf]
  %v181 = vld [vmem:[%s179] ss:$8 sm:$0xf0]
  %v182 = vor.u32 %v180, %v181
  %v191 = vlaneseq
  %v192 = vshrl.u32 %v191, 7
  %v193 = vsub.s32 0, %v192
  %v194 = vrot.slane %v154, %v193
  %v195 = vlaneseq
  %v196 = vshrl.u32 %v195, 7
  %v197 = vsub.s32 1, %v196
  %v198 = vrot.slane %v154, %v197
  %v199 = vlaneseq
  %v200 = vshrl.u32 %v199, 7
  %v201 = vsub.s32 2, %v200
  %v202 = vrot.slane %v154, %v201
  %v203 = vlaneseq
  %v204 = vshrl.u32 %v203, 7
  %v205 = vsub.s32 3, %v204
  %v206 = vrot.slane %v154, %v205
  %v207 = vlaneseq
  %v208 = vshrl.u32 %v207, 7
  %v209 = vsub.s32 4, %v208
  %v210 = vrot.slane %v154, %v209
  %v211 = vlaneseq
  %v212 = vshrl.u32 %v211, 7
  %v213 = vsub.s32 5, %v212
  %v214 = vrot.slane %v154, %v213
  %v215 = vlaneseq
  %v216 = vshrl.u32 %v215, 7
  %v217 = vsub.s32 6, %v216
  %v218 = vrot.slane %v154, %v217
  %v219 = vlaneseq
  %v220 = vshrl.u32 %v219, 7
  %v221 = vsub.s32 7, %v220
  %v222 = vrot.slane %v154, %v221
  %v223 = vlaneseq
  %v224 = vshrl.u32 %v223, 7
  %v225 = vsub.s32 0, %v224
  %v226 = vrot.slane %v158, %v225
  %v227 = vlaneseq
  %v228 = vshrl.u32 %v227, 7
  %v229 = vsub.s32 1, %v228
  %v230 = vrot.slane %v158, %v229
  %v231 = vlaneseq
  %v232 = vshrl.u32 %v231, 7
  %v233 = vsub.s32 2, %v232
  %v234 = vrot.slane %v158, %v233
  %v235 = vlaneseq
  %v236 = vshrl.u32 %v235, 7
  %v237 = vsub.s32 3, %v236
  %v238 = vrot.slane %v158, %v237
  %v239 = vlaneseq
  %v240 = vshrl.u32 %v239, 7
  %v241 = vsub.s32 4, %v240
  %v242 = vrot.slane %v158, %v241
  %v243 = vlaneseq
  %v244 = vshrl.u32 %v243, 7
  %v245 = vsub.s32 5, %v244
  %v246 = vrot.slane %v158, %v245
  %v247 = vlaneseq
  %v248 = vshrl.u32 %v247, 7
  %v249 = vsub.s32 6, %v248
  %v250 = vrot.slane %v158, %v249
  %v251 = vlaneseq
  %v252 = vshrl.u32 %v251, 7
  %v253 = vsub.s32 7, %v252
  %v254 = vrot.slane %v158, %v253
  %v255 = vlaneseq
  %v256 = vshrl.u32 %v255, 7
  %v257 = vsub.s32 0, %v256
  %v258 = vrot.slane %v162, %v257
  %v259 = vlaneseq
  %v260 = vshrl.u32 %v259, 7
  %v261 = vsub.s32 1, %v260
  %v262 = vrot.slane %v162, %v261
  %v263 = vlaneseq
  %v264 = vshrl.u32 %v263, 7
  %v265 = vsub.s32 2, %v264
  %v266 = vrot.slane %v162, %v265
  %v267 = vlaneseq
  %v268 = vshrl.u32 %v267, 7
  %v269 = vsub.s32 3, %v268
  %v270 = vrot.slane %v162, %v269
  %v271 = vlaneseq
  %v272 = vshrl.u32 %v271, 7
  %v273 = vsub.s32 4, %v272
  %v274 = vrot.slane %v162, %v273
  %v275 = vlaneseq
  %v276 = vshrl.u32 %v275, 7
  %v277 = vsub.s32 5, %v276
  %v278 = vrot.slane %v162, %v277
  %v279 = vlaneseq
  %v280 = vshrl.u32 %v279, 7
  %v281 = vsub.s32 6, %v280
  %v282 = vrot.slane %v162, %v281
  %v283 = vlaneseq
  %v284 = vshrl.u32 %v283, 7
  %v285 = vsub.s32 7, %v284
  %v286 = vrot.slane %v162, %v285
  %v287 = vlaneseq
  %v288 = vshrl.u32 %v287, 7
  %v289 = vsub.s32 0, %v288
  %v290 = vrot.slane %v166, %v289
  %v291 = vlaneseq
  %v292 = vshrl.u32 %v291, 7
  %v293 = vsub.s32 1, %v292
  %v294 = vrot.slane %v166, %v293
  %v295 = vlaneseq
  %v296 = vshrl.u32 %v295, 7
  %v297 = vsub.s32 2, %v296
  %v298 = vrot.slane %v166, %v297
  %v299 = vlaneseq
  %v300 = vshrl.u32 %v299, 7
  %v301 = vsub.s32 3, %v300
  %v302 = vrot.slane %v166, %v301
  %v303 = vlaneseq
  %v304 = vshrl.u32 %v303, 7
  %v305 = vsub.s32 4, %v304
  %v306 = vrot.slane %v166, %v305
  %v307 = vlaneseq
  %v308 = vshrl.u32 %v307, 7
  %v309 = vsub.s32 5, %v308
  %v310 = vrot.slane %v166, %v309
  %v311 = vlaneseq
  %v312 = vshrl.u32 %v311, 7
  %v313 = vsub.s32 6, %v312
  %v314 = vrot.slane %v166, %v313
  %v315 = vlaneseq
  %v316 = vshrl.u32 %v315, 7
  %v317 = vsub.s32 7, %v316
  %v318 = vrot.slane %v166, %v317
  %v319 = vlaneseq
  %v320 = vshrl.u32 %v319, 7
  %v321 = vsub.s32 0, %v320
  %v322 = vrot.slane %v170, %v321
  %v323 = vlaneseq
  %v324 = vshrl.u32 %v323, 7
  %v325 = vsub.s32 1, %v324
  %v326 = vrot.slane %v170, %v325
  %v327 = vlaneseq
  %v328 = vshrl.u32 %v327, 7
  %v329 = vsub.s32 2, %v328
  %v330 = vrot.slane %v170, %v329
  %v331 = vlaneseq
  %v332 = vshrl.u32 %v331, 7
  %v333 = vsub.s32 3, %v332
  %v334 = vrot.slane %v170, %v333
  %v335 = vlaneseq
  %v336 = vshrl.u32 %v335, 7
  %v337 = vsub.s32 4, %v336
  %v338 = vrot.slane %v170, %v337
  %v339 = vlaneseq
  %v340 = vshrl.u32 %v339, 7
  %v341 = vsub.s32 5, %v340
  %v342 = vrot.slane %v170, %v341
  %v343 = vlaneseq
  %v344 = vshrl.u32 %v343, 7
  %v345 = vsub.s32 6, %v344
  %v346 = vrot.slane %v170, %v345
  %v347 = vlaneseq
  %v348 = vshrl.u32 %v347, 7
  %v349 = vsub.s32 7, %v348
  %v350 = vrot.slane %v170, %v349
  %v351 = vlaneseq
  %v352 = vshrl.u32 %v351, 7
  %v353 = vsub.s32 0, %v352
  %v354 = vrot.slane %v174, %v353
  %v355 = vlaneseq
  %v356 = vshrl.u32 %v355, 7
  %v357 = vsub.s32 1, %v356
  %v358 = vrot.slane %v174, %v357
  %v359 = vlaneseq
  %v360 = vshrl.u32 %v359, 7
  %v361 = vsub.s32 2, %v360
  %v362 = vrot.slane %v174, %v361
  %v363 = vlaneseq
  %v364 = vshrl.u32 %v363, 7
  %v365 = vsub.s32 3, %v364
  %v366 = vrot.slane %v174, %v365
  %v367 = vlaneseq
  %v368 = vshrl.u32 %v367, 7
  %v369 = vsub.s32 4, %v368
  %v370 = vrot.slane %v174, %v369
  %v371 = vlaneseq
  %v372 = vshrl.u32 %v371, 7
  %v373 = vsub.s32 5, %v372
  %v374 = vrot.slane %v174, %v373
  %v375 = vlaneseq
  %v376 = vshrl.u32 %v375, 7
  %v377 = vsub.s32 6, %v376
  %v378 = vrot.slane %v174, %v377
  %v379 = vlaneseq
  %v380 = vshrl.u32 %v379, 7
  %v381 = vsub.s32 7, %v380
  %v382 = vrot.slane %v174, %v381
  %v383 = vlaneseq
  %v384 = vshrl.u32 %v383, 7
  %v385 = vsub.s32 0, %v384
  %v386 = vrot.slane %v178, %v385
  %v387 = vlaneseq
  %v388 = vshrl.u32 %v387, 7
  %v389 = vsub.s32 1, %v388
  %v390 = vrot.slane %v178, %v389
  %v391 = vlaneseq
  %v392 = vshrl.u32 %v391, 7
  %v393 = vsub.s32 2, %v392
  %v394 = vrot.slane %v178, %v393
  %v395 = vlaneseq
  %v396 = vshrl.u32 %v395, 7
  %v397 = vsub.s32 3, %v396
  %v398 = vrot.slane %v178, %v397
  %v399 = vlaneseq
  %v400 = vshrl.u32 %v399, 7
  %v401 = vsub.s32 4, %v400
  %v402 = vrot.slane %v178, %v401
  %v403 = vlaneseq
  %v404 = vshrl.u32 %v403, 7
  %v405 = vsub.s32 5, %v404
  %v406 = vrot.slane %v178, %v405
  %v407 = vlaneseq
  %v408 = vshrl.u32 %v407, 7
  %v409 = vsub.s32 6, %v408
  %v410 = vrot.slane %v178, %v409
  %v411 = vlaneseq
  %v412 = vshrl.u32 %v411, 7
  %v413 = vsub.s32 7, %v412
  %v414 = vrot.slane %v178, %v413
  %v415 = vlaneseq
  %v416 = vshrl.u32 %v415, 7
  %v417 = vsub.s32 0, %v416
  %v418 = vrot.slane %v182, %v417
  %v419 = vlaneseq
  %v420 = vshrl.u32 %v419, 7
  %v421 = vsub.s32 1, %v420
  %v422 = vrot.slane %v182, %v421
  %v423 = vlaneseq
  %v424 = vshrl.u32 %v423, 7
  %v425 = vsub.s32 2, %v424
  %v426 = vrot.slane %v182, %v425
  %v427 = vlaneseq
  %v428 = vshrl.u32 %v427, 7
  %v429 = vsub.s32 3, %v428
  %v430 = vrot.slane %v182, %v429
  %v431 = vlaneseq
  %v432 = vshrl.u32 %v431, 7
  %v433 = vsub.s32 4, %v432
  %v434 = vrot.slane %v182, %v433
  %v435 = vlaneseq
  %v436 = vshrl.u32 %v435, 7
  %v437 = vsub.s32 5, %v436
  %v438 = vrot.slane %v182, %v437
  %v439 = vlaneseq
  %v440 = vshrl.u32 %v439, 7
  %v441 = vsub.s32 6, %v440
  %v442 = vrot.slane %v182, %v441
  %v443 = vlaneseq
  %v444 = vshrl.u32 %v443, 7
  %v445 = vsub.s32 7, %v444
  %v446 = vrot.slane %v182, %v445
  %v511 = vpack.c.bf16 %v194, %v194
  %v512 = vpack.c.bf16 %v198, %v198
  %v513 = vpack.c.bf16 %v202, %v202
  %v514 = vpack.c.bf16 %v206, %v206
  %v515 = vpack.c.bf16 %v210, %v210
  %v516 = vpack.c.bf16 %v214, %v214
  %v517 = vpack.c.bf16 %v218, %v218
  %v518 = vpack.c.bf16 %v222, %v222
  %v519 = vpack.c.bf16 %v226, %v226
  %v520 = vpack.c.bf16 %v230, %v230
  %v521 = vpack.c.bf16 %v234, %v234
  %v522 = vpack.c.bf16 %v238, %v238
  %v523 = vpack.c.bf16 %v242, %v242
  %v524 = vpack.c.bf16 %v246, %v246
  %v525 = vpack.c.bf16 %v250, %v250
  %v526 = vpack.c.bf16 %v254, %v254
  %v527 = vpack.c.bf16 %v258, %v258
  %v528 = vpack.c.bf16 %v262, %v262
  %v529 = vpack.c.bf16 %v266, %v266
  %v530 = vpack.c.bf16 %v270, %v270
  %v531 = vpack.c.bf16 %v274, %v274
  %v532 = vpack.c.bf16 %v278, %v278
  %v533 = vpack.c.bf16 %v282, %v282
  %v534 = vpack.c.bf16 %v286, %v286
  %v535 = vpack.c.bf16 %v290, %v290
  %v536 = vpack.c.bf16 %v294, %v294
  %v537 = vpack.c.bf16 %v298, %v298
  %v538 = vpack.c.bf16 %v302, %v302
  %v539 = vpack.c.bf16 %v306, %v306
  %v540 = vpack.c.bf16 %v310, %v310
  %v541 = vpack.c.bf16 %v314, %v314
  %v542 = vpack.c.bf16 %v318, %v318
  %v543 = vpack.c.bf16 %v322, %v322
  %v544 = vpack.c.bf16 %v326, %v326
  %v545 = vpack.c.bf16 %v330, %v330
  %v546 = vpack.c.bf16 %v334, %v334
  %v547 = vpack.c.bf16 %v338, %v338
  %v548 = vpack.c.bf16 %v342, %v342
  %v549 = vpack.c.bf16 %v346, %v346
  %v550 = vpack.c.bf16 %v350, %v350
  %v551 = vpack.c.bf16 %v354, %v354
  %v552 = vpack.c.bf16 %v358, %v358
  %v553 = vpack.c.bf16 %v362, %v362
  %v554 = vpack.c.bf16 %v366, %v366
  %v555 = vpack.c.bf16 %v370, %v370
  %v556 = vpack.c.bf16 %v374, %v374
  %v557 = vpack.c.bf16 %v378, %v378
  %v558 = vpack.c.bf16 %v382, %v382
  %v559 = vpack.c.bf16 %v386, %v386
  %v560 = vpack.c.bf16 %v390, %v390
  %v561 = vpack.c.bf16 %v394, %v394
  %v562 = vpack.c.bf16 %v398, %v398
  %v563 = vpack.c.bf16 %v402, %v402
  %v564 = vpack.c.bf16 %v406, %v406
  %v565 = vpack.c.bf16 %v410, %v410
  %v566 = vpack.c.bf16 %v414, %v414
  %v567 = vpack.c.bf16 %v418, %v418
  %v568 = vpack.c.bf16 %v422, %v422
  %v569 = vpack.c.bf16 %v426, %v426
  %v570 = vpack.c.bf16 %v430, %v430
  %v571 = vpack.c.bf16 %v434, %v434
  %v572 = vpack.c.bf16 %v438, %v438
  %v573 = vpack.c.bf16 %v442, %v442
  %v574 = vpack.c.bf16 %v446, %v446
  %v576 = vlaneseq
  %v577 = vshrl.u32 %v576, 7
  %v578 = vsub.s32 0, %v577
  %v579 = vrot.slane %v151, %v578
  %v645 = vunpack.c.l.b16 %v511
  %v646 = vunpack.c.l.b16 %v512
  %v647 = vunpack.c.l.b16 %v513
  %v648 = vunpack.c.l.b16 %v514
  %v649 = vunpack.c.l.b16 %v515
  %v650 = vunpack.c.l.b16 %v516
  %v651 = vunpack.c.l.b16 %v517
  %v652 = vunpack.c.l.b16 %v518
  %v653 = vunpack.c.l.b16 %v519
  %v654 = vunpack.c.l.b16 %v520
  %v655 = vunpack.c.l.b16 %v521
  %v656 = vunpack.c.l.b16 %v522
  %v657 = vunpack.c.l.b16 %v523
  %v658 = vunpack.c.l.b16 %v524
  %v659 = vunpack.c.l.b16 %v525
  %v660 = vunpack.c.l.b16 %v526
  %v661 = vunpack.c.l.b16 %v527
  %v662 = vunpack.c.l.b16 %v528
  %v663 = vunpack.c.l.b16 %v529
  %v664 = vunpack.c.l.b16 %v530
  %v665 = vunpack.c.l.b16 %v531
  %v666 = vunpack.c.l.b16 %v532
  %v667 = vunpack.c.l.b16 %v533
  %v668 = vunpack.c.l.b16 %v534
  %v669 = vunpack.c.l.b16 %v535
  %v670 = vunpack.c.l.b16 %v536
  %v671 = vunpack.c.l.b16 %v537
  %v672 = vunpack.c.l.b16 %v538
  %v673 = vunpack.c.l.b16 %v539
  %v674 = vunpack.c.l.b16 %v540
  %v675 = vunpack.c.l.b16 %v541
  %v676 = vunpack.c.l.b16 %v542
  %v677 = vunpack.c.l.b16 %v543
  %v678 = vunpack.c.l.b16 %v544
  %v679 = vunpack.c.l.b16 %v545
  %v680 = vunpack.c.l.b16 %v546
  %v681 = vunpack.c.l.b16 %v547
  %v682 = vunpack.c.l.b16 %v548
  %v683 = vunpack.c.l.b16 %v549
  %v684 = vunpack.c.l.b16 %v550
  %v685 = vunpack.c.l.b16 %v551
  %v686 = vunpack.c.l.b16 %v552
  %v687 = vunpack.c.l.b16 %v553
  %v688 = vunpack.c.l.b16 %v554
  %v689 = vunpack.c.l.b16 %v555
  %v690 = vunpack.c.l.b16 %v556
  %v691 = vunpack.c.l.b16 %v557
  %v692 = vunpack.c.l.b16 %v558
  %v693 = vunpack.c.l.b16 %v559
  %v694 = vunpack.c.l.b16 %v560
  %v695 = vunpack.c.l.b16 %v561
  %v696 = vunpack.c.l.b16 %v562
  %v697 = vunpack.c.l.b16 %v563
  %v698 = vunpack.c.l.b16 %v564
  %v699 = vunpack.c.l.b16 %v565
  %v700 = vunpack.c.l.b16 %v566
  %v701 = vunpack.c.l.b16 %v567
  %v702 = vunpack.c.l.b16 %v568
  %v703 = vunpack.c.l.b16 %v569
  %v704 = vunpack.c.l.b16 %v570
  %v705 = vunpack.c.l.b16 %v571
  %v706 = vunpack.c.l.b16 %v572
  %v707 = vunpack.c.l.b16 %v573
  %v708 = vunpack.c.l.b16 %v574
  %v709 = vrot.slane %v653, 7
  %vm710 = vcmask 1041409
  %v711 = vsel %vm710, %v709, %v645
  %v712 = vrot.slane %v661, 6
  %vm713 = vcmask 1042434
  %v714 = vsel %vm713, %v712, %v711
  %v715 = vrot.slane %v669, 5
  %vm716 = vcmask 1043459
  %v717 = vsel %vm716, %v715, %v714
  %v718 = vrot.slane %v677, 4
  %vm719 = vcmask 1044484
  %v720 = vsel %vm719, %v718, %v717
  %v721 = vrot.slane %v685, 3
  %vm722 = vcmask 1045509
  %v723 = vsel %vm722, %v721, %v720
  %v724 = vrot.slane %v693, 2
  %vm725 = vcmask 1046534
  %v726 = vsel %vm725, %v724, %v723
  %v727 = vrot.slane %v701, 1
  %vm728 = vcmask 1047559
  %v729 = vsel %vm728, %v727, %v726
  %v730 = vrot.slane %v654, 7
  %v731 = vsel %vm710, %v730, %v646
  %v732 = vrot.slane %v662, 6
  %v733 = vsel %vm713, %v732, %v731
  %v734 = vrot.slane %v670, 5
  %v735 = vsel %vm716, %v734, %v733
  %v736 = vrot.slane %v678, 4
  %v737 = vsel %vm719, %v736, %v735
  %v738 = vrot.slane %v686, 3
  %v739 = vsel %vm722, %v738, %v737
  %v740 = vrot.slane %v694, 2
  %v741 = vsel %vm725, %v740, %v739
  %v742 = vrot.slane %v702, 1
  %v743 = vsel %vm728, %v742, %v741
  %v744 = vrot.slane %v655, 7
  %v745 = vsel %vm710, %v744, %v647
  %v746 = vrot.slane %v663, 6
  %v747 = vsel %vm713, %v746, %v745
  %v748 = vrot.slane %v671, 5
  %v749 = vsel %vm716, %v748, %v747
  %v750 = vrot.slane %v679, 4
  %v751 = vsel %vm719, %v750, %v749
  %v752 = vrot.slane %v687, 3
  %v753 = vsel %vm722, %v752, %v751
  %v754 = vrot.slane %v695, 2
  %v755 = vsel %vm725, %v754, %v753
  %v756 = vrot.slane %v703, 1
  %v757 = vsel %vm728, %v756, %v755
  %v758 = vrot.slane %v656, 7
  %v759 = vsel %vm710, %v758, %v648
  %v760 = vrot.slane %v664, 6
  %v761 = vsel %vm713, %v760, %v759
  %v762 = vrot.slane %v672, 5
  %v763 = vsel %vm716, %v762, %v761
  %v764 = vrot.slane %v680, 4
  %v765 = vsel %vm719, %v764, %v763
  %v766 = vrot.slane %v688, 3
  %v767 = vsel %vm722, %v766, %v765
  %v768 = vrot.slane %v696, 2
  %v769 = vsel %vm725, %v768, %v767
  %v770 = vrot.slane %v704, 1
  %v771 = vsel %vm728, %v770, %v769
  %v772 = vrot.slane %v657, 7
  %v773 = vsel %vm710, %v772, %v649
  %v774 = vrot.slane %v665, 6
  %v775 = vsel %vm713, %v774, %v773
  %v776 = vrot.slane %v673, 5
  %v777 = vsel %vm716, %v776, %v775
  %v778 = vrot.slane %v681, 4
  %v779 = vsel %vm719, %v778, %v777
  %v780 = vrot.slane %v689, 3
  %v781 = vsel %vm722, %v780, %v779
  %v782 = vrot.slane %v697, 2
  %v783 = vsel %vm725, %v782, %v781
  %v784 = vrot.slane %v705, 1
  %v785 = vsel %vm728, %v784, %v783
  %v786 = vrot.slane %v658, 7
  %v787 = vsel %vm710, %v786, %v650
  %v788 = vrot.slane %v666, 6
  %v789 = vsel %vm713, %v788, %v787
  %v790 = vrot.slane %v674, 5
  %v791 = vsel %vm716, %v790, %v789
  %v792 = vrot.slane %v682, 4
  %v793 = vsel %vm719, %v792, %v791
  %v794 = vrot.slane %v690, 3
  %v795 = vsel %vm722, %v794, %v793
  %v796 = vrot.slane %v698, 2
  %v797 = vsel %vm725, %v796, %v795
  %v798 = vrot.slane %v706, 1
  %v799 = vsel %vm728, %v798, %v797
  %v800 = vrot.slane %v659, 7
  %v801 = vsel %vm710, %v800, %v651
  %v802 = vrot.slane %v667, 6
  %v803 = vsel %vm713, %v802, %v801
  %v804 = vrot.slane %v675, 5
  %v805 = vsel %vm716, %v804, %v803
  %v806 = vrot.slane %v683, 4
  %v807 = vsel %vm719, %v806, %v805
  %v808 = vrot.slane %v691, 3
  %v809 = vsel %vm722, %v808, %v807
  %v810 = vrot.slane %v699, 2
  %v811 = vsel %vm725, %v810, %v809
  %v812 = vrot.slane %v707, 1
  %v813 = vsel %vm728, %v812, %v811
  %v814 = vrot.slane %v660, 7
  %v815 = vsel %vm710, %v814, %v652
  %v816 = vrot.slane %v668, 6
  %v817 = vsel %vm713, %v816, %v815
  %v818 = vrot.slane %v676, 5
  %v819 = vsel %vm716, %v818, %v817
  %v820 = vrot.slane %v684, 4
  %v821 = vsel %vm719, %v820, %v819
  %v822 = vrot.slane %v692, 3
  %v823 = vsel %vm722, %v822, %v821
  %v824 = vrot.slane %v700, 2
  %v825 = vsel %vm725, %v824, %v823
  %v826 = vrot.slane %v708, 1
  %v827 = vsel %vm728, %v826, %v825
  %v828 = vpack.c.b16 %v729, %v729
  %v829 = vpack.c.b16 %v743, %v743
  %v830 = vpack.c.b16 %v757, %v757
  %v831 = vpack.c.b16 %v771, %v771
  %v832 = vpack.c.b16 %v785, %v785
  %v833 = vpack.c.b16 %v799, %v799
  %v834 = vpack.c.b16 %v813, %v813
  %v835 = vpack.c.b16 %v827, %v827
  %v972 = vunpack.c.l.b16 %v23
  %v973 = vunpack.c.l.b16 %v24
  %v974 = vunpack.c.l.b16 %v25
  %v975 = vunpack.c.l.b16 %v26
  %v976 = vunpack.c.l.b16 %v27
  %v977 = vunpack.c.l.b16 %v28
  %v978 = vunpack.c.l.b16 %v29
  %v979 = vunpack.c.l.b16 %v30
  %v980 = vunpack.c.l.b16 %v31
  %v981 = vunpack.c.l.b16 %v32
  %v982 = vunpack.c.l.b16 %v33
  %v983 = vunpack.c.l.b16 %v34
  %v984 = vunpack.c.l.b16 %v35
  %v985 = vunpack.c.l.b16 %v36
  %v986 = vunpack.c.l.b16 %v37
  %v987 = vunpack.c.l.b16 %v38
  %v988 = vunpack.c.l.b16 %v39
  %v989 = vunpack.c.l.b16 %v40
  %v990 = vunpack.c.l.b16 %v41
  %v991 = vunpack.c.l.b16 %v42
  %v992 = vunpack.c.l.b16 %v43
  %v993 = vunpack.c.l.b16 %v44
  %v994 = vunpack.c.l.b16 %v45
  %v995 = vunpack.c.l.b16 %v46
  %v996 = vunpack.c.l.b16 %v47
  %v997 = vunpack.c.l.b16 %v48
  %v998 = vunpack.c.l.b16 %v49
  %v999 = vunpack.c.l.b16 %v50
  %v1000 = vunpack.c.l.b16 %v51
  %v1001 = vunpack.c.l.b16 %v52
  %v1002 = vunpack.c.l.b16 %v53
  %v1003 = vunpack.c.l.b16 %v54
  %v1004 = vunpack.c.l.b16 %v55
  %v1005 = vunpack.c.l.b16 %v56
  %v1006 = vunpack.c.l.b16 %v57
  %v1007 = vunpack.c.l.b16 %v58
  %v1008 = vunpack.c.l.b16 %v59
  %v1009 = vunpack.c.l.b16 %v60
  %v1010 = vunpack.c.l.b16 %v61
  %v1011 = vunpack.c.l.b16 %v62
  %v1012 = vunpack.c.l.b16 %v63
  %v1013 = vunpack.c.l.b16 %v64
  %v1014 = vunpack.c.l.b16 %v65
  %v1015 = vunpack.c.l.b16 %v66
  %v1016 = vunpack.c.l.b16 %v67
  %v1017 = vunpack.c.l.b16 %v68
  %v1018 = vunpack.c.l.b16 %v69
  %v1019 = vunpack.c.l.b16 %v70
  %v1020 = vunpack.c.l.b16 %v71
  %v1021 = vunpack.c.l.b16 %v72
  %v1022 = vunpack.c.l.b16 %v73
  %v1023 = vunpack.c.l.b16 %v74
  %v1024 = vunpack.c.l.b16 %v75
  %v1025 = vunpack.c.l.b16 %v76
  %v1026 = vunpack.c.l.b16 %v77
  %v1027 = vunpack.c.l.b16 %v78
  %v1028 = vunpack.c.l.b16 %v79
  %v1029 = vunpack.c.l.b16 %v80
  %v1030 = vunpack.c.l.b16 %v81
  %v1031 = vunpack.c.l.b16 %v82
  %v1032 = vunpack.c.l.b16 %v83
  %v1033 = vunpack.c.l.b16 %v84
  %v1034 = vunpack.c.l.b16 %v85
  %v1035 = vunpack.c.l.b16 %v86
  %v1036 = vunpack.c.l.b16 %v87
  %v1037 = vunpack.c.l.b16 %v88
  %v1038 = vunpack.c.l.b16 %v89
  %v1039 = vunpack.c.l.b16 %v90
  %v1040 = vunpack.c.l.b16 %v91
  %v1041 = vunpack.c.l.b16 %v92
  %v1042 = vunpack.c.l.b16 %v93
  %v1043 = vunpack.c.l.b16 %v94
  %v1044 = vunpack.c.l.b16 %v95
  %v1045 = vunpack.c.l.b16 %v96
  %v1046 = vunpack.c.l.b16 %v97
  %v1047 = vunpack.c.l.b16 %v98
  %v1048 = vunpack.c.l.b16 %v99
  %v1049 = vunpack.c.l.b16 %v100
  %v1050 = vunpack.c.l.b16 %v101
  %v1051 = vunpack.c.l.b16 %v102
  %v1052 = vunpack.c.l.b16 %v103
  %v1053 = vunpack.c.l.b16 %v104
  %v1054 = vunpack.c.l.b16 %v105
  %v1055 = vunpack.c.l.b16 %v106
  %v1056 = vunpack.c.l.b16 %v107
  %v1057 = vunpack.c.l.b16 %v108
  %v1058 = vunpack.c.l.b16 %v109
  %v1059 = vunpack.c.l.b16 %v110
  %v1060 = vunpack.c.l.b16 %v111
  %v1061 = vunpack.c.l.b16 %v112
  %v1062 = vunpack.c.l.b16 %v113
  %v1063 = vunpack.c.l.b16 %v114
  %v1064 = vunpack.c.l.b16 %v115
  %v1065 = vunpack.c.l.b16 %v116
  %v1066 = vunpack.c.l.b16 %v117
  %v1067 = vunpack.c.l.b16 %v118
  %v1068 = vunpack.c.l.b16 %v119
  %v1069 = vunpack.c.l.b16 %v120
  %v1070 = vunpack.c.l.b16 %v121
  %v1071 = vunpack.c.l.b16 %v122
  %v1072 = vunpack.c.l.b16 %v123
  %v1073 = vunpack.c.l.b16 %v124
  %v1074 = vunpack.c.l.b16 %v125
  %v1075 = vunpack.c.l.b16 %v126
  %v1076 = vunpack.c.l.b16 %v127
  %v1077 = vunpack.c.l.b16 %v128
  %v1078 = vunpack.c.l.b16 %v129
  %v1079 = vunpack.c.l.b16 %v130
  %v1080 = vunpack.c.l.b16 %v131
  %v1081 = vunpack.c.l.b16 %v132
  %v1082 = vunpack.c.l.b16 %v133
  %v1083 = vunpack.c.l.b16 %v134
  %v1084 = vunpack.c.l.b16 %v135
  %v1085 = vunpack.c.l.b16 %v136
  %v1086 = vunpack.c.l.b16 %v137
  %v1087 = vunpack.c.l.b16 %v138
  %v1088 = vunpack.c.l.b16 %v139
  %v1089 = vunpack.c.l.b16 %v140
  %v1090 = vunpack.c.l.b16 %v141
  %v1091 = vunpack.c.l.b16 %v142
  %v1092 = vunpack.c.l.b16 %v143
  %v1093 = vunpack.c.l.b16 %v144
  %v1094 = vunpack.c.l.b16 %v145
  %v1095 = vunpack.c.l.b16 %v146
  %v1096 = vunpack.c.l.b16 %v147
  %v1097 = vunpack.c.l.b16 %v148
  %v1098 = vunpack.c.l.b16 %v149
  %v1099 = vunpack.c.l.b16 %v150
  %v1100 = vpack.c.b16 %v973, %v972
  %v1101 = vpack.c.b16 %v975, %v974
  %v1102 = vpack.c.b16 %v977, %v976
  %v1103 = vpack.c.b16 %v979, %v978
  %v1104 = vpack.c.b16 %v981, %v980
  %v1105 = vpack.c.b16 %v983, %v982
  %v1106 = vpack.c.b16 %v985, %v984
  %v1107 = vpack.c.b16 %v987, %v986
  %v1108 = vpack.c.b16 %v989, %v988
  %v1109 = vpack.c.b16 %v991, %v990
  %v1110 = vpack.c.b16 %v993, %v992
  %v1111 = vpack.c.b16 %v995, %v994
  %v1112 = vpack.c.b16 %v997, %v996
  %v1113 = vpack.c.b16 %v999, %v998
  %v1114 = vpack.c.b16 %v1001, %v1000
  %v1115 = vpack.c.b16 %v1003, %v1002
  %v1116 = vpack.c.b16 %v1005, %v1004
  %v1117 = vpack.c.b16 %v1007, %v1006
  %v1118 = vpack.c.b16 %v1009, %v1008
  %v1119 = vpack.c.b16 %v1011, %v1010
  %v1120 = vpack.c.b16 %v1013, %v1012
  %v1121 = vpack.c.b16 %v1015, %v1014
  %v1122 = vpack.c.b16 %v1017, %v1016
  %v1123 = vpack.c.b16 %v1019, %v1018
  %v1124 = vpack.c.b16 %v1021, %v1020
  %v1125 = vpack.c.b16 %v1023, %v1022
  %v1126 = vpack.c.b16 %v1025, %v1024
  %v1127 = vpack.c.b16 %v1027, %v1026
  %v1128 = vpack.c.b16 %v1029, %v1028
  %v1129 = vpack.c.b16 %v1031, %v1030
  %v1130 = vpack.c.b16 %v1033, %v1032
  %v1131 = vpack.c.b16 %v1035, %v1034
  %v1132 = vpack.c.b16 %v1037, %v1036
  %v1133 = vpack.c.b16 %v1039, %v1038
  %v1134 = vpack.c.b16 %v1041, %v1040
  %v1135 = vpack.c.b16 %v1043, %v1042
  %v1136 = vpack.c.b16 %v1045, %v1044
  %v1137 = vpack.c.b16 %v1047, %v1046
  %v1138 = vpack.c.b16 %v1049, %v1048
  %v1139 = vpack.c.b16 %v1051, %v1050
  %v1140 = vpack.c.b16 %v1053, %v1052
  %v1141 = vpack.c.b16 %v1055, %v1054
  %v1142 = vpack.c.b16 %v1057, %v1056
  %v1143 = vpack.c.b16 %v1059, %v1058
  %v1144 = vpack.c.b16 %v1061, %v1060
  %v1145 = vpack.c.b16 %v1063, %v1062
  %v1146 = vpack.c.b16 %v1065, %v1064
  %v1147 = vpack.c.b16 %v1067, %v1066
  %v1148 = vpack.c.b16 %v1069, %v1068
  %v1149 = vpack.c.b16 %v1071, %v1070
  %v1150 = vpack.c.b16 %v1073, %v1072
  %v1151 = vpack.c.b16 %v1075, %v1074
  %v1152 = vpack.c.b16 %v1077, %v1076
  %v1153 = vpack.c.b16 %v1079, %v1078
  %v1154 = vpack.c.b16 %v1081, %v1080
  %v1155 = vpack.c.b16 %v1083, %v1082
  %v1156 = vpack.c.b16 %v1085, %v1084
  %v1157 = vpack.c.b16 %v1087, %v1086
  %v1158 = vpack.c.b16 %v1089, %v1088
  %v1159 = vpack.c.b16 %v1091, %v1090
  %v1160 = vpack.c.b16 %v1093, %v1092
  %v1161 = vpack.c.b16 %v1095, %v1094
  %v1162 = vpack.c.b16 %v1097, %v1096
  %v1163 = vpack.c.b16 %v1099, %v1098
  %1228 = vmatprep.subr.bf16.mxu0 0
  %1229 = vmatpush1.bf16.msra.mxu0 %v1107
  %1230 = vmatprep.subr.bf16.mxu0 0
  %1231 = vmatpush1.bf16.msra.mxu0 %v1106
  %1232 = vmatprep.subr.bf16.mxu0 0
  %1233 = vmatpush1.bf16.msra.mxu0 %v1105
  %1234 = vmatprep.subr.bf16.mxu0 0
  %1235 = vmatpush1.bf16.msra.mxu0 %v1104
  %1236 = vmatprep.subr.bf16.mxu0 0
  %1237 = vmatpush1.bf16.msra.mxu0 %v1103
  %1238 = vmatprep.subr.bf16.mxu0 0
  %1239 = vmatpush1.bf16.msra.mxu0 %v1102
  %1240 = vmatprep.subr.bf16.mxu0 0
  %1241 = vmatpush1.bf16.msra.mxu0 %v1101
  %1242 = vmatprep.subr.bf16.mxu0 0
  %1243 = vmatpush1.bf16.msra.mxu0 %v1100
  %1244 = vmatprep.subr.bf16.mxu0 0
  %1245 = vmatpush2.bf16.msra.mxu0 %v1115
  %1246 = vmatprep.subr.bf16.mxu0 0
  %1247 = vmatpush2.bf16.msra.mxu0 %v1114
  %1248 = vmatprep.subr.bf16.mxu0 0
  %1249 = vmatpush2.bf16.msra.mxu0 %v1113
  %1250 = vmatprep.subr.bf16.mxu0 0
  %1251 = vmatpush2.bf16.msra.mxu0 %v1112
  %1252 = vmatprep.subr.bf16.mxu0 0
  %1253 = vmatpush2.bf16.msra.mxu0 %v1111
  %1254 = vmatprep.subr.bf16.mxu0 0
  %1255 = vmatpush2.bf16.msra.mxu0 %v1110
  %1256 = vmatprep.subr.bf16.mxu0 0
  %1257 = vmatpush2.bf16.msra.mxu0 %v1109
  %1258 = vmatprep.subr.bf16.mxu0 0
  %1259 = vmatpush2.bf16.msra.mxu0 %v1108
  %1260 = vmatprep.mubr.bf16.mxu0 %v829
  %1261 = vmatmul.mubr.bf16.gmra.mxu0 %v828
  %v1262 = vpop.f32.mrf.mxu0
  %v1263 = vadd.f32 %v579, %v1262
  %v1264 = vpop.f32.mrf.mxu0
  %v1265 = vpop.f32.mrf.mxu0
  %v1266 = vpop.f32.mrf.mxu0
  %1267 = vdwg.mxu0
  %1268 = vmatprep.subr.bf16.mxu0 0
  %1269 = vmatpush1.bf16.msra.mxu0 %v1123
  %1270 = vmatprep.subr.bf16.mxu0 0
  %1271 = vmatpush1.bf16.msra.mxu0 %v1122
  %1272 = vmatprep.subr.bf16.mxu0 0
  %1273 = vmatpush1.bf16.msra.mxu0 %v1121
  %1274 = vmatprep.subr.bf16.mxu0 0
  %1275 = vmatpush1.bf16.msra.mxu0 %v1120
  %1276 = vmatprep.subr.bf16.mxu0 0
  %1277 = vmatpush1.bf16.msra.mxu0 %v1119
  %1278 = vmatprep.subr.bf16.mxu0 0
  %1279 = vmatpush1.bf16.msra.mxu0 %v1118
  %1280 = vmatprep.subr.bf16.mxu0 0
  %1281 = vmatpush1.bf16.msra.mxu0 %v1117
  %1282 = vmatprep.subr.bf16.mxu0 0
  %1283 = vmatpush1.bf16.msra.mxu0 %v1116
  %1284 = vmatprep.subr.bf16.mxu0 0
  %1285 = vmatpush2.bf16.msra.mxu0 %v1131
  %1286 = vmatprep.subr.bf16.mxu0 0
  %1287 = vmatpush2.bf16.msra.mxu0 %v1130
  %1288 = vmatprep.subr.bf16.mxu0 0
  %1289 = vmatpush2.bf16.msra.mxu0 %v1129
  %1290 = vmatprep.subr.bf16.mxu0 0
  %1291 = vmatpush2.bf16.msra.mxu0 %v1128
  %1292 = vmatprep.subr.bf16.mxu0 0
  %1293 = vmatpush2.bf16.msra.mxu0 %v1127
  %1294 = vmatprep.subr.bf16.mxu0 0
  %1295 = vmatpush2.bf16.msra.mxu0 %v1126
  %1296 = vmatprep.subr.bf16.mxu0 0
  %1297 = vmatpush2.bf16.msra.mxu0 %v1125
  %1298 = vmatprep.subr.bf16.mxu0 0
  %1299 = vmatpush2.bf16.msra.mxu0 %v1124
  %1300 = vmatprep.mubr.bf16.mxu0 %v831
  %1301 = vmatmul.mubr.bf16.gmra.mxu0 %v830
  %v1302 = vpop.f32.mrf.mxu0
  %v1303 = vadd.f32 %v1263, %v1302
  %v1304 = vpop.f32.mrf.mxu0
  %v1305 = vpop.f32.mrf.mxu0
  %v1306 = vpop.f32.mrf.mxu0
  %1307 = vdwg.mxu0
  %1308 = vmatprep.subr.bf16.mxu0 0
  %1309 = vmatpush1.bf16.msra.mxu0 %v1139
  %1310 = vmatprep.subr.bf16.mxu0 0
  %1311 = vmatpush1.bf16.msra.mxu0 %v1138
  %1312 = vmatprep.subr.bf16.mxu0 0
  %1313 = vmatpush1.bf16.msra.mxu0 %v1137
  %1314 = vmatprep.subr.bf16.mxu0 0
  %1315 = vmatpush1.bf16.msra.mxu0 %v1136
  %1316 = vmatprep.subr.bf16.mxu0 0
  %1317 = vmatpush1.bf16.msra.mxu0 %v1135
  %1318 = vmatprep.subr.bf16.mxu0 0
  %1319 = vmatpush1.bf16.msra.mxu0 %v1134
  %1320 = vmatprep.subr.bf16.mxu0 0
  %1321 = vmatpush1.bf16.msra.mxu0 %v1133
  %1322 = vmatprep.subr.bf16.mxu0 0
  %1323 = vmatpush1.bf16.msra.mxu0 %v1132
  %1324 = vmatprep.subr.bf16.mxu0 0
  %1325 = vmatpush2.bf16.msra.mxu0 %v1147
  %1326 = vmatprep.subr.bf16.mxu0 0
  %1327 = vmatpush2.bf16.msra.mxu0 %v1146
  %1328 = vmatprep.subr.bf16.mxu0 0
  %1329 = vmatpush2.bf16.msra.mxu0 %v1145
  %1330 = vmatprep.subr.bf16.mxu0 0
  %1331 = vmatpush2.bf16.msra.mxu0 %v1144
  %1332 = vmatprep.subr.bf16.mxu0 0
  %1333 = vmatpush2.bf16.msra.mxu0 %v1143
  %1334 = vmatprep.subr.bf16.mxu0 0
  %1335 = vmatpush2.bf16.msra.mxu0 %v1142
  %1336 = vmatprep.subr.bf16.mxu0 0
  %1337 = vmatpush2.bf16.msra.mxu0 %v1141
  %1338 = vmatprep.subr.bf16.mxu0 0
  %1339 = vmatpush2.bf16.msra.mxu0 %v1140
  %1340 = vmatprep.mubr.bf16.mxu0 %v833
  %1341 = vmatmul.mubr.bf16.gmra.mxu0 %v832
  %v1342 = vpop.f32.mrf.mxu0
  %v1343 = vadd.f32 %v1303, %v1342
  %v1344 = vpop.f32.mrf.mxu0
  %v1345 = vpop.f32.mrf.mxu0
  %v1346 = vpop.f32.mrf.mxu0
  %1347 = vdwg.mxu0
  %1348 = vmatprep.subr.bf16.mxu0 0
  %1349 = vmatpush1.bf16.msra.mxu0 %v1155
  %1350 = vmatprep.subr.bf16.mxu0 0
  %1351 = vmatpush1.bf16.msra.mxu0 %v1154
  %1352 = vmatprep.subr.bf16.mxu0 0
  %1353 = vmatpush1.bf16.msra.mxu0 %v1153
  %1354 = vmatprep.subr.bf16.mxu0 0
  %1355 = vmatpush1.bf16.msra.mxu0 %v1152
  %1356 = vmatprep.subr.bf16.mxu0 0
  %1357 = vmatpush1.bf16.msra.mxu0 %v1151
  %1358 = vmatprep.subr.bf16.mxu0 0
  %1359 = vmatpush1.bf16.msra.mxu0 %v1150
  %1360 = vmatprep.subr.bf16.mxu0 0
  %1361 = vmatpush1.bf16.msra.mxu0 %v1149
  %1362 = vmatprep.subr.bf16.mxu0 0
  %1363 = vmatpush1.bf16.msra.mxu0 %v1148
  %1364 = vmatprep.subr.bf16.mxu0 0
  %1365 = vmatpush2.bf16.msra.mxu0 %v1163
  %1366 = vmatprep.subr.bf16.mxu0 0
  %1367 = vmatpush2.bf16.msra.mxu0 %v1162
  %1368 = vmatprep.subr.bf16.mxu0 0
  %1369 = vmatpush2.bf16.msra.mxu0 %v1161
  %1370 = vmatprep.subr.bf16.mxu0 0
  %1371 = vmatpush2.bf16.msra.mxu0 %v1160
  %1372 = vmatprep.subr.bf16.mxu0 0
  %1373 = vmatpush2.bf16.msra.mxu0 %v1159
  %1374 = vmatprep.subr.bf16.mxu0 0
  %1375 = vmatpush2.bf16.msra.mxu0 %v1158
  %1376 = vmatprep.subr.bf16.mxu0 0
  %1377 = vmatpush2.bf16.msra.mxu0 %v1157
  %1378 = vmatprep.subr.bf16.mxu0 0
  %1379 = vmatpush2.bf16.msra.mxu0 %v1156
  %1380 = vmatprep.mubr.bf16.mxu0 %v835
  %1381 = vmatmul.mubr.bf16.gmra.mxu0 %v834
  %v1382 = vpop.f32.mrf.mxu0
  %v1383 = vadd.f32 %v1343, %v1382
  %v1384 = vpop.f32.mrf.mxu0
  %v1385 = vpop.f32.mrf.mxu0
  %v1386 = vpop.f32.mrf.mxu0
  %1387 = vdwg.mxu0
  %v1388 = vmax.f32 %v1383, 0.0
  %v1389 = vld [vmem:[%s3] sm:$0x1]
  %v1391 = vlaneseq
  %v1392 = vshrl.u32 %v1391, 7
  %v1393 = vsub.s32 0, %v1392
  %v1394 = vrot.slane %v1389, %v1393
  %v1396 = vmul.f32 %v1388, %v1394
  %v1397 = vadd.f32 %v1396, 0.0
  %s1398 = scalar_lea.vmem %s0, 1
  %v1399 = vld [vmem:[%s1398] ss:$8 sm:$0xf]
  %v1400 = vld [vmem:[%s1398] ss:$8 sm:$0xf0]
  %v1401 = vor.u32 %v1399, %v1400
  %s1402 = scalar_lea.vmem %s0, 65
  %v1403 = vld [vmem:[%s1402] ss:$8 sm:$0xf]
  %v1404 = vld [vmem:[%s1402] ss:$8 sm:$0xf0]
  %v1405 = vor.u32 %v1403, %v1404
  %s1406 = scalar_lea.vmem %s0, 129
  %v1407 = vld [vmem:[%s1406] ss:$8 sm:$0xf]
  %v1408 = vld [vmem:[%s1406] ss:$8 sm:$0xf0]
  %v1409 = vor.u32 %v1407, %v1408
  %s1410 = scalar_lea.vmem %s0, 193
  %v1411 = vld [vmem:[%s1410] ss:$8 sm:$0xf]
  %v1412 = vld [vmem:[%s1410] ss:$8 sm:$0xf0]
  %v1413 = vor.u32 %v1411, %v1412
  %s1414 = scalar_lea.vmem %s0, 257
  %v1415 = vld [vmem:[%s1414] ss:$8 sm:$0xf]
  %v1416 = vld [vmem:[%s1414] ss:$8 sm:$0xf0]
  %v1417 = vor.u32 %v1415, %v1416
  %s1418 = scalar_lea.vmem %s0, 321
  %v1419 = vld [vmem:[%s1418] ss:$8 sm:$0xf]
  %v1420 = vld [vmem:[%s1418] ss:$8 sm:$0xf0]
  %v1421 = vor.u32 %v1419, %v1420
  %s1422 = scalar_lea.vmem %s0, 385
  %v1423 = vld [vmem:[%s1422] ss:$8 sm:$0xf]
  %v1424 = vld [vmem:[%s1422] ss:$8 sm:$0xf0]
  %v1425 = vor.u32 %v1423, %v1424
  %s1426 = scalar_lea.vmem %s0, 449
  %v1427 = vld [vmem:[%s1426] ss:$8 sm:$0xf]
  %v1428 = vld [vmem:[%s1426] ss:$8 sm:$0xf0]
  %v1429 = vor.u32 %v1427, %v1428
  %v1438 = vlaneseq
  %v1439 = vshrl.u32 %v1438, 7
  %v1440 = vsub.s32 0, %v1439
  %v1441 = vrot.slane %v1401, %v1440
  %v1442 = vlaneseq
  %v1443 = vshrl.u32 %v1442, 7
  %v1444 = vsub.s32 1, %v1443
  %v1445 = vrot.slane %v1401, %v1444
  %v1446 = vlaneseq
  %v1447 = vshrl.u32 %v1446, 7
  %v1448 = vsub.s32 2, %v1447
  %v1449 = vrot.slane %v1401, %v1448
  %v1450 = vlaneseq
  %v1451 = vshrl.u32 %v1450, 7
  %v1452 = vsub.s32 3, %v1451
  %v1453 = vrot.slane %v1401, %v1452
  %v1454 = vlaneseq
  %v1455 = vshrl.u32 %v1454, 7
  %v1456 = vsub.s32 4, %v1455
  %v1457 = vrot.slane %v1401, %v1456
  %v1458 = vlaneseq
  %v1459 = vshrl.u32 %v1458, 7
  %v1460 = vsub.s32 5, %v1459
  %v1461 = vrot.slane %v1401, %v1460
  %v1462 = vlaneseq
  %v1463 = vshrl.u32 %v1462, 7
  %v1464 = vsub.s32 6, %v1463
  %v1465 = vrot.slane %v1401, %v1464
  %v1466 = vlaneseq
  %v1467 = vshrl.u32 %v1466, 7
  %v1468 = vsub.s32 7, %v1467
  %v1469 = vrot.slane %v1401, %v1468
  %v1470 = vlaneseq
  %v1471 = vshrl.u32 %v1470, 7
  %v1472 = vsub.s32 0, %v1471
  %v1473 = vrot.slane %v1405, %v1472
  %v1474 = vlaneseq
  %v1475 = vshrl.u32 %v1474, 7
  %v1476 = vsub.s32 1, %v1475
  %v1477 = vrot.slane %v1405, %v1476
  %v1478 = vlaneseq
  %v1479 = vshrl.u32 %v1478, 7
  %v1480 = vsub.s32 2, %v1479
  %v1481 = vrot.slane %v1405, %v1480
  %v1482 = vlaneseq
  %v1483 = vshrl.u32 %v1482, 7
  %v1484 = vsub.s32 3, %v1483
  %v1485 = vrot.slane %v1405, %v1484
  %v1486 = vlaneseq
  %v1487 = vshrl.u32 %v1486, 7
  %v1488 = vsub.s32 4, %v1487
  %v1489 = vrot.slane %v1405, %v1488
  %v1490 = vlaneseq
  %v1491 = vshrl.u32 %v1490, 7
  %v1492 = vsub.s32 5, %v1491
  %v1493 = vrot.slane %v1405, %v1492
  %v1494 = vlaneseq
  %v1495 = vshrl.u32 %v1494, 7
  %v1496 = vsub.s32 6, %v1495
  %v1497 = vrot.slane %v1405, %v1496
  %v1498 = vlaneseq
  %v1499 = vshrl.u32 %v1498, 7
  %v1500 = vsub.s32 7, %v1499
  %v1501 = vrot.slane %v1405, %v1500
  %v1502 = vlaneseq
  %v1503 = vshrl.u32 %v1502, 7
  %v1504 = vsub.s32 0, %v1503
  %v1505 = vrot.slane %v1409, %v1504
  %v1506 = vlaneseq
  %v1507 = vshrl.u32 %v1506, 7
  %v1508 = vsub.s32 1, %v1507
  %v1509 = vrot.slane %v1409, %v1508
  %v1510 = vlaneseq
  %v1511 = vshrl.u32 %v1510, 7
  %v1512 = vsub.s32 2, %v1511
  %v1513 = vrot.slane %v1409, %v1512
  %v1514 = vlaneseq
  %v1515 = vshrl.u32 %v1514, 7
  %v1516 = vsub.s32 3, %v1515
  %v1517 = vrot.slane %v1409, %v1516
  %v1518 = vlaneseq
  %v1519 = vshrl.u32 %v1518, 7
  %v1520 = vsub.s32 4, %v1519
  %v1521 = vrot.slane %v1409, %v1520
  %v1522 = vlaneseq
  %v1523 = vshrl.u32 %v1522, 7
  %v1524 = vsub.s32 5, %v1523
  %v1525 = vrot.slane %v1409, %v1524
  %v1526 = vlaneseq
  %v1527 = vshrl.u32 %v1526, 7
  %v1528 = vsub.s32 6, %v1527
  %v1529 = vrot.slane %v1409, %v1528
  %v1530 = vlaneseq
  %v1531 = vshrl.u32 %v1530, 7
  %v1532 = vsub.s32 7, %v1531
  %v1533 = vrot.slane %v1409, %v1532
  %v1534 = vlaneseq
  %v1535 = vshrl.u32 %v1534, 7
  %v1536 = vsub.s32 0, %v1535
  %v1537 = vrot.slane %v1413, %v1536
  %v1538 = vlaneseq
  %v1539 = vshrl.u32 %v1538, 7
  %v1540 = vsub.s32 1, %v1539
  %v1541 = vrot.slane %v1413, %v1540
  %v1542 = vlaneseq
  %v1543 = vshrl.u32 %v1542, 7
  %v1544 = vsub.s32 2, %v1543
  %v1545 = vrot.slane %v1413, %v1544
  %v1546 = vlaneseq
  %v1547 = vshrl.u32 %v1546, 7
  %v1548 = vsub.s32 3, %v1547
  %v1549 = vrot.slane %v1413, %v1548
  %v1550 = vlaneseq
  %v1551 = vshrl.u32 %v1550, 7
  %v1552 = vsub.s32 4, %v1551
  %v1553 = vrot.slane %v1413, %v1552
  %v1554 = vlaneseq
  %v1555 = vshrl.u32 %v1554, 7
  %v1556 = vsub.s32 5, %v1555
  %v1557 = vrot.slane %v1413, %v1556
  %v1558 = vlaneseq
  %v1559 = vshrl.u32 %v1558, 7
  %v1560 = vsub.s32 6, %v1559
  %v1561 = vrot.slane %v1413, %v1560
  %v1562 = vlaneseq
  %v1563 = vshrl.u32 %v1562, 7
  %v1564 = vsub.s32 7, %v1563
  %v1565 = vrot.slane %v1413, %v1564
  %v1566 = vlaneseq
  %v1567 = vshrl.u32 %v1566, 7
  %v1568 = vsub.s32 0, %v1567
  %v1569 = vrot.slane %v1417, %v1568
  %v1570 = vlaneseq
  %v1571 = vshrl.u32 %v1570, 7
  %v1572 = vsub.s32 1, %v1571
  %v1573 = vrot.slane %v1417, %v1572
  %v1574 = vlaneseq
  %v1575 = vshrl.u32 %v1574, 7
  %v1576 = vsub.s32 2, %v1575
  %v1577 = vrot.slane %v1417, %v1576
  %v1578 = vlaneseq
  %v1579 = vshrl.u32 %v1578, 7
  %v1580 = vsub.s32 3, %v1579
  %v1581 = vrot.slane %v1417, %v1580
  %v1582 = vlaneseq
  %v1583 = vshrl.u32 %v1582, 7
  %v1584 = vsub.s32 4, %v1583
  %v1585 = vrot.slane %v1417, %v1584
  %v1586 = vlaneseq
  %v1587 = vshrl.u32 %v1586, 7
  %v1588 = vsub.s32 5, %v1587
  %v1589 = vrot.slane %v1417, %v1588
  %v1590 = vlaneseq
  %v1591 = vshrl.u32 %v1590, 7
  %v1592 = vsub.s32 6, %v1591
  %v1593 = vrot.slane %v1417, %v1592
  %v1594 = vlaneseq
  %v1595 = vshrl.u32 %v1594, 7
  %v1596 = vsub.s32 7, %v1595
  %v1597 = vrot.slane %v1417, %v1596
  %v1598 = vlaneseq
  %v1599 = vshrl.u32 %v1598, 7
  %v1600 = vsub.s32 0, %v1599
  %v1601 = vrot.slane %v1421, %v1600
  %v1602 = vlaneseq
  %v1603 = vshrl.u32 %v1602, 7
  %v1604 = vsub.s32 1, %v1603
  %v1605 = vrot.slane %v1421, %v1604
  %v1606 = vlaneseq
  %v1607 = vshrl.u32 %v1606, 7
  %v1608 = vsub.s32 2, %v1607
  %v1609 = vrot.slane %v1421, %v1608
  %v1610 = vlaneseq
  %v1611 = vshrl.u32 %v1610, 7
  %v1612 = vsub.s32 3, %v1611
  %v1613 = vrot.slane %v1421, %v1612
  %v1614 = vlaneseq
  %v1615 = vshrl.u32 %v1614, 7
  %v1616 = vsub.s32 4, %v1615
  %v1617 = vrot.slane %v1421, %v1616
  %v1618 = vlaneseq
  %v1619 = vshrl.u32 %v1618, 7
  %v1620 = vsub.s32 5, %v1619
  %v1621 = vrot.slane %v1421, %v1620
  %v1622 = vlaneseq
  %v1623 = vshrl.u32 %v1622, 7
  %v1624 = vsub.s32 6, %v1623
  %v1625 = vrot.slane %v1421, %v1624
  %v1626 = vlaneseq
  %v1627 = vshrl.u32 %v1626, 7
  %v1628 = vsub.s32 7, %v1627
  %v1629 = vrot.slane %v1421, %v1628
  %v1630 = vlaneseq
  %v1631 = vshrl.u32 %v1630, 7
  %v1632 = vsub.s32 0, %v1631
  %v1633 = vrot.slane %v1425, %v1632
  %v1634 = vlaneseq
  %v1635 = vshrl.u32 %v1634, 7
  %v1636 = vsub.s32 1, %v1635
  %v1637 = vrot.slane %v1425, %v1636
  %v1638 = vlaneseq
  %v1639 = vshrl.u32 %v1638, 7
  %v1640 = vsub.s32 2, %v1639
  %v1641 = vrot.slane %v1425, %v1640
  %v1642 = vlaneseq
  %v1643 = vshrl.u32 %v1642, 7
  %v1644 = vsub.s32 3, %v1643
  %v1645 = vrot.slane %v1425, %v1644
  %v1646 = vlaneseq
  %v1647 = vshrl.u32 %v1646, 7
  %v1648 = vsub.s32 4, %v1647
  %v1649 = vrot.slane %v1425, %v1648
  %v1650 = vlaneseq
  %v1651 = vshrl.u32 %v1650, 7
  %v1652 = vsub.s32 5, %v1651
  %v1653 = vrot.slane %v1425, %v1652
  %v1654 = vlaneseq
  %v1655 = vshrl.u32 %v1654, 7
  %v1656 = vsub.s32 6, %v1655
  %v1657 = vrot.slane %v1425, %v1656
  %v1658 = vlaneseq
  %v1659 = vshrl.u32 %v1658, 7
  %v1660 = vsub.s32 7, %v1659
  %v1661 = vrot.slane %v1425, %v1660
  %v1662 = vlaneseq
  %v1663 = vshrl.u32 %v1662, 7
  %v1664 = vsub.s32 0, %v1663
  %v1665 = vrot.slane %v1429, %v1664
  %v1666 = vlaneseq
  %v1667 = vshrl.u32 %v1666, 7
  %v1668 = vsub.s32 1, %v1667
  %v1669 = vrot.slane %v1429, %v1668
  %v1670 = vlaneseq
  %v1671 = vshrl.u32 %v1670, 7
  %v1672 = vsub.s32 2, %v1671
  %v1673 = vrot.slane %v1429, %v1672
  %v1674 = vlaneseq
  %v1675 = vshrl.u32 %v1674, 7
  %v1676 = vsub.s32 3, %v1675
  %v1677 = vrot.slane %v1429, %v1676
  %v1678 = vlaneseq
  %v1679 = vshrl.u32 %v1678, 7
  %v1680 = vsub.s32 4, %v1679
  %v1681 = vrot.slane %v1429, %v1680
  %v1682 = vlaneseq
  %v1683 = vshrl.u32 %v1682, 7
  %v1684 = vsub.s32 5, %v1683
  %v1685 = vrot.slane %v1429, %v1684
  %v1686 = vlaneseq
  %v1687 = vshrl.u32 %v1686, 7
  %v1688 = vsub.s32 6, %v1687
  %v1689 = vrot.slane %v1429, %v1688
  %v1690 = vlaneseq
  %v1691 = vshrl.u32 %v1690, 7
  %v1692 = vsub.s32 7, %v1691
  %v1693 = vrot.slane %v1429, %v1692
  %v1758 = vpack.c.bf16 %v1441, %v1441
  %v1759 = vpack.c.bf16 %v1445, %v1445
  %v1760 = vpack.c.bf16 %v1449, %v1449
  %v1761 = vpack.c.bf16 %v1453, %v1453
  %v1762 = vpack.c.bf16 %v1457, %v1457
  %v1763 = vpack.c.bf16 %v1461, %v1461
  %v1764 = vpack.c.bf16 %v1465, %v1465
  %v1765 = vpack.c.bf16 %v1469, %v1469
  %v1766 = vpack.c.bf16 %v1473, %v1473
  %v1767 = vpack.c.bf16 %v1477, %v1477
  %v1768 = vpack.c.bf16 %v1481, %v1481
  %v1769 = vpack.c.bf16 %v1485, %v1485
  %v1770 = vpack.c.bf16 %v1489, %v1489
  %v1771 = vpack.c.bf16 %v1493, %v1493
  %v1772 = vpack.c.bf16 %v1497, %v1497
  %v1773 = vpack.c.bf16 %v1501, %v1501
  %v1774 = vpack.c.bf16 %v1505, %v1505
  %v1775 = vpack.c.bf16 %v1509, %v1509
  %v1776 = vpack.c.bf16 %v1513, %v1513
  %v1777 = vpack.c.bf16 %v1517, %v1517
  %v1778 = vpack.c.bf16 %v1521, %v1521
  %v1779 = vpack.c.bf16 %v1525, %v1525
  %v1780 = vpack.c.bf16 %v1529, %v1529
  %v1781 = vpack.c.bf16 %v1533, %v1533
  %v1782 = vpack.c.bf16 %v1537, %v1537
  %v1783 = vpack.c.bf16 %v1541, %v1541
  %v1784 = vpack.c.bf16 %v1545, %v1545
  %v1785 = vpack.c.bf16 %v1549, %v1549
  %v1786 = vpack.c.bf16 %v1553, %v1553
  %v1787 = vpack.c.bf16 %v1557, %v1557
  %v1788 = vpack.c.bf16 %v1561, %v1561
  %v1789 = vpack.c.bf16 %v1565, %v1565
  %v1790 = vpack.c.bf16 %v1569, %v1569
  %v1791 = vpack.c.bf16 %v1573, %v1573
  %v1792 = vpack.c.bf16 %v1577, %v1577
  %v1793 = vpack.c.bf16 %v1581, %v1581
  %v1794 = vpack.c.bf16 %v1585, %v1585
  %v1795 = vpack.c.bf16 %v1589, %v1589
  %v1796 = vpack.c.bf16 %v1593, %v1593
  %v1797 = vpack.c.bf16 %v1597, %v1597
  %v1798 = vpack.c.bf16 %v1601, %v1601
  %v1799 = vpack.c.bf16 %v1605, %v1605
  %v1800 = vpack.c.bf16 %v1609, %v1609
  %v1801 = vpack.c.bf16 %v1613, %v1613
  %v1802 = vpack.c.bf16 %v1617, %v1617
  %v1803 = vpack.c.bf16 %v1621, %v1621
  %v1804 = vpack.c.bf16 %v1625, %v1625
  %v1805 = vpack.c.bf16 %v1629, %v1629
  %v1806 = vpack.c.bf16 %v1633, %v1633
  %v1807 = vpack.c.bf16 %v1637, %v1637
  %v1808 = vpack.c.bf16 %v1641, %v1641
  %v1809 = vpack.c.bf16 %v1645, %v1645
  %v1810 = vpack.c.bf16 %v1649, %v1649
  %v1811 = vpack.c.bf16 %v1653, %v1653
  %v1812 = vpack.c.bf16 %v1657, %v1657
  %v1813 = vpack.c.bf16 %v1661, %v1661
  %v1814 = vpack.c.bf16 %v1665, %v1665
  %v1815 = vpack.c.bf16 %v1669, %v1669
  %v1816 = vpack.c.bf16 %v1673, %v1673
  %v1817 = vpack.c.bf16 %v1677, %v1677
  %v1818 = vpack.c.bf16 %v1681, %v1681
  %v1819 = vpack.c.bf16 %v1685, %v1685
  %v1820 = vpack.c.bf16 %v1689, %v1689
  %v1821 = vpack.c.bf16 %v1693, %v1693
  %v1886 = vunpack.c.l.b16 %v1758
  %v1887 = vunpack.c.l.b16 %v1759
  %v1888 = vunpack.c.l.b16 %v1760
  %v1889 = vunpack.c.l.b16 %v1761
  %v1890 = vunpack.c.l.b16 %v1762
  %v1891 = vunpack.c.l.b16 %v1763
  %v1892 = vunpack.c.l.b16 %v1764
  %v1893 = vunpack.c.l.b16 %v1765
  %v1894 = vunpack.c.l.b16 %v1766
  %v1895 = vunpack.c.l.b16 %v1767
  %v1896 = vunpack.c.l.b16 %v1768
  %v1897 = vunpack.c.l.b16 %v1769
  %v1898 = vunpack.c.l.b16 %v1770
  %v1899 = vunpack.c.l.b16 %v1771
  %v1900 = vunpack.c.l.b16 %v1772
  %v1901 = vunpack.c.l.b16 %v1773
  %v1902 = vunpack.c.l.b16 %v1774
  %v1903 = vunpack.c.l.b16 %v1775
  %v1904 = vunpack.c.l.b16 %v1776
  %v1905 = vunpack.c.l.b16 %v1777
  %v1906 = vunpack.c.l.b16 %v1778
  %v1907 = vunpack.c.l.b16 %v1779
  %v1908 = vunpack.c.l.b16 %v1780
  %v1909 = vunpack.c.l.b16 %v1781
  %v1910 = vunpack.c.l.b16 %v1782
  %v1911 = vunpack.c.l.b16 %v1783
  %v1912 = vunpack.c.l.b16 %v1784
  %v1913 = vunpack.c.l.b16 %v1785
  %v1914 = vunpack.c.l.b16 %v1786
  %v1915 = vunpack.c.l.b16 %v1787
  %v1916 = vunpack.c.l.b16 %v1788
  %v1917 = vunpack.c.l.b16 %v1789
  %v1918 = vunpack.c.l.b16 %v1790
  %v1919 = vunpack.c.l.b16 %v1791
  %v1920 = vunpack.c.l.b16 %v1792
  %v1921 = vunpack.c.l.b16 %v1793
  %v1922 = vunpack.c.l.b16 %v1794
  %v1923 = vunpack.c.l.b16 %v1795
  %v1924 = vunpack.c.l.b16 %v1796
  %v1925 = vunpack.c.l.b16 %v1797
  %v1926 = vunpack.c.l.b16 %v1798
  %v1927 = vunpack.c.l.b16 %v1799
  %v1928 = vunpack.c.l.b16 %v1800
  %v1929 = vunpack.c.l.b16 %v1801
  %v1930 = vunpack.c.l.b16 %v1802
  %v1931 = vunpack.c.l.b16 %v1803
  %v1932 = vunpack.c.l.b16 %v1804
  %v1933 = vunpack.c.l.b16 %v1805
  %v1934 = vunpack.c.l.b16 %v1806
  %v1935 = vunpack.c.l.b16 %v1807
  %v1936 = vunpack.c.l.b16 %v1808
  %v1937 = vunpack.c.l.b16 %v1809
  %v1938 = vunpack.c.l.b16 %v1810
  %v1939 = vunpack.c.l.b16 %v1811
  %v1940 = vunpack.c.l.b16 %v1812
  %v1941 = vunpack.c.l.b16 %v1813
  %v1942 = vunpack.c.l.b16 %v1814
  %v1943 = vunpack.c.l.b16 %v1815
  %v1944 = vunpack.c.l.b16 %v1816
  %v1945 = vunpack.c.l.b16 %v1817
  %v1946 = vunpack.c.l.b16 %v1818
  %v1947 = vunpack.c.l.b16 %v1819
  %v1948 = vunpack.c.l.b16 %v1820
  %v1949 = vunpack.c.l.b16 %v1821
  %v1950 = vrot.slane %v1894, 7
  %v1951 = vsel %vm710, %v1950, %v1886
  %v1952 = vrot.slane %v1902, 6
  %v1953 = vsel %vm713, %v1952, %v1951
  %v1954 = vrot.slane %v1910, 5
  %v1955 = vsel %vm716, %v1954, %v1953
  %v1956 = vrot.slane %v1918, 4
  %v1957 = vsel %vm719, %v1956, %v1955
  %v1958 = vrot.slane %v1926, 3
  %v1959 = vsel %vm722, %v1958, %v1957
  %v1960 = vrot.slane %v1934, 2
  %v1961 = vsel %vm725, %v1960, %v1959
  %v1962 = vrot.slane %v1942, 1
  %v1963 = vsel %vm728, %v1962, %v1961
  %v1964 = vrot.slane %v1895, 7
  %v1965 = vsel %vm710, %v1964, %v1887
  %v1966 = vrot.slane %v1903, 6
  %v1967 = vsel %vm713, %v1966, %v1965
  %v1968 = vrot.slane %v1911, 5
  %v1969 = vsel %vm716, %v1968, %v1967
  %v1970 = vrot.slane %v1919, 4
  %v1971 = vsel %vm719, %v1970, %v1969
  %v1972 = vrot.slane %v1927, 3
  %v1973 = vsel %vm722, %v1972, %v1971
  %v1974 = vrot.slane %v1935, 2
  %v1975 = vsel %vm725, %v1974, %v1973
  %v1976 = vrot.slane %v1943, 1
  %v1977 = vsel %vm728, %v1976, %v1975
  %v1978 = vrot.slane %v1896, 7
  %v1979 = vsel %vm710, %v1978, %v1888
  %v1980 = vrot.slane %v1904, 6
  %v1981 = vsel %vm713, %v1980, %v1979
  %v1982 = vrot.slane %v1912, 5
  %v1983 = vsel %vm716, %v1982, %v1981
  %v1984 = vrot.slane %v1920, 4
  %v1985 = vsel %vm719, %v1984, %v1983
  %v1986 = vrot.slane %v1928, 3
  %v1987 = vsel %vm722, %v1986, %v1985
  %v1988 = vrot.slane %v1936, 2
  %v1989 = vsel %vm725, %v1988, %v1987
  %v1990 = vrot.slane %v1944, 1
  %v1991 = vsel %vm728, %v1990, %v1989
  %v1992 = vrot.slane %v1897, 7
  %v1993 = vsel %vm710, %v1992, %v1889
  %v1994 = vrot.slane %v1905, 6
  %v1995 = vsel %vm713, %v1994, %v1993
  %v1996 = vrot.slane %v1913, 5
  %v1997 = vsel %vm716, %v1996, %v1995
  %v1998 = vrot.slane %v1921, 4
  %v1999 = vsel %vm719, %v1998, %v1997
  %v2000 = vrot.slane %v1929, 3
  %v2001 = vsel %vm722, %v2000, %v1999
  %v2002 = vrot.slane %v1937, 2
  %v2003 = vsel %vm725, %v2002, %v2001
  %v2004 = vrot.slane %v1945, 1
  %v2005 = vsel %vm728, %v2004, %v2003
  %v2006 = vrot.slane %v1898, 7
  %v2007 = vsel %vm710, %v2006, %v1890
  %v2008 = vrot.slane %v1906, 6
  %v2009 = vsel %vm713, %v2008, %v2007
  %v2010 = vrot.slane %v1914, 5
  %v2011 = vsel %vm716, %v2010, %v2009
  %v2012 = vrot.slane %v1922, 4
  %v2013 = vsel %vm719, %v2012, %v2011
  %v2014 = vrot.slane %v1930, 3
  %v2015 = vsel %vm722, %v2014, %v2013
  %v2016 = vrot.slane %v1938, 2
  %v2017 = vsel %vm725, %v2016, %v2015
  %v2018 = vrot.slane %v1946, 1
  %v2019 = vsel %vm728, %v2018, %v2017
  %v2020 = vrot.slane %v1899, 7
  %v2021 = vsel %vm710, %v2020, %v1891
  %v2022 = vrot.slane %v1907, 6
  %v2023 = vsel %vm713, %v2022, %v2021
  %v2024 = vrot.slane %v1915, 5
  %v2025 = vsel %vm716, %v2024, %v2023
  %v2026 = vrot.slane %v1923, 4
  %v2027 = vsel %vm719, %v2026, %v2025
  %v2028 = vrot.slane %v1931, 3
  %v2029 = vsel %vm722, %v2028, %v2027
  %v2030 = vrot.slane %v1939, 2
  %v2031 = vsel %vm725, %v2030, %v2029
  %v2032 = vrot.slane %v1947, 1
  %v2033 = vsel %vm728, %v2032, %v2031
  %v2034 = vrot.slane %v1900, 7
  %v2035 = vsel %vm710, %v2034, %v1892
  %v2036 = vrot.slane %v1908, 6
  %v2037 = vsel %vm713, %v2036, %v2035
  %v2038 = vrot.slane %v1916, 5
  %v2039 = vsel %vm716, %v2038, %v2037
  %v2040 = vrot.slane %v1924, 4
  %v2041 = vsel %vm719, %v2040, %v2039
  %v2042 = vrot.slane %v1932, 3
  %v2043 = vsel %vm722, %v2042, %v2041
  %v2044 = vrot.slane %v1940, 2
  %v2045 = vsel %vm725, %v2044, %v2043
  %v2046 = vrot.slane %v1948, 1
  %v2047 = vsel %vm728, %v2046, %v2045
  %v2048 = vrot.slane %v1901, 7
  %v2049 = vsel %vm710, %v2048, %v1893
  %v2050 = vrot.slane %v1909, 6
  %v2051 = vsel %vm713, %v2050, %v2049
  %v2052 = vrot.slane %v1917, 5
  %v2053 = vsel %vm716, %v2052, %v2051
  %v2054 = vrot.slane %v1925, 4
  %v2055 = vsel %vm719, %v2054, %v2053
  %v2056 = vrot.slane %v1933, 3
  %v2057 = vsel %vm722, %v2056, %v2055
  %v2058 = vrot.slane %v1941, 2
  %v2059 = vsel %vm725, %v2058, %v2057
  %v2060 = vrot.slane %v1949, 1
  %v2061 = vsel %vm728, %v2060, %v2059
  %v2062 = vpack.c.b16 %v1963, %v1963
  %v2063 = vpack.c.b16 %v1977, %v1977
  %v2064 = vpack.c.b16 %v1991, %v1991
  %v2065 = vpack.c.b16 %v2005, %v2005
  %v2066 = vpack.c.b16 %v2019, %v2019
  %v2067 = vpack.c.b16 %v2033, %v2033
  %v2068 = vpack.c.b16 %v2047, %v2047
  %v2069 = vpack.c.b16 %v2061, %v2061
  %2078 = vmatprep.subr.bf16.mxu0 0
  %2079 = vmatpush1.bf16.msra.mxu0 %v1107
  %2080 = vmatprep.subr.bf16.mxu0 0
  %2081 = vmatpush1.bf16.msra.mxu0 %v1106
  %2082 = vmatprep.subr.bf16.mxu0 0
  %2083 = vmatpush1.bf16.msra.mxu0 %v1105
  %2084 = vmatprep.subr.bf16.mxu0 0
  %2085 = vmatpush1.bf16.msra.mxu0 %v1104
  %2086 = vmatprep.subr.bf16.mxu0 0
  %2087 = vmatpush1.bf16.msra.mxu0 %v1103
  %2088 = vmatprep.subr.bf16.mxu0 0
  %2089 = vmatpush1.bf16.msra.mxu0 %v1102
  %2090 = vmatprep.subr.bf16.mxu0 0
  %2091 = vmatpush1.bf16.msra.mxu0 %v1101
  %2092 = vmatprep.subr.bf16.mxu0 0
  %2093 = vmatpush1.bf16.msra.mxu0 %v1100
  %2094 = vmatprep.subr.bf16.mxu0 0
  %2095 = vmatpush2.bf16.msra.mxu0 %v1115
  %2096 = vmatprep.subr.bf16.mxu0 0
  %2097 = vmatpush2.bf16.msra.mxu0 %v1114
  %2098 = vmatprep.subr.bf16.mxu0 0
  %2099 = vmatpush2.bf16.msra.mxu0 %v1113
  %2100 = vmatprep.subr.bf16.mxu0 0
  %2101 = vmatpush2.bf16.msra.mxu0 %v1112
  %2102 = vmatprep.subr.bf16.mxu0 0
  %2103 = vmatpush2.bf16.msra.mxu0 %v1111
  %2104 = vmatprep.subr.bf16.mxu0 0
  %2105 = vmatpush2.bf16.msra.mxu0 %v1110
  %2106 = vmatprep.subr.bf16.mxu0 0
  %2107 = vmatpush2.bf16.msra.mxu0 %v1109
  %2108 = vmatprep.subr.bf16.mxu0 0
  %2109 = vmatpush2.bf16.msra.mxu0 %v1108
  %2110 = vmatprep.mubr.bf16.mxu0 %v2063
  %2111 = vmatmul.mubr.bf16.gmra.mxu0 %v2062
  %v2112 = vpop.f32.mrf.mxu0
  %v2113 = vadd.f32 %v579, %v2112
  %v2114 = vpop.f32.mrf.mxu0
  %v2115 = vpop.f32.mrf.mxu0
  %v2116 = vpop.f32.mrf.mxu0
  %2117 = vdwg.mxu0
  %2118 = vmatprep.subr.bf16.mxu0 0
  %2119 = vmatpush1.bf16.msra.mxu0 %v1123
  %2120 = vmatprep.subr.bf16.mxu0 0
  %2121 = vmatpush1.bf16.msra.mxu0 %v1122
  %2122 = vmatprep.subr.bf16.mxu0 0
  %2123 = vmatpush1.bf16.msra.mxu0 %v1121
  %2124 = vmatprep.subr.bf16.mxu0 0
  %2125 = vmatpush1.bf16.msra.mxu0 %v1120
  %2126 = vmatprep.subr.bf16.mxu0 0
  %2127 = vmatpush1.bf16.msra.mxu0 %v1119
  %2128 = vmatprep.subr.bf16.mxu0 0
  %2129 = vmatpush1.bf16.msra.mxu0 %v1118
  %2130 = vmatprep.subr.bf16.mxu0 0
  %2131 = vmatpush1.bf16.msra.mxu0 %v1117
  %2132 = vmatprep.subr.bf16.mxu0 0
  %2133 = vmatpush1.bf16.msra.mxu0 %v1116
  %2134 = vmatprep.subr.bf16.mxu0 0
  %2135 = vmatpush2.bf16.msra.mxu0 %v1131
  %2136 = vmatprep.subr.bf16.mxu0 0
  %2137 = vmatpush2.bf16.msra.mxu0 %v1130
  %2138 = vmatprep.subr.bf16.mxu0 0
  %2139 = vmatpush2.bf16.msra.mxu0 %v1129
  %2140 = vmatprep.subr.bf16.mxu0 0
  %2141 = vmatpush2.bf16.msra.mxu0 %v1128
  %2142 = vmatprep.subr.bf16.mxu0 0
  %2143 = vmatpush2.bf16.msra.mxu0 %v1127
  %2144 = vmatprep.subr.bf16.mxu0 0
  %2145 = vmatpush2.bf16.msra.mxu0 %v1126
  %2146 = vmatprep.subr.bf16.mxu0 0
  %2147 = vmatpush2.bf16.msra.mxu0 %v1125
  %2148 = vmatprep.subr.bf16.mxu0 0
  %2149 = vmatpush2.bf16.msra.mxu0 %v1124
  %2150 = vmatprep.mubr.bf16.mxu0 %v2065
  %2151 = vmatmul.mubr.bf16.gmra.mxu0 %v2064
  %v2152 = vpop.f32.mrf.mxu0
  %v2153 = vadd.f32 %v2113, %v2152
  %v2154 = vpop.f32.mrf.mxu0
  %v2155 = vpop.f32.mrf.mxu0
  %v2156 = vpop.f32.mrf.mxu0
  %2157 = vdwg.mxu0
  %2158 = vmatprep.subr.bf16.mxu0 0
  %2159 = vmatpush1.bf16.msra.mxu0 %v1139
  %2160 = vmatprep.subr.bf16.mxu0 0
  %2161 = vmatpush1.bf16.msra.mxu0 %v1138
  %2162 = vmatprep.subr.bf16.mxu0 0
  %2163 = vmatpush1.bf16.msra.mxu0 %v1137
  %2164 = vmatprep.subr.bf16.mxu0 0
  %2165 = vmatpush1.bf16.msra.mxu0 %v1136
  %2166 = vmatprep.subr.bf16.mxu0 0
  %2167 = vmatpush1.bf16.msra.mxu0 %v1135
  %2168 = vmatprep.subr.bf16.mxu0 0
  %2169 = vmatpush1.bf16.msra.mxu0 %v1134
  %2170 = vmatprep.subr.bf16.mxu0 0
  %2171 = vmatpush1.bf16.msra.mxu0 %v1133
  %2172 = vmatprep.subr.bf16.mxu0 0
  %2173 = vmatpush1.bf16.msra.mxu0 %v1132
  %2174 = vmatprep.subr.bf16.mxu0 0
  %2175 = vmatpush2.bf16.msra.mxu0 %v1147
  %2176 = vmatprep.subr.bf16.mxu0 0
  %2177 = vmatpush2.bf16.msra.mxu0 %v1146
  %2178 = vmatprep.subr.bf16.mxu0 0
  %2179 = vmatpush2.bf16.msra.mxu0 %v1145
  %2180 = vmatprep.subr.bf16.mxu0 0
  %2181 = vmatpush2.bf16.msra.mxu0 %v1144
  %2182 = vmatprep.subr.bf16.mxu0 0
  %2183 = vmatpush2.bf16.msra.mxu0 %v1143
  %2184 = vmatprep.subr.bf16.mxu0 0
  %2185 = vmatpush2.bf16.msra.mxu0 %v1142
  %2186 = vmatprep.subr.bf16.mxu0 0
  %2187 = vmatpush2.bf16.msra.mxu0 %v1141
  %2188 = vmatprep.subr.bf16.mxu0 0
  %2189 = vmatpush2.bf16.msra.mxu0 %v1140
  %2190 = vmatprep.mubr.bf16.mxu0 %v2067
  %2191 = vmatmul.mubr.bf16.gmra.mxu0 %v2066
  %v2192 = vpop.f32.mrf.mxu0
  %v2193 = vadd.f32 %v2153, %v2192
  %v2194 = vpop.f32.mrf.mxu0
  %v2195 = vpop.f32.mrf.mxu0
  %v2196 = vpop.f32.mrf.mxu0
  %2197 = vdwg.mxu0
  %2198 = vmatprep.subr.bf16.mxu0 0
  %2199 = vmatpush1.bf16.msra.mxu0 %v1155
  %2200 = vmatprep.subr.bf16.mxu0 0
  %2201 = vmatpush1.bf16.msra.mxu0 %v1154
  %2202 = vmatprep.subr.bf16.mxu0 0
  %2203 = vmatpush1.bf16.msra.mxu0 %v1153
  %2204 = vmatprep.subr.bf16.mxu0 0
  %2205 = vmatpush1.bf16.msra.mxu0 %v1152
  %2206 = vmatprep.subr.bf16.mxu0 0
  %2207 = vmatpush1.bf16.msra.mxu0 %v1151
  %2208 = vmatprep.subr.bf16.mxu0 0
  %2209 = vmatpush1.bf16.msra.mxu0 %v1150
  %2210 = vmatprep.subr.bf16.mxu0 0
  %2211 = vmatpush1.bf16.msra.mxu0 %v1149
  %2212 = vmatprep.subr.bf16.mxu0 0
  %2213 = vmatpush1.bf16.msra.mxu0 %v1148
  %2214 = vmatprep.subr.bf16.mxu0 0
  %2215 = vmatpush2.bf16.msra.mxu0 %v1163
  %2216 = vmatprep.subr.bf16.mxu0 0
  %2217 = vmatpush2.bf16.msra.mxu0 %v1162
  %2218 = vmatprep.subr.bf16.mxu0 0
  %2219 = vmatpush2.bf16.msra.mxu0 %v1161
  %2220 = vmatprep.subr.bf16.mxu0 0
  %2221 = vmatpush2.bf16.msra.mxu0 %v1160
  %2222 = vmatprep.subr.bf16.mxu0 0
  %2223 = vmatpush2.bf16.msra.mxu0 %v1159
  %2224 = vmatprep.subr.bf16.mxu0 0
  %2225 = vmatpush2.bf16.msra.mxu0 %v1158
  %2226 = vmatprep.subr.bf16.mxu0 0
  %2227 = vmatpush2.bf16.msra.mxu0 %v1157
  %2228 = vmatprep.subr.bf16.mxu0 0
  %2229 = vmatpush2.bf16.msra.mxu0 %v1156
  %2230 = vmatprep.mubr.bf16.mxu0 %v2069
  %2231 = vmatmul.mubr.bf16.gmra.mxu0 %v2068
  %v2232 = vpop.f32.mrf.mxu0
  %v2233 = vadd.f32 %v2193, %v2232
  %v2234 = vpop.f32.mrf.mxu0
  %v2235 = vpop.f32.mrf.mxu0
  %v2236 = vpop.f32.mrf.mxu0
  %2237 = vdwg.mxu0
  %s2238 = scalar_lea.vmem %s3, 1
  %v2239 = vld [vmem:[%s2238] sm:$0x1]
  %v2241 = vlaneseq
  %v2242 = vshrl.u32 %v2241, 7
  %v2243 = vsub.s32 0, %v2242
  %v2244 = vrot.slane %v2239, %v2243
  %v2246 = vmul.f32 %v2233, %v2244
  %v2247 = vadd.f32 %v1397, %v2246
  %s2248 = scalar_lea.vmem %s0, 2
  %v2249 = vld [vmem:[%s2248] ss:$8 sm:$0xf]
  %v2250 = vld [vmem:[%s2248] ss:$8 sm:$0xf0]
  %v2251 = vor.u32 %v2249, %v2250
  %s2252 = scalar_lea.vmem %s0, 66
  %v2253 = vld [vmem:[%s2252] ss:$8 sm:$0xf]
  %v2254 = vld [vmem:[%s2252] ss:$8 sm:$0xf0]
  %v2255 = vor.u32 %v2253, %v2254
  %s2256 = scalar_lea.vmem %s0, 130
  %v2257 = vld [vmem:[%s2256] ss:$8 sm:$0xf]
  %v2258 = vld [vmem:[%s2256] ss:$8 sm:$0xf0]
  %v2259 = vor.u32 %v2257, %v2258
  %s2260 = scalar_lea.vmem %s0, 194
  %v2261 = vld [vmem:[%s2260] ss:$8 sm:$0xf]
  %v2262 = vld [vmem:[%s2260] ss:$8 sm:$0xf0]
  %v2263 = vor.u32 %v2261, %v2262
  %s2264 = scalar_lea.vmem %s0, 258
  %v2265 = vld [vmem:[%s2264] ss:$8 sm:$0xf]
  %v2266 = vld [vmem:[%s2264] ss:$8 sm:$0xf0]
  %v2267 = vor.u32 %v2265, %v2266
  %s2268 = scalar_lea.vmem %s0, 322
  %v2269 = vld [vmem:[%s2268] ss:$8 sm:$0xf]
  %v2270 = vld [vmem:[%s2268] ss:$8 sm:$0xf0]
  %v2271 = vor.u32 %v2269, %v2270
  %s2272 = scalar_lea.vmem %s0, 386
  %v2273 = vld [vmem:[%s2272] ss:$8 sm:$0xf]
  %v2274 = vld [vmem:[%s2272] ss:$8 sm:$0xf0]
  %v2275 = vor.u32 %v2273, %v2274
  %s2276 = scalar_lea.vmem %s0, 450
  %v2277 = vld [vmem:[%s2276] ss:$8 sm:$0xf]
  %v2278 = vld [vmem:[%s2276] ss:$8 sm:$0xf0]
  %v2279 = vor.u32 %v2277, %v2278
  %v2288 = vlaneseq
  %v2289 = vshrl.u32 %v2288, 7
  %v2290 = vsub.s32 0, %v2289
  %v2291 = vrot.slane %v2251, %v2290
  %v2292 = vlaneseq
  %v2293 = vshrl.u32 %v2292, 7
  %v2294 = vsub.s32 1, %v2293
  %v2295 = vrot.slane %v2251, %v2294
  %v2296 = vlaneseq
  %v2297 = vshrl.u32 %v2296, 7
  %v2298 = vsub.s32 2, %v2297
  %v2299 = vrot.slane %v2251, %v2298
  %v2300 = vlaneseq
  %v2301 = vshrl.u32 %v2300, 7
  %v2302 = vsub.s32 3, %v2301
  %v2303 = vrot.slane %v2251, %v2302
  %v2304 = vlaneseq
  %v2305 = vshrl.u32 %v2304, 7
  %v2306 = vsub.s32 4, %v2305
  %v2307 = vrot.slane %v2251, %v2306
  %v2308 = vlaneseq
  %v2309 = vshrl.u32 %v2308, 7
  %v2310 = vsub.s32 5, %v2309
  %v2311 = vrot.slane %v2251, %v2310
  %v2312 = vlaneseq
  %v2313 = vshrl.u32 %v2312, 7
  %v2314 = vsub.s32 6, %v2313
  %v2315 = vrot.slane %v2251, %v2314
  %v2316 = vlaneseq
  %v2317 = vshrl.u32 %v2316, 7
  %v2318 = vsub.s32 7, %v2317
  %v2319 = vrot.slane %v2251, %v2318
  %v2320 = vlaneseq
  %v2321 = vshrl.u32 %v2320, 7
  %v2322 = vsub.s32 0, %v2321
  %v2323 = vrot.slane %v2255, %v2322
  %v2324 = vlaneseq
  %v2325 = vshrl.u32 %v2324, 7
  %v2326 = vsub.s32 1, %v2325
  %v2327 = vrot.slane %v2255, %v2326
  %v2328 = vlaneseq
  %v2329 = vshrl.u32 %v2328, 7
  %v2330 = vsub.s32 2, %v2329
  %v2331 = vrot.slane %v2255, %v2330
  %v2332 = vlaneseq
  %v2333 = vshrl.u32 %v2332, 7
  %v2334 = vsub.s32 3, %v2333
  %v2335 = vrot.slane %v2255, %v2334
  %v2336 = vlaneseq
  %v2337 = vshrl.u32 %v2336, 7
  %v2338 = vsub.s32 4, %v2337
  %v2339 = vrot.slane %v2255, %v2338
  %v2340 = vlaneseq
  %v2341 = vshrl.u32 %v2340, 7
  %v2342 = vsub.s32 5, %v2341
  %v2343 = vrot.slane %v2255, %v2342
  %v2344 = vlaneseq
  %v2345 = vshrl.u32 %v2344, 7
  %v2346 = vsub.s32 6, %v2345
  %v2347 = vrot.slane %v2255, %v2346
  %v2348 = vlaneseq
  %v2349 = vshrl.u32 %v2348, 7
  %v2350 = vsub.s32 7, %v2349
  %v2351 = vrot.slane %v2255, %v2350
  %v2352 = vlaneseq
  %v2353 = vshrl.u32 %v2352, 7
  %v2354 = vsub.s32 0, %v2353
  %v2355 = vrot.slane %v2259, %v2354
  %v2356 = vlaneseq
  %v2357 = vshrl.u32 %v2356, 7
  %v2358 = vsub.s32 1, %v2357
  %v2359 = vrot.slane %v2259, %v2358
  %v2360 = vlaneseq
  %v2361 = vshrl.u32 %v2360, 7
  %v2362 = vsub.s32 2, %v2361
  %v2363 = vrot.slane %v2259, %v2362
  %v2364 = vlaneseq
  %v2365 = vshrl.u32 %v2364, 7
  %v2366 = vsub.s32 3, %v2365
  %v2367 = vrot.slane %v2259, %v2366
  %v2368 = vlaneseq
  %v2369 = vshrl.u32 %v2368, 7
  %v2370 = vsub.s32 4, %v2369
  %v2371 = vrot.slane %v2259, %v2370
  %v2372 = vlaneseq
  %v2373 = vshrl.u32 %v2372, 7
  %v2374 = vsub.s32 5, %v2373
  %v2375 = vrot.slane %v2259, %v2374
  %v2376 = vlaneseq
  %v2377 = vshrl.u32 %v2376, 7
  %v2378 = vsub.s32 6, %v2377
  %v2379 = vrot.slane %v2259, %v2378
  %v2380 = vlaneseq
  %v2381 = vshrl.u32 %v2380, 7
  %v2382 = vsub.s32 7, %v2381
  %v2383 = vrot.slane %v2259, %v2382
  %v2384 = vlaneseq
  %v2385 = vshrl.u32 %v2384, 7
  %v2386 = vsub.s32 0, %v2385
  %v2387 = vrot.slane %v2263, %v2386
  %v2388 = vlaneseq
  %v2389 = vshrl.u32 %v2388, 7
  %v2390 = vsub.s32 1, %v2389
  %v2391 = vrot.slane %v2263, %v2390
  %v2392 = vlaneseq
  %v2393 = vshrl.u32 %v2392, 7
  %v2394 = vsub.s32 2, %v2393
  %v2395 = vrot.slane %v2263, %v2394
  %v2396 = vlaneseq
  %v2397 = vshrl.u32 %v2396, 7
  %v2398 = vsub.s32 3, %v2397
  %v2399 = vrot.slane %v2263, %v2398
  %v2400 = vlaneseq
  %v2401 = vshrl.u32 %v2400, 7
  %v2402 = vsub.s32 4, %v2401
  %v2403 = vrot.slane %v2263, %v2402
  %v2404 = vlaneseq
  %v2405 = vshrl.u32 %v2404, 7
  %v2406 = vsub.s32 5, %v2405
  %v2407 = vrot.slane %v2263, %v2406
  %v2408 = vlaneseq
  %v2409 = vshrl.u32 %v2408, 7
  %v2410 = vsub.s32 6, %v2409
  %v2411 = vrot.slane %v2263, %v2410
  %v2412 = vlaneseq
  %v2413 = vshrl.u32 %v2412, 7
  %v2414 = vsub.s32 7, %v2413
  %v2415 = vrot.slane %v2263, %v2414
  %v2416 = vlaneseq
  %v2417 = vshrl.u32 %v2416, 7
  %v2418 = vsub.s32 0, %v2417
  %v2419 = vrot.slane %v2267, %v2418
  %v2420 = vlaneseq
  %v2421 = vshrl.u32 %v2420, 7
  %v2422 = vsub.s32 1, %v2421
  %v2423 = vrot.slane %v2267, %v2422
  %v2424 = vlaneseq
  %v2425 = vshrl.u32 %v2424, 7
  %v2426 = vsub.s32 2, %v2425
  %v2427 = vrot.slane %v2267, %v2426
  %v2428 = vlaneseq
  %v2429 = vshrl.u32 %v2428, 7
  %v2430 = vsub.s32 3, %v2429
  %v2431 = vrot.slane %v2267, %v2430
  %v2432 = vlaneseq
  %v2433 = vshrl.u32 %v2432, 7
  %v2434 = vsub.s32 4, %v2433
  %v2435 = vrot.slane %v2267, %v2434
  %v2436 = vlaneseq
  %v2437 = vshrl.u32 %v2436, 7
  %v2438 = vsub.s32 5, %v2437
  %v2439 = vrot.slane %v2267, %v2438
  %v2440 = vlaneseq
  %v2441 = vshrl.u32 %v2440, 7
  %v2442 = vsub.s32 6, %v2441
  %v2443 = vrot.slane %v2267, %v2442
  %v2444 = vlaneseq
  %v2445 = vshrl.u32 %v2444, 7
  %v2446 = vsub.s32 7, %v2445
  %v2447 = vrot.slane %v2267, %v2446
  %v2448 = vlaneseq
  %v2449 = vshrl.u32 %v2448, 7
  %v2450 = vsub.s32 0, %v2449
  %v2451 = vrot.slane %v2271, %v2450
  %v2452 = vlaneseq
  %v2453 = vshrl.u32 %v2452, 7
  %v2454 = vsub.s32 1, %v2453
  %v2455 = vrot.slane %v2271, %v2454
  %v2456 = vlaneseq
  %v2457 = vshrl.u32 %v2456, 7
  %v2458 = vsub.s32 2, %v2457
  %v2459 = vrot.slane %v2271, %v2458
  %v2460 = vlaneseq
  %v2461 = vshrl.u32 %v2460, 7
  %v2462 = vsub.s32 3, %v2461
  %v2463 = vrot.slane %v2271, %v2462
  %v2464 = vlaneseq
  %v2465 = vshrl.u32 %v2464, 7
  %v2466 = vsub.s32 4, %v2465
  %v2467 = vrot.slane %v2271, %v2466
  %v2468 = vlaneseq
  %v2469 = vshrl.u32 %v2468, 7
  %v2470 = vsub.s32 5, %v2469
  %v2471 = vrot.slane %v2271, %v2470
  %v2472 = vlaneseq
  %v2473 = vshrl.u32 %v2472, 7
  %v2474 = vsub.s32 6, %v2473
  %v2475 = vrot.slane %v2271, %v2474
  %v2476 = vlaneseq
  %v2477 = vshrl.u32 %v2476, 7
  %v2478 = vsub.s32 7, %v2477
  %v2479 = vrot.slane %v2271, %v2478
  %v2480 = vlaneseq
  %v2481 = vshrl.u32 %v2480, 7
  %v2482 = vsub.s32 0, %v2481
  %v2483 = vrot.slane %v2275, %v2482
  %v2484 = vlaneseq
  %v2485 = vshrl.u32 %v2484, 7
  %v2486 = vsub.s32 1, %v2485
  %v2487 = vrot.slane %v2275, %v2486
  %v2488 = vlaneseq
  %v2489 = vshrl.u32 %v2488, 7
  %v2490 = vsub.s32 2, %v2489
  %v2491 = vrot.slane %v2275, %v2490
  %v2492 = vlaneseq
  %v2493 = vshrl.u32 %v2492, 7
  %v2494 = vsub.s32 3, %v2493
  %v2495 = vrot.slane %v2275, %v2494
  %v2496 = vlaneseq
  %v2497 = vshrl.u32 %v2496, 7
  %v2498 = vsub.s32 4, %v2497
  %v2499 = vrot.slane %v2275, %v2498
  %v2500 = vlaneseq
  %v2501 = vshrl.u32 %v2500, 7
  %v2502 = vsub.s32 5, %v2501
  %v2503 = vrot.slane %v2275, %v2502
  %v2504 = vlaneseq
  %v2505 = vshrl.u32 %v2504, 7
  %v2506 = vsub.s32 6, %v2505
  %v2507 = vrot.slane %v2275, %v2506
  %v2508 = vlaneseq
  %v2509 = vshrl.u32 %v2508, 7
  %v2510 = vsub.s32 7, %v2509
  %v2511 = vrot.slane %v2275, %v2510
  %v2512 = vlaneseq
  %v2513 = vshrl.u32 %v2512, 7
  %v2514 = vsub.s32 0, %v2513
  %v2515 = vrot.slane %v2279, %v2514
  %v2516 = vlaneseq
  %v2517 = vshrl.u32 %v2516, 7
  %v2518 = vsub.s32 1, %v2517
  %v2519 = vrot.slane %v2279, %v2518
  %v2520 = vlaneseq
  %v2521 = vshrl.u32 %v2520, 7
  %v2522 = vsub.s32 2, %v2521
  %v2523 = vrot.slane %v2279, %v2522
  %v2524 = vlaneseq
  %v2525 = vshrl.u32 %v2524, 7
  %v2526 = vsub.s32 3, %v2525
  %v2527 = vrot.slane %v2279, %v2526
  %v2528 = vlaneseq
  %v2529 = vshrl.u32 %v2528, 7
  %v2530 = vsub.s32 4, %v2529
  %v2531 = vrot.slane %v2279, %v2530
  %v2532 = vlaneseq
  %v2533 = vshrl.u32 %v2532, 7
  %v2534 = vsub.s32 5, %v2533
  %v2535 = vrot.slane %v2279, %v2534
  %v2536 = vlaneseq
  %v2537 = vshrl.u32 %v2536, 7
  %v2538 = vsub.s32 6, %v2537
  %v2539 = vrot.slane %v2279, %v2538
  %v2540 = vlaneseq
  %v2541 = vshrl.u32 %v2540, 7
  %v2542 = vsub.s32 7, %v2541
  %v2543 = vrot.slane %v2279, %v2542
  %v2608 = vpack.c.bf16 %v2291, %v2291
  %v2609 = vpack.c.bf16 %v2295, %v2295
  %v2610 = vpack.c.bf16 %v2299, %v2299
  %v2611 = vpack.c.bf16 %v2303, %v2303
  %v2612 = vpack.c.bf16 %v2307, %v2307
  %v2613 = vpack.c.bf16 %v2311, %v2311
  %v2614 = vpack.c.bf16 %v2315, %v2315
  %v2615 = vpack.c.bf16 %v2319, %v2319
  %v2616 = vpack.c.bf16 %v2323, %v2323
  %v2617 = vpack.c.bf16 %v2327, %v2327
  %v2618 = vpack.c.bf16 %v2331, %v2331
  %v2619 = vpack.c.bf16 %v2335, %v2335
  %v2620 = vpack.c.bf16 %v2339, %v2339
  %v2621 = vpack.c.bf16 %v2343, %v2343
  %v2622 = vpack.c.bf16 %v2347, %v2347
  %v2623 = vpack.c.bf16 %v2351, %v2351
  %v2624 = vpack.c.bf16 %v2355, %v2355
  %v2625 = vpack.c.bf16 %v2359, %v2359
  %v2626 = vpack.c.bf16 %v2363, %v2363
  %v2627 = vpack.c.bf16 %v2367, %v2367
  %v2628 = vpack.c.bf16 %v2371, %v2371
  %v2629 = vpack.c.bf16 %v2375, %v2375
  %v2630 = vpack.c.bf16 %v2379, %v2379
  %v2631 = vpack.c.bf16 %v2383, %v2383
  %v2632 = vpack.c.bf16 %v2387, %v2387
  %v2633 = vpack.c.bf16 %v2391, %v2391
  %v2634 = vpack.c.bf16 %v2395, %v2395
  %v2635 = vpack.c.bf16 %v2399, %v2399
  %v2636 = vpack.c.bf16 %v2403, %v2403
  %v2637 = vpack.c.bf16 %v2407, %v2407
  %v2638 = vpack.c.bf16 %v2411, %v2411
  %v2639 = vpack.c.bf16 %v2415, %v2415
  %v2640 = vpack.c.bf16 %v2419, %v2419
  %v2641 = vpack.c.bf16 %v2423, %v2423
  %v2642 = vpack.c.bf16 %v2427, %v2427
  %v2643 = vpack.c.bf16 %v2431, %v2431
  %v2644 = vpack.c.bf16 %v2435, %v2435
  %v2645 = vpack.c.bf16 %v2439, %v2439
  %v2646 = vpack.c.bf16 %v2443, %v2443
  %v2647 = vpack.c.bf16 %v2447, %v2447
  %v2648 = vpack.c.bf16 %v2451, %v2451
  %v2649 = vpack.c.bf16 %v2455, %v2455
  %v2650 = vpack.c.bf16 %v2459, %v2459
  %v2651 = vpack.c.bf16 %v2463, %v2463
  %v2652 = vpack.c.bf16 %v2467, %v2467
  %v2653 = vpack.c.bf16 %v2471, %v2471
  %v2654 = vpack.c.bf16 %v2475, %v2475
  %v2655 = vpack.c.bf16 %v2479, %v2479
  %v2656 = vpack.c.bf16 %v2483, %v2483
  %v2657 = vpack.c.bf16 %v2487, %v2487
  %v2658 = vpack.c.bf16 %v2491, %v2491
  %v2659 = vpack.c.bf16 %v2495, %v2495
  %v2660 = vpack.c.bf16 %v2499, %v2499
  %v2661 = vpack.c.bf16 %v2503, %v2503
  %v2662 = vpack.c.bf16 %v2507, %v2507
  %v2663 = vpack.c.bf16 %v2511, %v2511
  %v2664 = vpack.c.bf16 %v2515, %v2515
  %v2665 = vpack.c.bf16 %v2519, %v2519
  %v2666 = vpack.c.bf16 %v2523, %v2523
  %v2667 = vpack.c.bf16 %v2527, %v2527
  %v2668 = vpack.c.bf16 %v2531, %v2531
  %v2669 = vpack.c.bf16 %v2535, %v2535
  %v2670 = vpack.c.bf16 %v2539, %v2539
  %v2671 = vpack.c.bf16 %v2543, %v2543
  %v2736 = vunpack.c.l.b16 %v2608
  %v2737 = vunpack.c.l.b16 %v2609
  %v2738 = vunpack.c.l.b16 %v2610
  %v2739 = vunpack.c.l.b16 %v2611
  %v2740 = vunpack.c.l.b16 %v2612
  %v2741 = vunpack.c.l.b16 %v2613
  %v2742 = vunpack.c.l.b16 %v2614
  %v2743 = vunpack.c.l.b16 %v2615
  %v2744 = vunpack.c.l.b16 %v2616
  %v2745 = vunpack.c.l.b16 %v2617
  %v2746 = vunpack.c.l.b16 %v2618
  %v2747 = vunpack.c.l.b16 %v2619
  %v2748 = vunpack.c.l.b16 %v2620
  %v2749 = vunpack.c.l.b16 %v2621
  %v2750 = vunpack.c.l.b16 %v2622
  %v2751 = vunpack.c.l.b16 %v2623
  %v2752 = vunpack.c.l.b16 %v2624
  %v2753 = vunpack.c.l.b16 %v2625
  %v2754 = vunpack.c.l.b16 %v2626
  %v2755 = vunpack.c.l.b16 %v2627
  %v2756 = vunpack.c.l.b16 %v2628
  %v2757 = vunpack.c.l.b16 %v2629
  %v2758 = vunpack.c.l.b16 %v2630
  %v2759 = vunpack.c.l.b16 %v2631
  %v2760 = vunpack.c.l.b16 %v2632
  %v2761 = vunpack.c.l.b16 %v2633
  %v2762 = vunpack.c.l.b16 %v2634
  %v2763 = vunpack.c.l.b16 %v2635
  %v2764 = vunpack.c.l.b16 %v2636
  %v2765 = vunpack.c.l.b16 %v2637
  %v2766 = vunpack.c.l.b16 %v2638
  %v2767 = vunpack.c.l.b16 %v2639
  %v2768 = vunpack.c.l.b16 %v2640
  %v2769 = vunpack.c.l.b16 %v2641
  %v2770 = vunpack.c.l.b16 %v2642
  %v2771 = vunpack.c.l.b16 %v2643
  %v2772 = vunpack.c.l.b16 %v2644
  %v2773 = vunpack.c.l.b16 %v2645
  %v2774 = vunpack.c.l.b16 %v2646
  %v2775 = vunpack.c.l.b16 %v2647
  %v2776 = vunpack.c.l.b16 %v2648
  %v2777 = vunpack.c.l.b16 %v2649
  %v2778 = vunpack.c.l.b16 %v2650
  %v2779 = vunpack.c.l.b16 %v2651
  %v2780 = vunpack.c.l.b16 %v2652
  %v2781 = vunpack.c.l.b16 %v2653
  %v2782 = vunpack.c.l.b16 %v2654
  %v2783 = vunpack.c.l.b16 %v2655
  %v2784 = vunpack.c.l.b16 %v2656
  %v2785 = vunpack.c.l.b16 %v2657
  %v2786 = vunpack.c.l.b16 %v2658
  %v2787 = vunpack.c.l.b16 %v2659
  %v2788 = vunpack.c.l.b16 %v2660
  %v2789 = vunpack.c.l.b16 %v2661
  %v2790 = vunpack.c.l.b16 %v2662
  %v2791 = vunpack.c.l.b16 %v2663
  %v2792 = vunpack.c.l.b16 %v2664
  %v2793 = vunpack.c.l.b16 %v2665
  %v2794 = vunpack.c.l.b16 %v2666
  %v2795 = vunpack.c.l.b16 %v2667
  %v2796 = vunpack.c.l.b16 %v2668
  %v2797 = vunpack.c.l.b16 %v2669
  %v2798 = vunpack.c.l.b16 %v2670
  %v2799 = vunpack.c.l.b16 %v2671
  %v2800 = vrot.slane %v2744, 7
  %v2801 = vsel %vm710, %v2800, %v2736
  %v2802 = vrot.slane %v2752, 6
  %v2803 = vsel %vm713, %v2802, %v2801
  %v2804 = vrot.slane %v2760, 5
  %v2805 = vsel %vm716, %v2804, %v2803
  %v2806 = vrot.slane %v2768, 4
  %v2807 = vsel %vm719, %v2806, %v2805
  %v2808 = vrot.slane %v2776, 3
  %v2809 = vsel %vm722, %v2808, %v2807
  %v2810 = vrot.slane %v2784, 2
  %v2811 = vsel %vm725, %v2810, %v2809
  %v2812 = vrot.slane %v2792, 1
  %v2813 = vsel %vm728, %v2812, %v2811
  %v2814 = vrot.slane %v2745, 7
  %v2815 = vsel %vm710, %v2814, %v2737
  %v2816 = vrot.slane %v2753, 6
  %v2817 = vsel %vm713, %v2816, %v2815
  %v2818 = vrot.slane %v2761, 5
  %v2819 = vsel %vm716, %v2818, %v2817
  %v2820 = vrot.slane %v2769, 4
  %v2821 = vsel %vm719, %v2820, %v2819
  %v2822 = vrot.slane %v2777, 3
  %v2823 = vsel %vm722, %v2822, %v2821
  %v2824 = vrot.slane %v2785, 2
  %v2825 = vsel %vm725, %v2824, %v2823
  %v2826 = vrot.slane %v2793, 1
  %v2827 = vsel %vm728, %v2826, %v2825
  %v2828 = vrot.slane %v2746, 7
  %v2829 = vsel %vm710, %v2828, %v2738
  %v2830 = vrot.slane %v2754, 6
  %v2831 = vsel %vm713, %v2830, %v2829
  %v2832 = vrot.slane %v2762, 5
  %v2833 = vsel %vm716, %v2832, %v2831
  %v2834 = vrot.slane %v2770, 4
  %v2835 = vsel %vm719, %v2834, %v2833
  %v2836 = vrot.slane %v2778, 3
  %v2837 = vsel %vm722, %v2836, %v2835
  %v2838 = vrot.slane %v2786, 2
  %v2839 = vsel %vm725, %v2838, %v2837
  %v2840 = vrot.slane %v2794, 1
  %v2841 = vsel %vm728, %v2840, %v2839
  %v2842 = vrot.slane %v2747, 7
  %v2843 = vsel %vm710, %v2842, %v2739
  %v2844 = vrot.slane %v2755, 6
  %v2845 = vsel %vm713, %v2844, %v2843
  %v2846 = vrot.slane %v2763, 5
  %v2847 = vsel %vm716, %v2846, %v2845
  %v2848 = vrot.slane %v2771, 4
  %v2849 = vsel %vm719, %v2848, %v2847
  %v2850 = vrot.slane %v2779, 3
  %v2851 = vsel %vm722, %v2850, %v2849
  %v2852 = vrot.slane %v2787, 2
  %v2853 = vsel %vm725, %v2852, %v2851
  %v2854 = vrot.slane %v2795, 1
  %v2855 = vsel %vm728, %v2854, %v2853
  %v2856 = vrot.slane %v2748, 7
  %v2857 = vsel %vm710, %v2856, %v2740
  %v2858 = vrot.slane %v2756, 6
  %v2859 = vsel %vm713, %v2858, %v2857
  %v2860 = vrot.slane %v2764, 5
  %v2861 = vsel %vm716, %v2860, %v2859
  %v2862 = vrot.slane %v2772, 4
  %v2863 = vsel %vm719, %v2862, %v2861
  %v2864 = vrot.slane %v2780, 3
  %v2865 = vsel %vm722, %v2864, %v2863
  %v2866 = vrot.slane %v2788, 2
  %v2867 = vsel %vm725, %v2866, %v2865
  %v2868 = vrot.slane %v2796, 1
  %v2869 = vsel %vm728, %v2868, %v2867
  %v2870 = vrot.slane %v2749, 7
  %v2871 = vsel %vm710, %v2870, %v2741
  %v2872 = vrot.slane %v2757, 6
  %v2873 = vsel %vm713, %v2872, %v2871
  %v2874 = vrot.slane %v2765, 5
  %v2875 = vsel %vm716, %v2874, %v2873
  %v2876 = vrot.slane %v2773, 4
  %v2877 = vsel %vm719, %v2876, %v2875
  %v2878 = vrot.slane %v2781, 3
  %v2879 = vsel %vm722, %v2878, %v2877
  %v2880 = vrot.slane %v2789, 2
  %v2881 = vsel %vm725, %v2880, %v2879
  %v2882 = vrot.slane %v2797, 1
  %v2883 = vsel %vm728, %v2882, %v2881
  %v2884 = vrot.slane %v2750, 7
  %v2885 = vsel %vm710, %v2884, %v2742
  %v2886 = vrot.slane %v2758, 6
  %v2887 = vsel %vm713, %v2886, %v2885
  %v2888 = vrot.slane %v2766, 5
  %v2889 = vsel %vm716, %v2888, %v2887
  %v2890 = vrot.slane %v2774, 4
  %v2891 = vsel %vm719, %v2890, %v2889
  %v2892 = vrot.slane %v2782, 3
  %v2893 = vsel %vm722, %v2892, %v2891
  %v2894 = vrot.slane %v2790, 2
  %v2895 = vsel %vm725, %v2894, %v2893
  %v2896 = vrot.slane %v2798, 1
  %v2897 = vsel %vm728, %v2896, %v2895
  %v2898 = vrot.slane %v2751, 7
  %v2899 = vsel %vm710, %v2898, %v2743
  %v2900 = vrot.slane %v2759, 6
  %v2901 = vsel %vm713, %v2900, %v2899
  %v2902 = vrot.slane %v2767, 5
  %v2903 = vsel %vm716, %v2902, %v2901
  %v2904 = vrot.slane %v2775, 4
  %v2905 = vsel %vm719, %v2904, %v2903
  %v2906 = vrot.slane %v2783, 3
  %v2907 = vsel %vm722, %v2906, %v2905
  %v2908 = vrot.slane %v2791, 2
  %v2909 = vsel %vm725, %v2908, %v2907
  %v2910 = vrot.slane %v2799, 1
  %v2911 = vsel %vm728, %v2910, %v2909
  %v2912 = vpack.c.b16 %v2813, %v2813
  %v2913 = vpack.c.b16 %v2827, %v2827
  %v2914 = vpack.c.b16 %v2841, %v2841
  %v2915 = vpack.c.b16 %v2855, %v2855
  %v2916 = vpack.c.b16 %v2869, %v2869
  %v2917 = vpack.c.b16 %v2883, %v2883
  %v2918 = vpack.c.b16 %v2897, %v2897
  %v2919 = vpack.c.b16 %v2911, %v2911
  %2928 = vmatprep.subr.bf16.mxu0 0
  %2929 = vmatpush1.bf16.msra.mxu0 %v1107
  %2930 = vmatprep.subr.bf16.mxu0 0
  %2931 = vmatpush1.bf16.msra.mxu0 %v1106
  %2932 = vmatprep.subr.bf16.mxu0 0
  %2933 = vmatpush1.bf16.msra.mxu0 %v1105
  %2934 = vmatprep.subr.bf16.mxu0 0
  %2935 = vmatpush1.bf16.msra.mxu0 %v1104
  %2936 = vmatprep.subr.bf16.mxu0 0
  %2937 = vmatpush1.bf16.msra.mxu0 %v1103
  %2938 = vmatprep.subr.bf16.mxu0 0
  %2939 = vmatpush1.bf16.msra.mxu0 %v1102
  %2940 = vmatprep.subr.bf16.mxu0 0
  %2941 = vmatpush1.bf16.msra.mxu0 %v1101
  %2942 = vmatprep.subr.bf16.mxu0 0
  %2943 = vmatpush1.bf16.msra.mxu0 %v1100
  %2944 = vmatprep.subr.bf16.mxu0 0
  %2945 = vmatpush2.bf16.msra.mxu0 %v1115
  %2946 = vmatprep.subr.bf16.mxu0 0
  %2947 = vmatpush2.bf16.msra.mxu0 %v1114
  %2948 = vmatprep.subr.bf16.mxu0 0
  %2949 = vmatpush2.bf16.msra.mxu0 %v1113
  %2950 = vmatprep.subr.bf16.mxu0 0
  %2951 = vmatpush2.bf16.msra.mxu0 %v1112
  %2952 = vmatprep.subr.bf16.mxu0 0
  %2953 = vmatpush2.bf16.msra.mxu0 %v1111
  %2954 = vmatprep.subr.bf16.mxu0 0
  %2955 = vmatpush2.bf16.msra.mxu0 %v1110
  %2956 = vmatprep.subr.bf16.mxu0 0
  %2957 = vmatpush2.bf16.msra.mxu0 %v1109
  %2958 = vmatprep.subr.bf16.mxu0 0
  %2959 = vmatpush2.bf16.msra.mxu0 %v1108
  %2960 = vmatprep.mubr.bf16.mxu0 %v2913
  %2961 = vmatmul.mubr.bf16.gmra.mxu0 %v2912
  %v2962 = vpop.f32.mrf.mxu0
  %v2963 = vadd.f32 %v579, %v2962
  %v2964 = vpop.f32.mrf.mxu0
  %v2965 = vpop.f32.mrf.mxu0
  %v2966 = vpop.f32.mrf.mxu0
  %2967 = vdwg.mxu0
  %2968 = vmatprep.subr.bf16.mxu0 0
  %2969 = vmatpush1.bf16.msra.mxu0 %v1123
  %2970 = vmatprep.subr.bf16.mxu0 0
  %2971 = vmatpush1.bf16.msra.mxu0 %v1122
  %2972 = vmatprep.subr.bf16.mxu0 0
  %2973 = vmatpush1.bf16.msra.mxu0 %v1121
  %2974 = vmatprep.subr.bf16.mxu0 0
  %2975 = vmatpush1.bf16.msra.mxu0 %v1120
  %2976 = vmatprep.subr.bf16.mxu0 0
  %2977 = vmatpush1.bf16.msra.mxu0 %v1119
  %2978 = vmatprep.subr.bf16.mxu0 0
  %2979 = vmatpush1.bf16.msra.mxu0 %v1118
  %2980 = vmatprep.subr.bf16.mxu0 0
  %2981 = vmatpush1.bf16.msra.mxu0 %v1117
  %2982 = vmatprep.subr.bf16.mxu0 0
  %2983 = vmatpush1.bf16.msra.mxu0 %v1116
  %2984 = vmatprep.subr.bf16.mxu0 0
  %2985 = vmatpush2.bf16.msra.mxu0 %v1131
  %2986 = vmatprep.subr.bf16.mxu0 0
  %2987 = vmatpush2.bf16.msra.mxu0 %v1130
  %2988 = vmatprep.subr.bf16.mxu0 0
  %2989 = vmatpush2.bf16.msra.mxu0 %v1129
  %2990 = vmatprep.subr.bf16.mxu0 0
  %2991 = vmatpush2.bf16.msra.mxu0 %v1128
  %2992 = vmatprep.subr.bf16.mxu0 0
  %2993 = vmatpush2.bf16.msra.mxu0 %v1127
  %2994 = vmatprep.subr.bf16.mxu0 0
  %2995 = vmatpush2.bf16.msra.mxu0 %v1126
  %2996 = vmatprep.subr.bf16.mxu0 0
  %2997 = vmatpush2.bf16.msra.mxu0 %v1125
  %2998 = vmatprep.subr.bf16.mxu0 0
  %2999 = vmatpush2.bf16.msra.mxu0 %v1124
  %3000 = vmatprep.mubr.bf16.mxu0 %v2915
  %3001 = vmatmul.mubr.bf16.gmra.mxu0 %v2914
  %v3002 = vpop.f32.mrf.mxu0
  %v3003 = vadd.f32 %v2963, %v3002
  %v3004 = vpop.f32.mrf.mxu0
  %v3005 = vpop.f32.mrf.mxu0
  %v3006 = vpop.f32.mrf.mxu0
  %3007 = vdwg.mxu0
  %3008 = vmatprep.subr.bf16.mxu0 0
  %3009 = vmatpush1.bf16.msra.mxu0 %v1139
  %3010 = vmatprep.subr.bf16.mxu0 0
  %3011 = vmatpush1.bf16.msra.mxu0 %v1138
  %3012 = vmatprep.subr.bf16.mxu0 0
  %3013 = vmatpush1.bf16.msra.mxu0 %v1137
  %3014 = vmatprep.subr.bf16.mxu0 0
  %3015 = vmatpush1.bf16.msra.mxu0 %v1136
  %3016 = vmatprep.subr.bf16.mxu0 0
  %3017 = vmatpush1.bf16.msra.mxu0 %v1135
  %3018 = vmatprep.subr.bf16.mxu0 0
  %3019 = vmatpush1.bf16.msra.mxu0 %v1134
  %3020 = vmatprep.subr.bf16.mxu0 0
  %3021 = vmatpush1.bf16.msra.mxu0 %v1133
  %3022 = vmatprep.subr.bf16.mxu0 0
  %3023 = vmatpush1.bf16.msra.mxu0 %v1132
  %3024 = vmatprep.subr.bf16.mxu0 0
  %3025 = vmatpush2.bf16.msra.mxu0 %v1147
  %3026 = vmatprep.subr.bf16.mxu0 0
  %3027 = vmatpush2.bf16.msra.mxu0 %v1146
  %3028 = vmatprep.subr.bf16.mxu0 0
  %3029 = vmatpush2.bf16.msra.mxu0 %v1145
  %3030 = vmatprep.subr.bf16.mxu0 0
  %3031 = vmatpush2.bf16.msra.mxu0 %v1144
  %3032 = vmatprep.subr.bf16.mxu0 0
  %3033 = vmatpush2.bf16.msra.mxu0 %v1143
  %3034 = vmatprep.subr.bf16.mxu0 0
  %3035 = vmatpush2.bf16.msra.mxu0 %v1142
  %3036 = vmatprep.subr.bf16.mxu0 0
  %3037 = vmatpush2.bf16.msra.mxu0 %v1141
  %3038 = vmatprep.subr.bf16.mxu0 0
  %3039 = vmatpush2.bf16.msra.mxu0 %v1140
  %3040 = vmatprep.mubr.bf16.mxu0 %v2917
  %3041 = vmatmul.mubr.bf16.gmra.mxu0 %v2916
  %v3042 = vpop.f32.mrf.mxu0
  %v3043 = vadd.f32 %v3003, %v3042
  %v3044 = vpop.f32.mrf.mxu0
  %v3045 = vpop.f32.mrf.mxu0
  %v3046 = vpop.f32.mrf.mxu0
  %3047 = vdwg.mxu0
  %3048 = vmatprep.subr.bf16.mxu0 0
  %3049 = vmatpush1.bf16.msra.mxu0 %v1155
  %3050 = vmatprep.subr.bf16.mxu0 0
  %3051 = vmatpush1.bf16.msra.mxu0 %v1154
  %3052 = vmatprep.subr.bf16.mxu0 0
  %3053 = vmatpush1.bf16.msra.mxu0 %v1153
  %3054 = vmatprep.subr.bf16.mxu0 0
  %3055 = vmatpush1.bf16.msra.mxu0 %v1152
  %3056 = vmatprep.subr.bf16.mxu0 0
  %3057 = vmatpush1.bf16.msra.mxu0 %v1151
  %3058 = vmatprep.subr.bf16.mxu0 0
  %3059 = vmatpush1.bf16.msra.mxu0 %v1150
  %3060 = vmatprep.subr.bf16.mxu0 0
  %3061 = vmatpush1.bf16.msra.mxu0 %v1149
  %3062 = vmatprep.subr.bf16.mxu0 0
  %3063 = vmatpush1.bf16.msra.mxu0 %v1148
  %3064 = vmatprep.subr.bf16.mxu0 0
  %3065 = vmatpush2.bf16.msra.mxu0 %v1163
  %3066 = vmatprep.subr.bf16.mxu0 0
  %3067 = vmatpush2.bf16.msra.mxu0 %v1162
  %3068 = vmatprep.subr.bf16.mxu0 0
  %3069 = vmatpush2.bf16.msra.mxu0 %v1161
  %3070 = vmatprep.subr.bf16.mxu0 0
  %3071 = vmatpush2.bf16.msra.mxu0 %v1160
  %3072 = vmatprep.subr.bf16.mxu0 0
  %3073 = vmatpush2.bf16.msra.mxu0 %v1159
  %3074 = vmatprep.subr.bf16.mxu0 0
  %3075 = vmatpush2.bf16.msra.mxu0 %v1158
  %3076 = vmatprep.subr.bf16.mxu0 0
  %3077 = vmatpush2.bf16.msra.mxu0 %v1157
  %3078 = vmatprep.subr.bf16.mxu0 0
  %3079 = vmatpush2.bf16.msra.mxu0 %v1156
  %3080 = vmatprep.mubr.bf16.mxu0 %v2919
  %3081 = vmatmul.mubr.bf16.gmra.mxu0 %v2918
  %v3082 = vpop.f32.mrf.mxu0
  %v3083 = vadd.f32 %v3043, %v3082
  %v3084 = vpop.f32.mrf.mxu0
  %v3085 = vpop.f32.mrf.mxu0
  %v3086 = vpop.f32.mrf.mxu0
  %3087 = vdwg.mxu0
  %v3088 = vmax.f32 %v3083, 0.0
  %s3089 = scalar_lea.vmem %s3, 2
  %v3090 = vld [vmem:[%s3089] sm:$0x1]
  %v3092 = vlaneseq
  %v3093 = vshrl.u32 %v3092, 7
  %v3094 = vsub.s32 0, %v3093
  %v3095 = vrot.slane %v3090, %v3094
  %v3097 = vmul.f32 %v3088, %v3095
  %v3098 = vadd.f32 %v2247, %v3097
  %s3099 = scalar_lea.vmem %s0, 3
  %v3100 = vld [vmem:[%s3099] ss:$8 sm:$0xf]
  %v3101 = vld [vmem:[%s3099] ss:$8 sm:$0xf0]
  %v3102 = vor.u32 %v3100, %v3101
  %s3103 = scalar_lea.vmem %s0, 67
  %v3104 = vld [vmem:[%s3103] ss:$8 sm:$0xf]
  %v3105 = vld [vmem:[%s3103] ss:$8 sm:$0xf0]
  %v3106 = vor.u32 %v3104, %v3105
  %s3107 = scalar_lea.vmem %s0, 131
  %v3108 = vld [vmem:[%s3107] ss:$8 sm:$0xf]
  %v3109 = vld [vmem:[%s3107] ss:$8 sm:$0xf0]
  %v3110 = vor.u32 %v3108, %v3109
  %s3111 = scalar_lea.vmem %s0, 195
  %v3112 = vld [vmem:[%s3111] ss:$8 sm:$0xf]
  %v3113 = vld [vmem:[%s3111] ss:$8 sm:$0xf0]
  %v3114 = vor.u32 %v3112, %v3113
  %s3115 = scalar_lea.vmem %s0, 259
  %v3116 = vld [vmem:[%s3115] ss:$8 sm:$0xf]
  %v3117 = vld [vmem:[%s3115] ss:$8 sm:$0xf0]
  %v3118 = vor.u32 %v3116, %v3117
  %s3119 = scalar_lea.vmem %s0, 323
  %v3120 = vld [vmem:[%s3119] ss:$8 sm:$0xf]
  %v3121 = vld [vmem:[%s3119] ss:$8 sm:$0xf0]
  %v3122 = vor.u32 %v3120, %v3121
  %s3123 = scalar_lea.vmem %s0, 387
  %v3124 = vld [vmem:[%s3123] ss:$8 sm:$0xf]
  %v3125 = vld [vmem:[%s3123] ss:$8 sm:$0xf0]
  %v3126 = vor.u32 %v3124, %v3125
  %s3127 = scalar_lea.vmem %s0, 451
  %v3128 = vld [vmem:[%s3127] ss:$8 sm:$0xf]
  %v3129 = vld [vmem:[%s3127] ss:$8 sm:$0xf0]
  %v3130 = vor.u32 %v3128, %v3129
  %v3139 = vlaneseq
  %v3140 = vshrl.u32 %v3139, 7
  %v3141 = vsub.s32 0, %v3140
  %v3142 = vrot.slane %v3102, %v3141
  %v3143 = vlaneseq
  %v3144 = vshrl.u32 %v3143, 7
  %v3145 = vsub.s32 1, %v3144
  %v3146 = vrot.slane %v3102, %v3145
  %v3147 = vlaneseq
  %v3148 = vshrl.u32 %v3147, 7
  %v3149 = vsub.s32 2, %v3148
  %v3150 = vrot.slane %v3102, %v3149
  %v3151 = vlaneseq
  %v3152 = vshrl.u32 %v3151, 7
  %v3153 = vsub.s32 3, %v3152
  %v3154 = vrot.slane %v3102, %v3153
  %v3155 = vlaneseq
  %v3156 = vshrl.u32 %v3155, 7
  %v3157 = vsub.s32 4, %v3156
  %v3158 = vrot.slane %v3102, %v3157
  %v3159 = vlaneseq
  %v3160 = vshrl.u32 %v3159, 7
  %v3161 = vsub.s32 5, %v3160
  %v3162 = vrot.slane %v3102, %v3161
  %v3163 = vlaneseq
  %v3164 = vshrl.u32 %v3163, 7
  %v3165 = vsub.s32 6, %v3164
  %v3166 = vrot.slane %v3102, %v3165
  %v3167 = vlaneseq
  %v3168 = vshrl.u32 %v3167, 7
  %v3169 = vsub.s32 7, %v3168
  %v3170 = vrot.slane %v3102, %v3169
  %v3171 = vlaneseq
  %v3172 = vshrl.u32 %v3171, 7
  %v3173 = vsub.s32 0, %v3172
  %v3174 = vrot.slane %v3106, %v3173
  %v3175 = vlaneseq
  %v3176 = vshrl.u32 %v3175, 7
  %v3177 = vsub.s32 1, %v3176
  %v3178 = vrot.slane %v3106, %v3177
  %v3179 = vlaneseq
  %v3180 = vshrl.u32 %v3179, 7
  %v3181 = vsub.s32 2, %v3180
  %v3182 = vrot.slane %v3106, %v3181
  %v3183 = vlaneseq
  %v3184 = vshrl.u32 %v3183, 7
  %v3185 = vsub.s32 3, %v3184
  %v3186 = vrot.slane %v3106, %v3185
  %v3187 = vlaneseq
  %v3188 = vshrl.u32 %v3187, 7
  %v3189 = vsub.s32 4, %v3188
  %v3190 = vrot.slane %v3106, %v3189
  %v3191 = vlaneseq
  %v3192 = vshrl.u32 %v3191, 7
  %v3193 = vsub.s32 5, %v3192
  %v3194 = vrot.slane %v3106, %v3193
  %v3195 = vlaneseq
  %v3196 = vshrl.u32 %v3195, 7
  %v3197 = vsub.s32 6, %v3196
  %v3198 = vrot.slane %v3106, %v3197
  %v3199 = vlaneseq
  %v3200 = vshrl.u32 %v3199, 7
  %v3201 = vsub.s32 7, %v3200
  %v3202 = vrot.slane %v3106, %v3201
  %v3203 = vlaneseq
  %v3204 = vshrl.u32 %v3203, 7
  %v3205 = vsub.s32 0, %v3204
  %v3206 = vrot.slane %v3110, %v3205
  %v3207 = vlaneseq
  %v3208 = vshrl.u32 %v3207, 7
  %v3209 = vsub.s32 1, %v3208
  %v3210 = vrot.slane %v3110, %v3209
  %v3211 = vlaneseq
  %v3212 = vshrl.u32 %v3211, 7
  %v3213 = vsub.s32 2, %v3212
  %v3214 = vrot.slane %v3110, %v3213
  %v3215 = vlaneseq
  %v3216 = vshrl.u32 %v3215, 7
  %v3217 = vsub.s32 3, %v3216
  %v3218 = vrot.slane %v3110, %v3217
  %v3219 = vlaneseq
  %v3220 = vshrl.u32 %v3219, 7
  %v3221 = vsub.s32 4, %v3220
  %v3222 = vrot.slane %v3110, %v3221
  %v3223 = vlaneseq
  %v3224 = vshrl.u32 %v3223, 7
  %v3225 = vsub.s32 5, %v3224
  %v3226 = vrot.slane %v3110, %v3225
  %v3227 = vlaneseq
  %v3228 = vshrl.u32 %v3227, 7
  %v3229 = vsub.s32 6, %v3228
  %v3230 = vrot.slane %v3110, %v3229
  %v3231 = vlaneseq
  %v3232 = vshrl.u32 %v3231, 7
  %v3233 = vsub.s32 7, %v3232
  %v3234 = vrot.slane %v3110, %v3233
  %v3235 = vlaneseq
  %v3236 = vshrl.u32 %v3235, 7
  %v3237 = vsub.s32 0, %v3236
  %v3238 = vrot.slane %v3114, %v3237
  %v3239 = vlaneseq
  %v3240 = vshrl.u32 %v3239, 7
  %v3241 = vsub.s32 1, %v3240
  %v3242 = vrot.slane %v3114, %v3241
  %v3243 = vlaneseq
  %v3244 = vshrl.u32 %v3243, 7
  %v3245 = vsub.s32 2, %v3244
  %v3246 = vrot.slane %v3114, %v3245
  %v3247 = vlaneseq
  %v3248 = vshrl.u32 %v3247, 7
  %v3249 = vsub.s32 3, %v3248
  %v3250 = vrot.slane %v3114, %v3249
  %v3251 = vlaneseq
  %v3252 = vshrl.u32 %v3251, 7
  %v3253 = vsub.s32 4, %v3252
  %v3254 = vrot.slane %v3114, %v3253
  %v3255 = vlaneseq
  %v3256 = vshrl.u32 %v3255, 7
  %v3257 = vsub.s32 5, %v3256
  %v3258 = vrot.slane %v3114, %v3257
  %v3259 = vlaneseq
  %v3260 = vshrl.u32 %v3259, 7
  %v3261 = vsub.s32 6, %v3260
  %v3262 = vrot.slane %v3114, %v3261
  %v3263 = vlaneseq
  %v3264 = vshrl.u32 %v3263, 7
  %v3265 = vsub.s32 7, %v3264
  %v3266 = vrot.slane %v3114, %v3265
  %v3267 = vlaneseq
  %v3268 = vshrl.u32 %v3267, 7
  %v3269 = vsub.s32 0, %v3268
  %v3270 = vrot.slane %v3118, %v3269
  %v3271 = vlaneseq
  %v3272 = vshrl.u32 %v3271, 7
  %v3273 = vsub.s32 1, %v3272
  %v3274 = vrot.slane %v3118, %v3273
  %v3275 = vlaneseq
  %v3276 = vshrl.u32 %v3275, 7
  %v3277 = vsub.s32 2, %v3276
  %v3278 = vrot.slane %v3118, %v3277
  %v3279 = vlaneseq
  %v3280 = vshrl.u32 %v3279, 7
  %v3281 = vsub.s32 3, %v3280
  %v3282 = vrot.slane %v3118, %v3281
  %v3283 = vlaneseq
  %v3284 = vshrl.u32 %v3283, 7
  %v3285 = vsub.s32 4, %v3284
  %v3286 = vrot.slane %v3118, %v3285
  %v3287 = vlaneseq
  %v3288 = vshrl.u32 %v3287, 7
  %v3289 = vsub.s32 5, %v3288
  %v3290 = vrot.slane %v3118, %v3289
  %v3291 = vlaneseq
  %v3292 = vshrl.u32 %v3291, 7
  %v3293 = vsub.s32 6, %v3292
  %v3294 = vrot.slane %v3118, %v3293
  %v3295 = vlaneseq
  %v3296 = vshrl.u32 %v3295, 7
  %v3297 = vsub.s32 7, %v3296
  %v3298 = vrot.slane %v3118, %v3297
  %v3299 = vlaneseq
  %v3300 = vshrl.u32 %v3299, 7
  %v3301 = vsub.s32 0, %v3300
  %v3302 = vrot.slane %v3122, %v3301
  %v3303 = vlaneseq
  %v3304 = vshrl.u32 %v3303, 7
  %v3305 = vsub.s32 1, %v3304
  %v3306 = vrot.slane %v3122, %v3305
  %v3307 = vlaneseq
  %v3308 = vshrl.u32 %v3307, 7
  %v3309 = vsub.s32 2, %v3308
  %v3310 = vrot.slane %v3122, %v3309
  %v3311 = vlaneseq
  %v3312 = vshrl.u32 %v3311, 7
  %v3313 = vsub.s32 3, %v3312
  %v3314 = vrot.slane %v3122, %v3313
  %v3315 = vlaneseq
  %v3316 = vshrl.u32 %v3315, 7
  %v3317 = vsub.s32 4, %v3316
  %v3318 = vrot.slane %v3122, %v3317
  %v3319 = vlaneseq
  %v3320 = vshrl.u32 %v3319, 7
  %v3321 = vsub.s32 5, %v3320
  %v3322 = vrot.slane %v3122, %v3321
  %v3323 = vlaneseq
  %v3324 = vshrl.u32 %v3323, 7
  %v3325 = vsub.s32 6, %v3324
  %v3326 = vrot.slane %v3122, %v3325
  %v3327 = vlaneseq
  %v3328 = vshrl.u32 %v3327, 7
  %v3329 = vsub.s32 7, %v3328
  %v3330 = vrot.slane %v3122, %v3329
  %v3331 = vlaneseq
  %v3332 = vshrl.u32 %v3331, 7
  %v3333 = vsub.s32 0, %v3332
  %v3334 = vrot.slane %v3126, %v3333
  %v3335 = vlaneseq
  %v3336 = vshrl.u32 %v3335, 7
  %v3337 = vsub.s32 1, %v3336
  %v3338 = vrot.slane %v3126, %v3337
  %v3339 = vlaneseq
  %v3340 = vshrl.u32 %v3339, 7
  %v3341 = vsub.s32 2, %v3340
  %v3342 = vrot.slane %v3126, %v3341
  %v3343 = vlaneseq
  %v3344 = vshrl.u32 %v3343, 7
  %v3345 = vsub.s32 3, %v3344
  %v3346 = vrot.slane %v3126, %v3345
  %v3347 = vlaneseq
  %v3348 = vshrl.u32 %v3347, 7
  %v3349 = vsub.s32 4, %v3348
  %v3350 = vrot.slane %v3126, %v3349
  %v3351 = vlaneseq
  %v3352 = vshrl.u32 %v3351, 7
  %v3353 = vsub.s32 5, %v3352
  %v3354 = vrot.slane %v3126, %v3353
  %v3355 = vlaneseq
  %v3356 = vshrl.u32 %v3355, 7
  %v3357 = vsub.s32 6, %v3356
  %v3358 = vrot.slane %v3126, %v3357
  %v3359 = vlaneseq
  %v3360 = vshrl.u32 %v3359, 7
  %v3361 = vsub.s32 7, %v3360
  %v3362 = vrot.slane %v3126, %v3361
  %v3363 = vlaneseq
  %v3364 = vshrl.u32 %v3363, 7
  %v3365 = vsub.s32 0, %v3364
  %v3366 = vrot.slane %v3130, %v3365
  %v3367 = vlaneseq
  %v3368 = vshrl.u32 %v3367, 7
  %v3369 = vsub.s32 1, %v3368
  %v3370 = vrot.slane %v3130, %v3369
  %v3371 = vlaneseq
  %v3372 = vshrl.u32 %v3371, 7
  %v3373 = vsub.s32 2, %v3372
  %v3374 = vrot.slane %v3130, %v3373
  %v3375 = vlaneseq
  %v3376 = vshrl.u32 %v3375, 7
  %v3377 = vsub.s32 3, %v3376
  %v3378 = vrot.slane %v3130, %v3377
  %v3379 = vlaneseq
  %v3380 = vshrl.u32 %v3379, 7
  %v3381 = vsub.s32 4, %v3380
  %v3382 = vrot.slane %v3130, %v3381
  %v3383 = vlaneseq
  %v3384 = vshrl.u32 %v3383, 7
  %v3385 = vsub.s32 5, %v3384
  %v3386 = vrot.slane %v3130, %v3385
  %v3387 = vlaneseq
  %v3388 = vshrl.u32 %v3387, 7
  %v3389 = vsub.s32 6, %v3388
  %v3390 = vrot.slane %v3130, %v3389
  %v3391 = vlaneseq
  %v3392 = vshrl.u32 %v3391, 7
  %v3393 = vsub.s32 7, %v3392
  %v3394 = vrot.slane %v3130, %v3393
  %v3459 = vpack.c.bf16 %v3142, %v3142
  %v3460 = vpack.c.bf16 %v3146, %v3146
  %v3461 = vpack.c.bf16 %v3150, %v3150
  %v3462 = vpack.c.bf16 %v3154, %v3154
  %v3463 = vpack.c.bf16 %v3158, %v3158
  %v3464 = vpack.c.bf16 %v3162, %v3162
  %v3465 = vpack.c.bf16 %v3166, %v3166
  %v3466 = vpack.c.bf16 %v3170, %v3170
  %v3467 = vpack.c.bf16 %v3174, %v3174
  %v3468 = vpack.c.bf16 %v3178, %v3178
  %v3469 = vpack.c.bf16 %v3182, %v3182
  %v3470 = vpack.c.bf16 %v3186, %v3186
  %v3471 = vpack.c.bf16 %v3190, %v3190
  %v3472 = vpack.c.bf16 %v3194, %v3194
  %v3473 = vpack.c.bf16 %v3198, %v3198
  %v3474 = vpack.c.bf16 %v3202, %v3202
  %v3475 = vpack.c.bf16 %v3206, %v3206
  %v3476 = vpack.c.bf16 %v3210, %v3210
  %v3477 = vpack.c.bf16 %v3214, %v3214
  %v3478 = vpack.c.bf16 %v3218, %v3218
  %v3479 = vpack.c.bf16 %v3222, %v3222
  %v3480 = vpack.c.bf16 %v3226, %v3226
  %v3481 = vpack.c.bf16 %v3230, %v3230
  %v3482 = vpack.c.bf16 %v3234, %v3234
  %v3483 = vpack.c.bf16 %v3238, %v3238
  %v3484 = vpack.c.bf16 %v3242, %v3242
  %v3485 = vpack.c.bf16 %v3246, %v3246
  %v3486 = vpack.c.bf16 %v3250, %v3250
  %v3487 = vpack.c.bf16 %v3254, %v3254
  %v3488 = vpack.c.bf16 %v3258, %v3258
  %v3489 = vpack.c.bf16 %v3262, %v3262
  %v3490 = vpack.c.bf16 %v3266, %v3266
  %v3491 = vpack.c.bf16 %v3270, %v3270
  %v3492 = vpack.c.bf16 %v3274, %v3274
  %v3493 = vpack.c.bf16 %v3278, %v3278
  %v3494 = vpack.c.bf16 %v3282, %v3282
  %v3495 = vpack.c.bf16 %v3286, %v3286
  %v3496 = vpack.c.bf16 %v3290, %v3290
  %v3497 = vpack.c.bf16 %v3294, %v3294
  %v3498 = vpack.c.bf16 %v3298, %v3298
  %v3499 = vpack.c.bf16 %v3302, %v3302
  %v3500 = vpack.c.bf16 %v3306, %v3306
  %v3501 = vpack.c.bf16 %v3310, %v3310
  %v3502 = vpack.c.bf16 %v3314, %v3314
  %v3503 = vpack.c.bf16 %v3318, %v3318
  %v3504 = vpack.c.bf16 %v3322, %v3322
  %v3505 = vpack.c.bf16 %v3326, %v3326
  %v3506 = vpack.c.bf16 %v3330, %v3330
  %v3507 = vpack.c.bf16 %v3334, %v3334
  %v3508 = vpack.c.bf16 %v3338, %v3338
  %v3509 = vpack.c.bf16 %v3342, %v3342
  %v3510 = vpack.c.bf16 %v3346, %v3346
  %v3511 = vpack.c.bf16 %v3350, %v3350
  %v3512 = vpack.c.bf16 %v3354, %v3354
  %v3513 = vpack.c.bf16 %v3358, %v3358
  %v3514 = vpack.c.bf16 %v3362, %v3362
  %v3515 = vpack.c.bf16 %v3366, %v3366
  %v3516 = vpack.c.bf16 %v3370, %v3370
  %v3517 = vpack.c.bf16 %v3374, %v3374
  %v3518 = vpack.c.bf16 %v3378, %v3378
  %v3519 = vpack.c.bf16 %v3382, %v3382
  %v3520 = vpack.c.bf16 %v3386, %v3386
  %v3521 = vpack.c.bf16 %v3390, %v3390
  %v3522 = vpack.c.bf16 %v3394, %v3394
  %v3587 = vunpack.c.l.b16 %v3459
  %v3588 = vunpack.c.l.b16 %v3460
  %v3589 = vunpack.c.l.b16 %v3461
  %v3590 = vunpack.c.l.b16 %v3462
  %v3591 = vunpack.c.l.b16 %v3463
  %v3592 = vunpack.c.l.b16 %v3464
  %v3593 = vunpack.c.l.b16 %v3465
  %v3594 = vunpack.c.l.b16 %v3466
  %v3595 = vunpack.c.l.b16 %v3467
  %v3596 = vunpack.c.l.b16 %v3468
  %v3597 = vunpack.c.l.b16 %v3469
  %v3598 = vunpack.c.l.b16 %v3470
  %v3599 = vunpack.c.l.b16 %v3471
  %v3600 = vunpack.c.l.b16 %v3472
  %v3601 = vunpack.c.l.b16 %v3473
  %v3602 = vunpack.c.l.b16 %v3474
  %v3603 = vunpack.c.l.b16 %v3475
  %v3604 = vunpack.c.l.b16 %v3476
  %v3605 = vunpack.c.l.b16 %v3477
  %v3606 = vunpack.c.l.b16 %v3478
  %v3607 = vunpack.c.l.b16 %v3479
  %v3608 = vunpack.c.l.b16 %v3480
  %v3609 = vunpack.c.l.b16 %v3481
  %v3610 = vunpack.c.l.b16 %v3482
  %v3611 = vunpack.c.l.b16 %v3483
  %v3612 = vunpack.c.l.b16 %v3484
  %v3613 = vunpack.c.l.b16 %v3485
  %v3614 = vunpack.c.l.b16 %v3486
  %v3615 = vunpack.c.l.b16 %v3487
  %v3616 = vunpack.c.l.b16 %v3488
  %v3617 = vunpack.c.l.b16 %v3489
  %v3618 = vunpack.c.l.b16 %v3490
  %v3619 = vunpack.c.l.b16 %v3491
  %v3620 = vunpack.c.l.b16 %v3492
  %v3621 = vunpack.c.l.b16 %v3493
  %v3622 = vunpack.c.l.b16 %v3494
  %v3623 = vunpack.c.l.b16 %v3495
  %v3624 = vunpack.c.l.b16 %v3496
  %v3625 = vunpack.c.l.b16 %v3497
  %v3626 = vunpack.c.l.b16 %v3498
  %v3627 = vunpack.c.l.b16 %v3499
  %v3628 = vunpack.c.l.b16 %v3500
  %v3629 = vunpack.c.l.b16 %v3501
  %v3630 = vunpack.c.l.b16 %v3502
  %v3631 = vunpack.c.l.b16 %v3503
  %v3632 = vunpack.c.l.b16 %v3504
  %v3633 = vunpack.c.l.b16 %v3505
  %v3634 = vunpack.c.l.b16 %v3506
  %v3635 = vunpack.c.l.b16 %v3507
  %v3636 = vunpack.c.l.b16 %v3508
  %v3637 = vunpack.c.l.b16 %v3509
  %v3638 = vunpack.c.l.b16 %v3510
  %v3639 = vunpack.c.l.b16 %v3511
  %v3640 = vunpack.c.l.b16 %v3512
  %v3641 = vunpack.c.l.b16 %v3513
  %v3642 = vunpack.c.l.b16 %v3514
  %v3643 = vunpack.c.l.b16 %v3515
  %v3644 = vunpack.c.l.b16 %v3516
  %v3645 = vunpack.c.l.b16 %v3517
  %v3646 = vunpack.c.l.b16 %v3518
  %v3647 = vunpack.c.l.b16 %v3519
  %v3648 = vunpack.c.l.b16 %v3520
  %v3649 = vunpack.c.l.b16 %v3521
  %v3650 = vunpack.c.l.b16 %v3522
  %v3651 = vrot.slane %v3595, 7
  %v3652 = vsel %vm710, %v3651, %v3587
  %v3653 = vrot.slane %v3603, 6
  %v3654 = vsel %vm713, %v3653, %v3652
  %v3655 = vrot.slane %v3611, 5
  %v3656 = vsel %vm716, %v3655, %v3654
  %v3657 = vrot.slane %v3619, 4
  %v3658 = vsel %vm719, %v3657, %v3656
  %v3659 = vrot.slane %v3627, 3
  %v3660 = vsel %vm722, %v3659, %v3658
  %v3661 = vrot.slane %v3635, 2
  %v3662 = vsel %vm725, %v3661, %v3660
  %v3663 = vrot.slane %v3643, 1
  %v3664 = vsel %vm728, %v3663, %v3662
  %v3665 = vrot.slane %v3596, 7
  %v3666 = vsel %vm710, %v3665, %v3588
  %v3667 = vrot.slane %v3604, 6
  %v3668 = vsel %vm713, %v3667, %v3666
  %v3669 = vrot.slane %v3612, 5
  %v3670 = vsel %vm716, %v3669, %v3668
  %v3671 = vrot.slane %v3620, 4
  %v3672 = vsel %vm719, %v3671, %v3670
  %v3673 = vrot.slane %v3628, 3
  %v3674 = vsel %vm722, %v3673, %v3672
  %v3675 = vrot.slane %v3636, 2
  %v3676 = vsel %vm725, %v3675, %v3674
  %v3677 = vrot.slane %v3644, 1
  %v3678 = vsel %vm728, %v3677, %v3676
  %v3679 = vrot.slane %v3597, 7
  %v3680 = vsel %vm710, %v3679, %v3589
  %v3681 = vrot.slane %v3605, 6
  %v3682 = vsel %vm713, %v3681, %v3680
  %v3683 = vrot.slane %v3613, 5
  %v3684 = vsel %vm716, %v3683, %v3682
  %v3685 = vrot.slane %v3621, 4
  %v3686 = vsel %vm719, %v3685, %v3684
  %v3687 = vrot.slane %v3629, 3
  %v3688 = vsel %vm722, %v3687, %v3686
  %v3689 = vrot.slane %v3637, 2
  %v3690 = vsel %vm725, %v3689, %v3688
  %v3691 = vrot.slane %v3645, 1
  %v3692 = vsel %vm728, %v3691, %v3690
  %v3693 = vrot.slane %v3598, 7
  %v3694 = vsel %vm710, %v3693, %v3590
  %v3695 = vrot.slane %v3606, 6
  %v3696 = vsel %vm713, %v3695, %v3694
  %v3697 = vrot.slane %v3614, 5
  %v3698 = vsel %vm716, %v3697, %v3696
  %v3699 = vrot.slane %v3622, 4
  %v3700 = vsel %vm719, %v3699, %v3698
  %v3701 = vrot.slane %v3630, 3
  %v3702 = vsel %vm722, %v3701, %v3700
  %v3703 = vrot.slane %v3638, 2
  %v3704 = vsel %vm725, %v3703, %v3702
  %v3705 = vrot.slane %v3646, 1
  %v3706 = vsel %vm728, %v3705, %v3704
  %v3707 = vrot.slane %v3599, 7
  %v3708 = vsel %vm710, %v3707, %v3591
  %v3709 = vrot.slane %v3607, 6
  %v3710 = vsel %vm713, %v3709, %v3708
  %v3711 = vrot.slane %v3615, 5
  %v3712 = vsel %vm716, %v3711, %v3710
  %v3713 = vrot.slane %v3623, 4
  %v3714 = vsel %vm719, %v3713, %v3712
  %v3715 = vrot.slane %v3631, 3
  %v3716 = vsel %vm722, %v3715, %v3714
  %v3717 = vrot.slane %v3639, 2
  %v3718 = vsel %vm725, %v3717, %v3716
  %v3719 = vrot.slane %v3647, 1
  %v3720 = vsel %vm728, %v3719, %v3718
  %v3721 = vrot.slane %v3600, 7
  %v3722 = vsel %vm710, %v3721, %v3592
  %v3723 = vrot.slane %v3608, 6
  %v3724 = vsel %vm713, %v3723, %v3722
  %v3725 = vrot.slane %v3616, 5
  %v3726 = vsel %vm716, %v3725, %v3724
  %v3727 = vrot.slane %v3624, 4
  %v3728 = vsel %vm719, %v3727, %v3726
  %v3729 = vrot.slane %v3632, 3
  %v3730 = vsel %vm722, %v3729, %v3728
  %v3731 = vrot.slane %v3640, 2
  %v3732 = vsel %vm725, %v3731, %v3730
  %v3733 = vrot.slane %v3648, 1
  %v3734 = vsel %vm728, %v3733, %v3732
  %v3735 = vrot.slane %v3601, 7
  %v3736 = vsel %vm710, %v3735, %v3593
  %v3737 = vrot.slane %v3609, 6
  %v3738 = vsel %vm713, %v3737, %v3736
  %v3739 = vrot.slane %v3617, 5
  %v3740 = vsel %vm716, %v3739, %v3738
  %v3741 = vrot.slane %v3625, 4
  %v3742 = vsel %vm719, %v3741, %v3740
  %v3743 = vrot.slane %v3633, 3
  %v3744 = vsel %vm722, %v3743, %v3742
  %v3745 = vrot.slane %v3641, 2
  %v3746 = vsel %vm725, %v3745, %v3744
  %v3747 = vrot.slane %v3649, 1
  %v3748 = vsel %vm728, %v3747, %v3746
  %v3749 = vrot.slane %v3602, 7
  %v3750 = vsel %vm710, %v3749, %v3594
  %v3751 = vrot.slane %v3610, 6
  %v3752 = vsel %vm713, %v3751, %v3750
  %v3753 = vrot.slane %v3618, 5
  %v3754 = vsel %vm716, %v3753, %v3752
  %v3755 = vrot.slane %v3626, 4
  %v3756 = vsel %vm719, %v3755, %v3754
  %v3757 = vrot.slane %v3634, 3
  %v3758 = vsel %vm722, %v3757, %v3756
  %v3759 = vrot.slane %v3642, 2
  %v3760 = vsel %vm725, %v3759, %v3758
  %v3761 = vrot.slane %v3650, 1
  %v3762 = vsel %vm728, %v3761, %v3760
  %v3763 = vpack.c.b16 %v3664, %v3664
  %v3764 = vpack.c.b16 %v3678, %v3678
  %v3765 = vpack.c.b16 %v3692, %v3692
  %v3766 = vpack.c.b16 %v3706, %v3706
  %v3767 = vpack.c.b16 %v3720, %v3720
  %v3768 = vpack.c.b16 %v3734, %v3734
  %v3769 = vpack.c.b16 %v3748, %v3748
  %v3770 = vpack.c.b16 %v3762, %v3762
  %3779 = vmatprep.subr.bf16.mxu0 0
  %3780 = vmatpush1.bf16.msra.mxu0 %v1107
  %3781 = vmatprep.subr.bf16.mxu0 0
  %3782 = vmatpush1.bf16.msra.mxu0 %v1106
  %3783 = vmatprep.subr.bf16.mxu0 0
  %3784 = vmatpush1.bf16.msra.mxu0 %v1105
  %3785 = vmatprep.subr.bf16.mxu0 0
  %3786 = vmatpush1.bf16.msra.mxu0 %v1104
  %3787 = vmatprep.subr.bf16.mxu0 0
  %3788 = vmatpush1.bf16.msra.mxu0 %v1103
  %3789 = vmatprep.subr.bf16.mxu0 0
  %3790 = vmatpush1.bf16.msra.mxu0 %v1102
  %3791 = vmatprep.subr.bf16.mxu0 0
  %3792 = vmatpush1.bf16.msra.mxu0 %v1101
  %3793 = vmatprep.subr.bf16.mxu0 0
  %3794 = vmatpush1.bf16.msra.mxu0 %v1100
  %3795 = vmatprep.subr.bf16.mxu0 0
  %3796 = vmatpush2.bf16.msra.mxu0 %v1115
  %3797 = vmatprep.subr.bf16.mxu0 0
  %3798 = vmatpush2.bf16.msra.mxu0 %v1114
  %3799 = vmatprep.subr.bf16.mxu0 0
  %3800 = vmatpush2.bf16.msra.mxu0 %v1113
  %3801 = vmatprep.subr.bf16.mxu0 0
  %3802 = vmatpush2.bf16.msra.mxu0 %v1112
  %3803 = vmatprep.subr.bf16.mxu0 0
  %3804 = vmatpush2.bf16.msra.mxu0 %v1111
  %3805 = vmatprep.subr.bf16.mxu0 0
  %3806 = vmatpush2.bf16.msra.mxu0 %v1110
  %3807 = vmatprep.subr.bf16.mxu0 0
  %3808 = vmatpush2.bf16.msra.mxu0 %v1109
  %3809 = vmatprep.subr.bf16.mxu0 0
  %3810 = vmatpush2.bf16.msra.mxu0 %v1108
  %3811 = vmatprep.mubr.bf16.mxu0 %v3764
  %3812 = vmatmul.mubr.bf16.gmra.mxu0 %v3763
  %v3813 = vpop.f32.mrf.mxu0
  %v3814 = vadd.f32 %v579, %v3813
  %v3815 = vpop.f32.mrf.mxu0
  %v3816 = vpop.f32.mrf.mxu0
  %v3817 = vpop.f32.mrf.mxu0
  %3818 = vdwg.mxu0
  %3819 = vmatprep.subr.bf16.mxu0 0
  %3820 = vmatpush1.bf16.msra.mxu0 %v1123
  %3821 = vmatprep.subr.bf16.mxu0 0
  %3822 = vmatpush1.bf16.msra.mxu0 %v1122
  %3823 = vmatprep.subr.bf16.mxu0 0
  %3824 = vmatpush1.bf16.msra.mxu0 %v1121
  %3825 = vmatprep.subr.bf16.mxu0 0
  %3826 = vmatpush1.bf16.msra.mxu0 %v1120
  %3827 = vmatprep.subr.bf16.mxu0 0
  %3828 = vmatpush1.bf16.msra.mxu0 %v1119
  %3829 = vmatprep.subr.bf16.mxu0 0
  %3830 = vmatpush1.bf16.msra.mxu0 %v1118
  %3831 = vmatprep.subr.bf16.mxu0 0
  %3832 = vmatpush1.bf16.msra.mxu0 %v1117
  %3833 = vmatprep.subr.bf16.mxu0 0
  %3834 = vmatpush1.bf16.msra.mxu0 %v1116
  %3835 = vmatprep.subr.bf16.mxu0 0
  %3836 = vmatpush2.bf16.msra.mxu0 %v1131
  %3837 = vmatprep.subr.bf16.mxu0 0
  %3838 = vmatpush2.bf16.msra.mxu0 %v1130
  %3839 = vmatprep.subr.bf16.mxu0 0
  %3840 = vmatpush2.bf16.msra.mxu0 %v1129
  %3841 = vmatprep.subr.bf16.mxu0 0
  %3842 = vmatpush2.bf16.msra.mxu0 %v1128
  %3843 = vmatprep.subr.bf16.mxu0 0
  %3844 = vmatpush2.bf16.msra.mxu0 %v1127
  %3845 = vmatprep.subr.bf16.mxu0 0
  %3846 = vmatpush2.bf16.msra.mxu0 %v1126
  %3847 = vmatprep.subr.bf16.mxu0 0
  %3848 = vmatpush2.bf16.msra.mxu0 %v1125
  %3849 = vmatprep.subr.bf16.mxu0 0
  %3850 = vmatpush2.bf16.msra.mxu0 %v1124
  %3851 = vmatprep.mubr.bf16.mxu0 %v3766
  %3852 = vmatmul.mubr.bf16.gmra.mxu0 %v3765
  %v3853 = vpop.f32.mrf.mxu0
  %v3854 = vadd.f32 %v3814, %v3853
  %v3855 = vpop.f32.mrf.mxu0
  %v3856 = vpop.f32.mrf.mxu0
  %v3857 = vpop.f32.mrf.mxu0
  %3858 = vdwg.mxu0
  %3859 = vmatprep.subr.bf16.mxu0 0
  %3860 = vmatpush1.bf16.msra.mxu0 %v1139
  %3861 = vmatprep.subr.bf16.mxu0 0
  %3862 = vmatpush1.bf16.msra.mxu0 %v1138
  %3863 = vmatprep.subr.bf16.mxu0 0
  %3864 = vmatpush1.bf16.msra.mxu0 %v1137
  %3865 = vmatprep.subr.bf16.mxu0 0
  %3866 = vmatpush1.bf16.msra.mxu0 %v1136
  %3867 = vmatprep.subr.bf16.mxu0 0
  %3868 = vmatpush1.bf16.msra.mxu0 %v1135
  %3869 = vmatprep.subr.bf16.mxu0 0
  %3870 = vmatpush1.bf16.msra.mxu0 %v1134
  %3871 = vmatprep.subr.bf16.mxu0 0
  %3872 = vmatpush1.bf16.msra.mxu0 %v1133
  %3873 = vmatprep.subr.bf16.mxu0 0
  %3874 = vmatpush1.bf16.msra.mxu0 %v1132
  %3875 = vmatprep.subr.bf16.mxu0 0
  %3876 = vmatpush2.bf16.msra.mxu0 %v1147
  %3877 = vmatprep.subr.bf16.mxu0 0
  %3878 = vmatpush2.bf16.msra.mxu0 %v1146
  %3879 = vmatprep.subr.bf16.mxu0 0
  %3880 = vmatpush2.bf16.msra.mxu0 %v1145
  %3881 = vmatprep.subr.bf16.mxu0 0
  %3882 = vmatpush2.bf16.msra.mxu0 %v1144
  %3883 = vmatprep.subr.bf16.mxu0 0
  %3884 = vmatpush2.bf16.msra.mxu0 %v1143
  %3885 = vmatprep.subr.bf16.mxu0 0
  %3886 = vmatpush2.bf16.msra.mxu0 %v1142
  %3887 = vmatprep.subr.bf16.mxu0 0
  %3888 = vmatpush2.bf16.msra.mxu0 %v1141
  %3889 = vmatprep.subr.bf16.mxu0 0
  %3890 = vmatpush2.bf16.msra.mxu0 %v1140
  %3891 = vmatprep.mubr.bf16.mxu0 %v3768
  %3892 = vmatmul.mubr.bf16.gmra.mxu0 %v3767
  %v3893 = vpop.f32.mrf.mxu0
  %v3894 = vadd.f32 %v3854, %v3893
  %v3895 = vpop.f32.mrf.mxu0
  %v3896 = vpop.f32.mrf.mxu0
  %v3897 = vpop.f32.mrf.mxu0
  %3898 = vdwg.mxu0
  %3899 = vmatprep.subr.bf16.mxu0 0
  %3900 = vmatpush1.bf16.msra.mxu0 %v1155
  %3901 = vmatprep.subr.bf16.mxu0 0
  %3902 = vmatpush1.bf16.msra.mxu0 %v1154
  %3903 = vmatprep.subr.bf16.mxu0 0
  %3904 = vmatpush1.bf16.msra.mxu0 %v1153
  %3905 = vmatprep.subr.bf16.mxu0 0
  %3906 = vmatpush1.bf16.msra.mxu0 %v1152
  %3907 = vmatprep.subr.bf16.mxu0 0
  %3908 = vmatpush1.bf16.msra.mxu0 %v1151
  %3909 = vmatprep.subr.bf16.mxu0 0
  %3910 = vmatpush1.bf16.msra.mxu0 %v1150
  %3911 = vmatprep.subr.bf16.mxu0 0
  %3912 = vmatpush1.bf16.msra.mxu0 %v1149
  %3913 = vmatprep.subr.bf16.mxu0 0
  %3914 = vmatpush1.bf16.msra.mxu0 %v1148
  %3915 = vmatprep.subr.bf16.mxu0 0
  %3916 = vmatpush2.bf16.msra.mxu0 %v1163
  %3917 = vmatprep.subr.bf16.mxu0 0
  %3918 = vmatpush2.bf16.msra.mxu0 %v1162
  %3919 = vmatprep.subr.bf16.mxu0 0
  %3920 = vmatpush2.bf16.msra.mxu0 %v1161
  %3921 = vmatprep.subr.bf16.mxu0 0
  %3922 = vmatpush2.bf16.msra.mxu0 %v1160
  %3923 = vmatprep.subr.bf16.mxu0 0
  %3924 = vmatpush2.bf16.msra.mxu0 %v1159
  %3925 = vmatprep.subr.bf16.mxu0 0
  %3926 = vmatpush2.bf16.msra.mxu0 %v1158
  %3927 = vmatprep.subr.bf16.mxu0 0
  %3928 = vmatpush2.bf16.msra.mxu0 %v1157
  %3929 = vmatprep.subr.bf16.mxu0 0
  %3930 = vmatpush2.bf16.msra.mxu0 %v1156
  %3931 = vmatprep.mubr.bf16.mxu0 %v3770
  %3932 = vmatmul.mubr.bf16.gmra.mxu0 %v3769
  %v3933 = vpop.f32.mrf.mxu0
  %v3934 = vadd.f32 %v3894, %v3933
  %v3935 = vpop.f32.mrf.mxu0
  %v3936 = vpop.f32.mrf.mxu0
  %v3937 = vpop.f32.mrf.mxu0
  %3938 = vdwg.mxu0
  %v3939 = vmax.f32 %v3934, 0.0
  %s3940 = scalar_lea.vmem %s3, 3
  %v3941 = vld [vmem:[%s3940] sm:$0x1]
  %v3943 = vlaneseq
  %v3944 = vshrl.u32 %v3943, 7
  %v3945 = vsub.s32 0, %v3944
  %v3946 = vrot.slane %v3941, %v3945
  %v3948 = vmul.f32 %v3939, %v3946
  %v3949 = vadd.f32 %v3098, %v3948
  %s3950 = scalar_lea.vmem %s0, 4
  %v3951 = vld [vmem:[%s3950] ss:$8 sm:$0xf]
  %v3952 = vld [vmem:[%s3950] ss:$8 sm:$0xf0]
  %v3953 = vor.u32 %v3951, %v3952
  %s3954 = scalar_lea.vmem %s0, 68
  %v3955 = vld [vmem:[%s3954] ss:$8 sm:$0xf]
  %v3956 = vld [vmem:[%s3954] ss:$8 sm:$0xf0]
  %v3957 = vor.u32 %v3955, %v3956
  %s3958 = scalar_lea.vmem %s0, 132
  %v3959 = vld [vmem:[%s3958] ss:$8 sm:$0xf]
  %v3960 = vld [vmem:[%s3958] ss:$8 sm:$0xf0]
  %v3961 = vor.u32 %v3959, %v3960
  %s3962 = scalar_lea.vmem %s0, 196
  %v3963 = vld [vmem:[%s3962] ss:$8 sm:$0xf]
  %v3964 = vld [vmem:[%s3962] ss:$8 sm:$0xf0]
  %v3965 = vor.u32 %v3963, %v3964
  %s3966 = scalar_lea.vmem %s0, 260
  %v3967 = vld [vmem:[%s3966] ss:$8 sm:$0xf]
  %v3968 = vld [vmem:[%s3966] ss:$8 sm:$0xf0]
  %v3969 = vor.u32 %v3967, %v3968
  %s3970 = scalar_lea.vmem %s0, 324
  %v3971 = vld [vmem:[%s3970] ss:$8 sm:$0xf]
  %v3972 = vld [vmem:[%s3970] ss:$8 sm:$0xf0]
  %v3973 = vor.u32 %v3971, %v3972
  %s3974 = scalar_lea.vmem %s0, 388
  %v3975 = vld [vmem:[%s3974] ss:$8 sm:$0xf]
  %v3976 = vld [vmem:[%s3974] ss:$8 sm:$0xf0]
  %v3977 = vor.u32 %v3975, %v3976
  %s3978 = scalar_lea.vmem %s0, 452
  %v3979 = vld [vmem:[%s3978] ss:$8 sm:$0xf]
  %v3980 = vld [vmem:[%s3978] ss:$8 sm:$0xf0]
  %v3981 = vor.u32 %v3979, %v3980
  %v3990 = vlaneseq
  %v3991 = vshrl.u32 %v3990, 7
  %v3992 = vsub.s32 0, %v3991
  %v3993 = vrot.slane %v3953, %v3992
  %v3994 = vlaneseq
  %v3995 = vshrl.u32 %v3994, 7
  %v3996 = vsub.s32 1, %v3995
  %v3997 = vrot.slane %v3953, %v3996
  %v3998 = vlaneseq
  %v3999 = vshrl.u32 %v3998, 7
  %v4000 = vsub.s32 2, %v3999
  %v4001 = vrot.slane %v3953, %v4000
  %v4002 = vlaneseq
  %v4003 = vshrl.u32 %v4002, 7
  %v4004 = vsub.s32 3, %v4003
  %v4005 = vrot.slane %v3953, %v4004
  %v4006 = vlaneseq
  %v4007 = vshrl.u32 %v4006, 7
  %v4008 = vsub.s32 4, %v4007
  %v4009 = vrot.slane %v3953, %v4008
  %v4010 = vlaneseq
  %v4011 = vshrl.u32 %v4010, 7
  %v4012 = vsub.s32 5, %v4011
  %v4013 = vrot.slane %v3953, %v4012
  %v4014 = vlaneseq
  %v4015 = vshrl.u32 %v4014, 7
  %v4016 = vsub.s32 6, %v4015
  %v4017 = vrot.slane %v3953, %v4016
  %v4018 = vlaneseq
  %v4019 = vshrl.u32 %v4018, 7
  %v4020 = vsub.s32 7, %v4019
  %v4021 = vrot.slane %v3953, %v4020
  %v4022 = vlaneseq
  %v4023 = vshrl.u32 %v4022, 7
  %v4024 = vsub.s32 0, %v4023
  %v4025 = vrot.slane %v3957, %v4024
  %v4026 = vlaneseq
  %v4027 = vshrl.u32 %v4026, 7
  %v4028 = vsub.s32 1, %v4027
  %v4029 = vrot.slane %v3957, %v4028
  %v4030 = vlaneseq
  %v4031 = vshrl.u32 %v4030, 7
  %v4032 = vsub.s32 2, %v4031
  %v4033 = vrot.slane %v3957, %v4032
  %v4034 = vlaneseq
  %v4035 = vshrl.u32 %v4034, 7
  %v4036 = vsub.s32 3, %v4035
  %v4037 = vrot.slane %v3957, %v4036
  %v4038 = vlaneseq
  %v4039 = vshrl.u32 %v4038, 7
  %v4040 = vsub.s32 4, %v4039
  %v4041 = vrot.slane %v3957, %v4040
  %v4042 = vlaneseq
  %v4043 = vshrl.u32 %v4042, 7
  %v4044 = vsub.s32 5, %v4043
  %v4045 = vrot.slane %v3957, %v4044
  %v4046 = vlaneseq
  %v4047 = vshrl.u32 %v4046, 7
  %v4048 = vsub.s32 6, %v4047
  %v4049 = vrot.slane %v3957, %v4048
  %v4050 = vlaneseq
  %v4051 = vshrl.u32 %v4050, 7
  %v4052 = vsub.s32 7, %v4051
  %v4053 = vrot.slane %v3957, %v4052
  %v4054 = vlaneseq
  %v4055 = vshrl.u32 %v4054, 7
  %v4056 = vsub.s32 0, %v4055
  %v4057 = vrot.slane %v3961, %v4056
  %v4058 = vlaneseq
  %v4059 = vshrl.u32 %v4058, 7
  %v4060 = vsub.s32 1, %v4059
  %v4061 = vrot.slane %v3961, %v4060
  %v4062 = vlaneseq
  %v4063 = vshrl.u32 %v4062, 7
  %v4064 = vsub.s32 2, %v4063
  %v4065 = vrot.slane %v3961, %v4064
  %v4066 = vlaneseq
  %v4067 = vshrl.u32 %v4066, 7
  %v4068 = vsub.s32 3, %v4067
  %v4069 = vrot.slane %v3961, %v4068
  %v4070 = vlaneseq
  %v4071 = vshrl.u32 %v4070, 7
  %v4072 = vsub.s32 4, %v4071
  %v4073 = vrot.slane %v3961, %v4072
  %v4074 = vlaneseq
  %v4075 = vshrl.u32 %v4074, 7
  %v4076 = vsub.s32 5, %v4075
  %v4077 = vrot.slane %v3961, %v4076
  %v4078 = vlaneseq
  %v4079 = vshrl.u32 %v4078, 7
  %v4080 = vsub.s32 6, %v4079
  %v4081 = vrot.slane %v3961, %v4080
  %v4082 = vlaneseq
  %v4083 = vshrl.u32 %v4082, 7
  %v4084 = vsub.s32 7, %v4083
  %v4085 = vrot.slane %v3961, %v4084
  %v4086 = vlaneseq
  %v4087 = vshrl.u32 %v4086, 7
  %v4088 = vsub.s32 0, %v4087
  %v4089 = vrot.slane %v3965, %v4088
  %v4090 = vlaneseq
  %v4091 = vshrl.u32 %v4090, 7
  %v4092 = vsub.s32 1, %v4091
  %v4093 = vrot.slane %v3965, %v4092
  %v4094 = vlaneseq
  %v4095 = vshrl.u32 %v4094, 7
  %v4096 = vsub.s32 2, %v4095
  %v4097 = vrot.slane %v3965, %v4096
  %v4098 = vlaneseq
  %v4099 = vshrl.u32 %v4098, 7
  %v4100 = vsub.s32 3, %v4099
  %v4101 = vrot.slane %v3965, %v4100
  %v4102 = vlaneseq
  %v4103 = vshrl.u32 %v4102, 7
  %v4104 = vsub.s32 4, %v4103
  %v4105 = vrot.slane %v3965, %v4104
  %v4106 = vlaneseq
  %v4107 = vshrl.u32 %v4106, 7
  %v4108 = vsub.s32 5, %v4107
  %v4109 = vrot.slane %v3965, %v4108
  %v4110 = vlaneseq
  %v4111 = vshrl.u32 %v4110, 7
  %v4112 = vsub.s32 6, %v4111
  %v4113 = vrot.slane %v3965, %v4112
  %v4114 = vlaneseq
  %v4115 = vshrl.u32 %v4114, 7
  %v4116 = vsub.s32 7, %v4115
  %v4117 = vrot.slane %v3965, %v4116
  %v4118 = vlaneseq
  %v4119 = vshrl.u32 %v4118, 7
  %v4120 = vsub.s32 0, %v4119
  %v4121 = vrot.slane %v3969, %v4120
  %v4122 = vlaneseq
  %v4123 = vshrl.u32 %v4122, 7
  %v4124 = vsub.s32 1, %v4123
  %v4125 = vrot.slane %v3969, %v4124
  %v4126 = vlaneseq
  %v4127 = vshrl.u32 %v4126, 7
  %v4128 = vsub.s32 2, %v4127
  %v4129 = vrot.slane %v3969, %v4128
  %v4130 = vlaneseq
  %v4131 = vshrl.u32 %v4130, 7
  %v4132 = vsub.s32 3, %v4131
  %v4133 = vrot.slane %v3969, %v4132
  %v4134 = vlaneseq
  %v4135 = vshrl.u32 %v4134, 7
  %v4136 = vsub.s32 4, %v4135
  %v4137 = vrot.slane %v3969, %v4136
  %v4138 = vlaneseq
  %v4139 = vshrl.u32 %v4138, 7
  %v4140 = vsub.s32 5, %v4139
  %v4141 = vrot.slane %v3969, %v4140
  %v4142 = vlaneseq
  %v4143 = vshrl.u32 %v4142, 7
  %v4144 = vsub.s32 6, %v4143
  %v4145 = vrot.slane %v3969, %v4144
  %v4146 = vlaneseq
  %v4147 = vshrl.u32 %v4146, 7
  %v4148 = vsub.s32 7, %v4147
  %v4149 = vrot.slane %v3969, %v4148
  %v4150 = vlaneseq
  %v4151 = vshrl.u32 %v4150, 7
  %v4152 = vsub.s32 0, %v4151
  %v4153 = vrot.slane %v3973, %v4152
  %v4154 = vlaneseq
  %v4155 = vshrl.u32 %v4154, 7
  %v4156 = vsub.s32 1, %v4155
  %v4157 = vrot.slane %v3973, %v4156
  %v4158 = vlaneseq
  %v4159 = vshrl.u32 %v4158, 7
  %v4160 = vsub.s32 2, %v4159
  %v4161 = vrot.slane %v3973, %v4160
  %v4162 = vlaneseq
  %v4163 = vshrl.u32 %v4162, 7
  %v4164 = vsub.s32 3, %v4163
  %v4165 = vrot.slane %v3973, %v4164
  %v4166 = vlaneseq
  %v4167 = vshrl.u32 %v4166, 7
  %v4168 = vsub.s32 4, %v4167
  %v4169 = vrot.slane %v3973, %v4168
  %v4170 = vlaneseq
  %v4171 = vshrl.u32 %v4170, 7
  %v4172 = vsub.s32 5, %v4171
  %v4173 = vrot.slane %v3973, %v4172
  %v4174 = vlaneseq
  %v4175 = vshrl.u32 %v4174, 7
  %v4176 = vsub.s32 6, %v4175
  %v4177 = vrot.slane %v3973, %v4176
  %v4178 = vlaneseq
  %v4179 = vshrl.u32 %v4178, 7
  %v4180 = vsub.s32 7, %v4179
  %v4181 = vrot.slane %v3973, %v4180
  %v4182 = vlaneseq
  %v4183 = vshrl.u32 %v4182, 7
  %v4184 = vsub.s32 0, %v4183
  %v4185 = vrot.slane %v3977, %v4184
  %v4186 = vlaneseq
  %v4187 = vshrl.u32 %v4186, 7
  %v4188 = vsub.s32 1, %v4187
  %v4189 = vrot.slane %v3977, %v4188
  %v4190 = vlaneseq
  %v4191 = vshrl.u32 %v4190, 7
  %v4192 = vsub.s32 2, %v4191
  %v4193 = vrot.slane %v3977, %v4192
  %v4194 = vlaneseq
  %v4195 = vshrl.u32 %v4194, 7
  %v4196 = vsub.s32 3, %v4195
  %v4197 = vrot.slane %v3977, %v4196
  %v4198 = vlaneseq
  %v4199 = vshrl.u32 %v4198, 7
  %v4200 = vsub.s32 4, %v4199
  %v4201 = vrot.slane %v3977, %v4200
  %v4202 = vlaneseq
  %v4203 = vshrl.u32 %v4202, 7
  %v4204 = vsub.s32 5, %v4203
  %v4205 = vrot.slane %v3977, %v4204
  %v4206 = vlaneseq
  %v4207 = vshrl.u32 %v4206, 7
  %v4208 = vsub.s32 6, %v4207
  %v4209 = vrot.slane %v3977, %v4208
  %v4210 = vlaneseq
  %v4211 = vshrl.u32 %v4210, 7
  %v4212 = vsub.s32 7, %v4211
  %v4213 = vrot.slane %v3977, %v4212
  %v4214 = vlaneseq
  %v4215 = vshrl.u32 %v4214, 7
  %v4216 = vsub.s32 0, %v4215
  %v4217 = vrot.slane %v3981, %v4216
  %v4218 = vlaneseq
  %v4219 = vshrl.u32 %v4218, 7
  %v4220 = vsub.s32 1, %v4219
  %v4221 = vrot.slane %v3981, %v4220
  %v4222 = vlaneseq
  %v4223 = vshrl.u32 %v4222, 7
  %v4224 = vsub.s32 2, %v4223
  %v4225 = vrot.slane %v3981, %v4224
  %v4226 = vlaneseq
  %v4227 = vshrl.u32 %v4226, 7
  %v4228 = vsub.s32 3, %v4227
  %v4229 = vrot.slane %v3981, %v4228
  %v4230 = vlaneseq
  %v4231 = vshrl.u32 %v4230, 7
  %v4232 = vsub.s32 4, %v4231
  %v4233 = vrot.slane %v3981, %v4232
  %v4234 = vlaneseq
  %v4235 = vshrl.u32 %v4234, 7
  %v4236 = vsub.s32 5, %v4235
  %v4237 = vrot.slane %v3981, %v4236
  %v4238 = vlaneseq
  %v4239 = vshrl.u32 %v4238, 7
  %v4240 = vsub.s32 6, %v4239
  %v4241 = vrot.slane %v3981, %v4240
  %v4242 = vlaneseq
  %v4243 = vshrl.u32 %v4242, 7
  %v4244 = vsub.s32 7, %v4243
  %v4245 = vrot.slane %v3981, %v4244
  %v4310 = vpack.c.bf16 %v3993, %v3993
  %v4311 = vpack.c.bf16 %v3997, %v3997
  %v4312 = vpack.c.bf16 %v4001, %v4001
  %v4313 = vpack.c.bf16 %v4005, %v4005
  %v4314 = vpack.c.bf16 %v4009, %v4009
  %v4315 = vpack.c.bf16 %v4013, %v4013
  %v4316 = vpack.c.bf16 %v4017, %v4017
  %v4317 = vpack.c.bf16 %v4021, %v4021
  %v4318 = vpack.c.bf16 %v4025, %v4025
  %v4319 = vpack.c.bf16 %v4029, %v4029
  %v4320 = vpack.c.bf16 %v4033, %v4033
  %v4321 = vpack.c.bf16 %v4037, %v4037
  %v4322 = vpack.c.bf16 %v4041, %v4041
  %v4323 = vpack.c.bf16 %v4045, %v4045
  %v4324 = vpack.c.bf16 %v4049, %v4049
  %v4325 = vpack.c.bf16 %v4053, %v4053
  %v4326 = vpack.c.bf16 %v4057, %v4057
  %v4327 = vpack.c.bf16 %v4061, %v4061
  %v4328 = vpack.c.bf16 %v4065, %v4065
  %v4329 = vpack.c.bf16 %v4069, %v4069
  %v4330 = vpack.c.bf16 %v4073, %v4073
  %v4331 = vpack.c.bf16 %v4077, %v4077
  %v4332 = vpack.c.bf16 %v4081, %v4081
  %v4333 = vpack.c.bf16 %v4085, %v4085
  %v4334 = vpack.c.bf16 %v4089, %v4089
  %v4335 = vpack.c.bf16 %v4093, %v4093
  %v4336 = vpack.c.bf16 %v4097, %v4097
  %v4337 = vpack.c.bf16 %v4101, %v4101
  %v4338 = vpack.c.bf16 %v4105, %v4105
  %v4339 = vpack.c.bf16 %v4109, %v4109
  %v4340 = vpack.c.bf16 %v4113, %v4113
  %v4341 = vpack.c.bf16 %v4117, %v4117
  %v4342 = vpack.c.bf16 %v4121, %v4121
  %v4343 = vpack.c.bf16 %v4125, %v4125
  %v4344 = vpack.c.bf16 %v4129, %v4129
  %v4345 = vpack.c.bf16 %v4133, %v4133
  %v4346 = vpack.c.bf16 %v4137, %v4137
  %v4347 = vpack.c.bf16 %v4141, %v4141
  %v4348 = vpack.c.bf16 %v4145, %v4145
  %v4349 = vpack.c.bf16 %v4149, %v4149
  %v4350 = vpack.c.bf16 %v4153, %v4153
  %v4351 = vpack.c.bf16 %v4157, %v4157
  %v4352 = vpack.c.bf16 %v4161, %v4161
  %v4353 = vpack.c.bf16 %v4165, %v4165
  %v4354 = vpack.c.bf16 %v4169, %v4169
  %v4355 = vpack.c.bf16 %v4173, %v4173
  %v4356 = vpack.c.bf16 %v4177, %v4177
  %v4357 = vpack.c.bf16 %v4181, %v4181
  %v4358 = vpack.c.bf16 %v4185, %v4185
  %v4359 = vpack.c.bf16 %v4189, %v4189
  %v4360 = vpack.c.bf16 %v4193, %v4193
  %v4361 = vpack.c.bf16 %v4197, %v4197
  %v4362 = vpack.c.bf16 %v4201, %v4201
  %v4363 = vpack.c.bf16 %v4205, %v4205
  %v4364 = vpack.c.bf16 %v4209, %v4209
  %v4365 = vpack.c.bf16 %v4213, %v4213
  %v4366 = vpack.c.bf16 %v4217, %v4217
  %v4367 = vpack.c.bf16 %v4221, %v4221
  %v4368 = vpack.c.bf16 %v4225, %v4225
  %v4369 = vpack.c.bf16 %v4229, %v4229
  %v4370 = vpack.c.bf16 %v4233, %v4233
  %v4371 = vpack.c.bf16 %v4237, %v4237
  %v4372 = vpack.c.bf16 %v4241, %v4241
  %v4373 = vpack.c.bf16 %v4245, %v4245
  %v4438 = vunpack.c.l.b16 %v4310
  %v4439 = vunpack.c.l.b16 %v4311
  %v4440 = vunpack.c.l.b16 %v4312
  %v4441 = vunpack.c.l.b16 %v4313
  %v4442 = vunpack.c.l.b16 %v4314
  %v4443 = vunpack.c.l.b16 %v4315
  %v4444 = vunpack.c.l.b16 %v4316
  %v4445 = vunpack.c.l.b16 %v4317
  %v4446 = vunpack.c.l.b16 %v4318
  %v4447 = vunpack.c.l.b16 %v4319
  %v4448 = vunpack.c.l.b16 %v4320
  %v4449 = vunpack.c.l.b16 %v4321
  %v4450 = vunpack.c.l.b16 %v4322
  %v4451 = vunpack.c.l.b16 %v4323
  %v4452 = vunpack.c.l.b16 %v4324
  %v4453 = vunpack.c.l.b16 %v4325
  %v4454 = vunpack.c.l.b16 %v4326
  %v4455 = vunpack.c.l.b16 %v4327
  %v4456 = vunpack.c.l.b16 %v4328
  %v4457 = vunpack.c.l.b16 %v4329
  %v4458 = vunpack.c.l.b16 %v4330
  %v4459 = vunpack.c.l.b16 %v4331
  %v4460 = vunpack.c.l.b16 %v4332
  %v4461 = vunpack.c.l.b16 %v4333
  %v4462 = vunpack.c.l.b16 %v4334
  %v4463 = vunpack.c.l.b16 %v4335
  %v4464 = vunpack.c.l.b16 %v4336
  %v4465 = vunpack.c.l.b16 %v4337
  %v4466 = vunpack.c.l.b16 %v4338
  %v4467 = vunpack.c.l.b16 %v4339
  %v4468 = vunpack.c.l.b16 %v4340
  %v4469 = vunpack.c.l.b16 %v4341
  %v4470 = vunpack.c.l.b16 %v4342
  %v4471 = vunpack.c.l.b16 %v4343
  %v4472 = vunpack.c.l.b16 %v4344
  %v4473 = vunpack.c.l.b16 %v4345
  %v4474 = vunpack.c.l.b16 %v4346
  %v4475 = vunpack.c.l.b16 %v4347
  %v4476 = vunpack.c.l.b16 %v4348
  %v4477 = vunpack.c.l.b16 %v4349
  %v4478 = vunpack.c.l.b16 %v4350
  %v4479 = vunpack.c.l.b16 %v4351
  %v4480 = vunpack.c.l.b16 %v4352
  %v4481 = vunpack.c.l.b16 %v4353
  %v4482 = vunpack.c.l.b16 %v4354
  %v4483 = vunpack.c.l.b16 %v4355
  %v4484 = vunpack.c.l.b16 %v4356
  %v4485 = vunpack.c.l.b16 %v4357
  %v4486 = vunpack.c.l.b16 %v4358
  %v4487 = vunpack.c.l.b16 %v4359
  %v4488 = vunpack.c.l.b16 %v4360
  %v4489 = vunpack.c.l.b16 %v4361
  %v4490 = vunpack.c.l.b16 %v4362
  %v4491 = vunpack.c.l.b16 %v4363
  %v4492 = vunpack.c.l.b16 %v4364
  %v4493 = vunpack.c.l.b16 %v4365
  %v4494 = vunpack.c.l.b16 %v4366
  %v4495 = vunpack.c.l.b16 %v4367
  %v4496 = vunpack.c.l.b16 %v4368
  %v4497 = vunpack.c.l.b16 %v4369
  %v4498 = vunpack.c.l.b16 %v4370
  %v4499 = vunpack.c.l.b16 %v4371
  %v4500 = vunpack.c.l.b16 %v4372
  %v4501 = vunpack.c.l.b16 %v4373
  %v4502 = vrot.slane %v4446, 7
  %v4503 = vsel %vm710, %v4502, %v4438
  %v4504 = vrot.slane %v4454, 6
  %v4505 = vsel %vm713, %v4504, %v4503
  %v4506 = vrot.slane %v4462, 5
  %v4507 = vsel %vm716, %v4506, %v4505
  %v4508 = vrot.slane %v4470, 4
  %v4509 = vsel %vm719, %v4508, %v4507
  %v4510 = vrot.slane %v4478, 3
  %v4511 = vsel %vm722, %v4510, %v4509
  %v4512 = vrot.slane %v4486, 2
  %v4513 = vsel %vm725, %v4512, %v4511
  %v4514 = vrot.slane %v4494, 1
  %v4515 = vsel %vm728, %v4514, %v4513
  %v4516 = vrot.slane %v4447, 7
  %v4517 = vsel %vm710, %v4516, %v4439
  %v4518 = vrot.slane %v4455, 6
  %v4519 = vsel %vm713, %v4518, %v4517
  %v4520 = vrot.slane %v4463, 5
  %v4521 = vsel %vm716, %v4520, %v4519
  %v4522 = vrot.slane %v4471, 4
  %v4523 = vsel %vm719, %v4522, %v4521
  %v4524 = vrot.slane %v4479, 3
  %v4525 = vsel %vm722, %v4524, %v4523
  %v4526 = vrot.slane %v4487, 2
  %v4527 = vsel %vm725, %v4526, %v4525
  %v4528 = vrot.slane %v4495, 1
  %v4529 = vsel %vm728, %v4528, %v4527
  %v4530 = vrot.slane %v4448, 7
  %v4531 = vsel %vm710, %v4530, %v4440
  %v4532 = vrot.slane %v4456, 6
  %v4533 = vsel %vm713, %v4532, %v4531
  %v4534 = vrot.slane %v4464, 5
  %v4535 = vsel %vm716, %v4534, %v4533
  %v4536 = vrot.slane %v4472, 4
  %v4537 = vsel %vm719, %v4536, %v4535
  %v4538 = vrot.slane %v4480, 3
  %v4539 = vsel %vm722, %v4538, %v4537
  %v4540 = vrot.slane %v4488, 2
  %v4541 = vsel %vm725, %v4540, %v4539
  %v4542 = vrot.slane %v4496, 1
  %v4543 = vsel %vm728, %v4542, %v4541
  %v4544 = vrot.slane %v4449, 7
  %v4545 = vsel %vm710, %v4544, %v4441
  %v4546 = vrot.slane %v4457, 6
  %v4547 = vsel %vm713, %v4546, %v4545
  %v4548 = vrot.slane %v4465, 5
  %v4549 = vsel %vm716, %v4548, %v4547
  %v4550 = vrot.slane %v4473, 4
  %v4551 = vsel %vm719, %v4550, %v4549
  %v4552 = vrot.slane %v4481, 3
  %v4553 = vsel %vm722, %v4552, %v4551
  %v4554 = vrot.slane %v4489, 2
  %v4555 = vsel %vm725, %v4554, %v4553
  %v4556 = vrot.slane %v4497, 1
  %v4557 = vsel %vm728, %v4556, %v4555
  %v4558 = vrot.slane %v4450, 7
  %v4559 = vsel %vm710, %v4558, %v4442
  %v4560 = vrot.slane %v4458, 6
  %v4561 = vsel %vm713, %v4560, %v4559
  %v4562 = vrot.slane %v4466, 5
  %v4563 = vsel %vm716, %v4562, %v4561
  %v4564 = vrot.slane %v4474, 4
  %v4565 = vsel %vm719, %v4564, %v4563
  %v4566 = vrot.slane %v4482, 3
  %v4567 = vsel %vm722, %v4566, %v4565
  %v4568 = vrot.slane %v4490, 2
  %v4569 = vsel %vm725, %v4568, %v4567
  %v4570 = vrot.slane %v4498, 1
  %v4571 = vsel %vm728, %v4570, %v4569
  %v4572 = vrot.slane %v4451, 7
  %v4573 = vsel %vm710, %v4572, %v4443
  %v4574 = vrot.slane %v4459, 6
  %v4575 = vsel %vm713, %v4574, %v4573
  %v4576 = vrot.slane %v4467, 5
  %v4577 = vsel %vm716, %v4576, %v4575
  %v4578 = vrot.slane %v4475, 4
  %v4579 = vsel %vm719, %v4578, %v4577
  %v4580 = vrot.slane %v4483, 3
  %v4581 = vsel %vm722, %v4580, %v4579
  %v4582 = vrot.slane %v4491, 2
  %v4583 = vsel %vm725, %v4582, %v4581
  %v4584 = vrot.slane %v4499, 1
  %v4585 = vsel %vm728, %v4584, %v4583
  %v4586 = vrot.slane %v4452, 7
  %v4587 = vsel %vm710, %v4586, %v4444
  %v4588 = vrot.slane %v4460, 6
  %v4589 = vsel %vm713, %v4588, %v4587
  %v4590 = vrot.slane %v4468, 5
  %v4591 = vsel %vm716, %v4590, %v4589
  %v4592 = vrot.slane %v4476, 4
  %v4593 = vsel %vm719, %v4592, %v4591
  %v4594 = vrot.slane %v4484, 3
  %v4595 = vsel %vm722, %v4594, %v4593
  %v4596 = vrot.slane %v4492, 2
  %v4597 = vsel %vm725, %v4596, %v4595
  %v4598 = vrot.slane %v4500, 1
  %v4599 = vsel %vm728, %v4598, %v4597
  %v4600 = vrot.slane %v4453, 7
  %v4601 = vsel %vm710, %v4600, %v4445
  %v4602 = vrot.slane %v4461, 6
  %v4603 = vsel %vm713, %v4602, %v4601
  %v4604 = vrot.slane %v4469, 5
  %v4605 = vsel %vm716, %v4604, %v4603
  %v4606 = vrot.slane %v4477, 4
  %v4607 = vsel %vm719, %v4606, %v4605
  %v4608 = vrot.slane %v4485, 3
  %v4609 = vsel %vm722, %v4608, %v4607
  %v4610 = vrot.slane %v4493, 2
  %v4611 = vsel %vm725, %v4610, %v4609
  %v4612 = vrot.slane %v4501, 1
  %v4613 = vsel %vm728, %v4612, %v4611
  %v4614 = vpack.c.b16 %v4515, %v4515
  %v4615 = vpack.c.b16 %v4529, %v4529
  %v4616 = vpack.c.b16 %v4543, %v4543
  %v4617 = vpack.c.b16 %v4557, %v4557
  %v4618 = vpack.c.b16 %v4571, %v4571
  %v4619 = vpack.c.b16 %v4585, %v4585
  %v4620 = vpack.c.b16 %v4599, %v4599
  %v4621 = vpack.c.b16 %v4613, %v4613
  %4630 = vmatprep.subr.bf16.mxu0 0
  %4631 = vmatpush1.bf16.msra.mxu0 %v1107
  %4632 = vmatprep.subr.bf16.mxu0 0
  %4633 = vmatpush1.bf16.msra.mxu0 %v1106
  %4634 = vmatprep.subr.bf16.mxu0 0
  %4635 = vmatpush1.bf16.msra.mxu0 %v1105
  %4636 = vmatprep.subr.bf16.mxu0 0
  %4637 = vmatpush1.bf16.msra.mxu0 %v1104
  %4638 = vmatprep.subr.bf16.mxu0 0
  %4639 = vmatpush1.bf16.msra.mxu0 %v1103
  %4640 = vmatprep.subr.bf16.mxu0 0
  %4641 = vmatpush1.bf16.msra.mxu0 %v1102
  %4642 = vmatprep.subr.bf16.mxu0 0
  %4643 = vmatpush1.bf16.msra.mxu0 %v1101
  %4644 = vmatprep.subr.bf16.mxu0 0
  %4645 = vmatpush1.bf16.msra.mxu0 %v1100
  %4646 = vmatprep.subr.bf16.mxu0 0
  %4647 = vmatpush2.bf16.msra.mxu0 %v1115
  %4648 = vmatprep.subr.bf16.mxu0 0
  %4649 = vmatpush2.bf16.msra.mxu0 %v1114
  %4650 = vmatprep.subr.bf16.mxu0 0
  %4651 = vmatpush2.bf16.msra.mxu0 %v1113
  %4652 = vmatprep.subr.bf16.mxu0 0
  %4653 = vmatpush2.bf16.msra.mxu0 %v1112
  %4654 = vmatprep.subr.bf16.mxu0 0
  %4655 = vmatpush2.bf16.msra.mxu0 %v1111
  %4656 = vmatprep.subr.bf16.mxu0 0
  %4657 = vmatpush2.bf16.msra.mxu0 %v1110
  %4658 = vmatprep.subr.bf16.mxu0 0
  %4659 = vmatpush2.bf16.msra.mxu0 %v1109
  %4660 = vmatprep.subr.bf16.mxu0 0
  %4661 = vmatpush2.bf16.msra.mxu0 %v1108
  %4662 = vmatprep.mubr.bf16.mxu0 %v4615
  %4663 = vmatmul.mubr.bf16.gmra.mxu0 %v4614
  %v4664 = vpop.f32.mrf.mxu0
  %v4665 = vadd.f32 %v579, %v4664
  %v4666 = vpop.f32.mrf.mxu0
  %v4667 = vpop.f32.mrf.mxu0
  %v4668 = vpop.f32.mrf.mxu0
  %4669 = vdwg.mxu0
  %4670 = vmatprep.subr.bf16.mxu0 0
  %4671 = vmatpush1.bf16.msra.mxu0 %v1123
  %4672 = vmatprep.subr.bf16.mxu0 0
  %4673 = vmatpush1.bf16.msra.mxu0 %v1122
  %4674 = vmatprep.subr.bf16.mxu0 0
  %4675 = vmatpush1.bf16.msra.mxu0 %v1121
  %4676 = vmatprep.subr.bf16.mxu0 0
  %4677 = vmatpush1.bf16.msra.mxu0 %v1120
  %4678 = vmatprep.subr.bf16.mxu0 0
  %4679 = vmatpush1.bf16.msra.mxu0 %v1119
  %4680 = vmatprep.subr.bf16.mxu0 0
  %4681 = vmatpush1.bf16.msra.mxu0 %v1118
  %4682 = vmatprep.subr.bf16.mxu0 0
  %4683 = vmatpush1.bf16.msra.mxu0 %v1117
  %4684 = vmatprep.subr.bf16.mxu0 0
  %4685 = vmatpush1.bf16.msra.mxu0 %v1116
  %4686 = vmatprep.subr.bf16.mxu0 0
  %4687 = vmatpush2.bf16.msra.mxu0 %v1131
  %4688 = vmatprep.subr.bf16.mxu0 0
  %4689 = vmatpush2.bf16.msra.mxu0 %v1130
  %4690 = vmatprep.subr.bf16.mxu0 0
  %4691 = vmatpush2.bf16.msra.mxu0 %v1129
  %4692 = vmatprep.subr.bf16.mxu0 0
  %4693 = vmatpush2.bf16.msra.mxu0 %v1128
  %4694 = vmatprep.subr.bf16.mxu0 0
  %4695 = vmatpush2.bf16.msra.mxu0 %v1127
  %4696 = vmatprep.subr.bf16.mxu0 0
  %4697 = vmatpush2.bf16.msra.mxu0 %v1126
  %4698 = vmatprep.subr.bf16.mxu0 0
  %4699 = vmatpush2.bf16.msra.mxu0 %v1125
  %4700 = vmatprep.subr.bf16.mxu0 0
  %4701 = vmatpush2.bf16.msra.mxu0 %v1124
  %4702 = vmatprep.mubr.bf16.mxu0 %v4617
  %4703 = vmatmul.mubr.bf16.gmra.mxu0 %v4616
  %v4704 = vpop.f32.mrf.mxu0
  %v4705 = vadd.f32 %v4665, %v4704
  %v4706 = vpop.f32.mrf.mxu0
  %v4707 = vpop.f32.mrf.mxu0
  %v4708 = vpop.f32.mrf.mxu0
  %4709 = vdwg.mxu0
  %4710 = vmatprep.subr.bf16.mxu0 0
  %4711 = vmatpush1.bf16.msra.mxu0 %v1139
  %4712 = vmatprep.subr.bf16.mxu0 0
  %4713 = vmatpush1.bf16.msra.mxu0 %v1138
  %4714 = vmatprep.subr.bf16.mxu0 0
  %4715 = vmatpush1.bf16.msra.mxu0 %v1137
  %4716 = vmatprep.subr.bf16.mxu0 0
  %4717 = vmatpush1.bf16.msra.mxu0 %v1136
  %4718 = vmatprep.subr.bf16.mxu0 0
  %4719 = vmatpush1.bf16.msra.mxu0 %v1135
  %4720 = vmatprep.subr.bf16.mxu0 0
  %4721 = vmatpush1.bf16.msra.mxu0 %v1134
  %4722 = vmatprep.subr.bf16.mxu0 0
  %4723 = vmatpush1.bf16.msra.mxu0 %v1133
  %4724 = vmatprep.subr.bf16.mxu0 0
  %4725 = vmatpush1.bf16.msra.mxu0 %v1132
  %4726 = vmatprep.subr.bf16.mxu0 0
  %4727 = vmatpush2.bf16.msra.mxu0 %v1147
  %4728 = vmatprep.subr.bf16.mxu0 0
  %4729 = vmatpush2.bf16.msra.mxu0 %v1146
  %4730 = vmatprep.subr.bf16.mxu0 0
  %4731 = vmatpush2.bf16.msra.mxu0 %v1145
  %4732 = vmatprep.subr.bf16.mxu0 0
  %4733 = vmatpush2.bf16.msra.mxu0 %v1144
  %4734 = vmatprep.subr.bf16.mxu0 0
  %4735 = vmatpush2.bf16.msra.mxu0 %v1143
  %4736 = vmatprep.subr.bf16.mxu0 0
  %4737 = vmatpush2.bf16.msra.mxu0 %v1142
  %4738 = vmatprep.subr.bf16.mxu0 0
  %4739 = vmatpush2.bf16.msra.mxu0 %v1141
  %4740 = vmatprep.subr.bf16.mxu0 0
  %4741 = vmatpush2.bf16.msra.mxu0 %v1140
  %4742 = vmatprep.mubr.bf16.mxu0 %v4619
  %4743 = vmatmul.mubr.bf16.gmra.mxu0 %v4618
  %v4744 = vpop.f32.mrf.mxu0
  %v4745 = vadd.f32 %v4705, %v4744
  %v4746 = vpop.f32.mrf.mxu0
  %v4747 = vpop.f32.mrf.mxu0
  %v4748 = vpop.f32.mrf.mxu0
  %4749 = vdwg.mxu0
  %4750 = vmatprep.subr.bf16.mxu0 0
  %4751 = vmatpush1.bf16.msra.mxu0 %v1155
  %4752 = vmatprep.subr.bf16.mxu0 0
  %4753 = vmatpush1.bf16.msra.mxu0 %v1154
  %4754 = vmatprep.subr.bf16.mxu0 0
  %4755 = vmatpush1.bf16.msra.mxu0 %v1153
  %4756 = vmatprep.subr.bf16.mxu0 0
  %4757 = vmatpush1.bf16.msra.mxu0 %v1152
  %4758 = vmatprep.subr.bf16.mxu0 0
  %4759 = vmatpush1.bf16.msra.mxu0 %v1151
  %4760 = vmatprep.subr.bf16.mxu0 0
  %4761 = vmatpush1.bf16.msra.mxu0 %v1150
  %4762 = vmatprep.subr.bf16.mxu0 0
  %4763 = vmatpush1.bf16.msra.mxu0 %v1149
  %4764 = vmatprep.subr.bf16.mxu0 0
  %4765 = vmatpush1.bf16.msra.mxu0 %v1148
  %4766 = vmatprep.subr.bf16.mxu0 0
  %4767 = vmatpush2.bf16.msra.mxu0 %v1163
  %4768 = vmatprep.subr.bf16.mxu0 0
  %4769 = vmatpush2.bf16.msra.mxu0 %v1162
  %4770 = vmatprep.subr.bf16.mxu0 0
  %4771 = vmatpush2.bf16.msra.mxu0 %v1161
  %4772 = vmatprep.subr.bf16.mxu0 0
  %4773 = vmatpush2.bf16.msra.mxu0 %v1160
  %4774 = vmatprep.subr.bf16.mxu0 0
  %4775 = vmatpush2.bf16.msra.mxu0 %v1159
  %4776 = vmatprep.subr.bf16.mxu0 0
  %4777 = vmatpush2.bf16.msra.mxu0 %v1158
  %4778 = vmatprep.subr.bf16.mxu0 0
  %4779 = vmatpush2.bf16.msra.mxu0 %v1157
  %4780 = vmatprep.subr.bf16.mxu0 0
  %4781 = vmatpush2.bf16.msra.mxu0 %v1156
  %4782 = vmatprep.mubr.bf16.mxu0 %v4621
  %4783 = vmatmul.mubr.bf16.gmra.mxu0 %v4620
  %v4784 = vpop.f32.mrf.mxu0
  %v4785 = vadd.f32 %v4745, %v4784
  %v4786 = vpop.f32.mrf.mxu0
  %v4787 = vpop.f32.mrf.mxu0
  %v4788 = vpop.f32.mrf.mxu0
  %4789 = vdwg.mxu0
  %v4790 = vmax.f32 %v4785, 0.0
  %s4791 = scalar_lea.vmem %s3, 4
  %v4792 = vld [vmem:[%s4791] sm:$0x1]
  %v4794 = vlaneseq
  %v4795 = vshrl.u32 %v4794, 7
  %v4796 = vsub.s32 0, %v4795
  %v4797 = vrot.slane %v4792, %v4796
  %v4799 = vmul.f32 %v4790, %v4797
  %v4800 = vadd.f32 %v3949, %v4799
  %s4801 = scalar_lea.vmem %s0, 5
  %v4802 = vld [vmem:[%s4801] ss:$8 sm:$0xf]
  %v4803 = vld [vmem:[%s4801] ss:$8 sm:$0xf0]
  %v4804 = vor.u32 %v4802, %v4803
  %s4805 = scalar_lea.vmem %s0, 69
  %v4806 = vld [vmem:[%s4805] ss:$8 sm:$0xf]
  %v4807 = vld [vmem:[%s4805] ss:$8 sm:$0xf0]
  %v4808 = vor.u32 %v4806, %v4807
  %s4809 = scalar_lea.vmem %s0, 133
  %v4810 = vld [vmem:[%s4809] ss:$8 sm:$0xf]
  %v4811 = vld [vmem:[%s4809] ss:$8 sm:$0xf0]
  %v4812 = vor.u32 %v4810, %v4811
  %s4813 = scalar_lea.vmem %s0, 197
  %v4814 = vld [vmem:[%s4813] ss:$8 sm:$0xf]
  %v4815 = vld [vmem:[%s4813] ss:$8 sm:$0xf0]
  %v4816 = vor.u32 %v4814, %v4815
  %s4817 = scalar_lea.vmem %s0, 261
  %v4818 = vld [vmem:[%s4817] ss:$8 sm:$0xf]
  %v4819 = vld [vmem:[%s4817] ss:$8 sm:$0xf0]
  %v4820 = vor.u32 %v4818, %v4819
  %s4821 = scalar_lea.vmem %s0, 325
  %v4822 = vld [vmem:[%s4821] ss:$8 sm:$0xf]
  %v4823 = vld [vmem:[%s4821] ss:$8 sm:$0xf0]
  %v4824 = vor.u32 %v4822, %v4823
  %s4825 = scalar_lea.vmem %s0, 389
  %v4826 = vld [vmem:[%s4825] ss:$8 sm:$0xf]
  %v4827 = vld [vmem:[%s4825] ss:$8 sm:$0xf0]
  %v4828 = vor.u32 %v4826, %v4827
  %s4829 = scalar_lea.vmem %s0, 453
  %v4830 = vld [vmem:[%s4829] ss:$8 sm:$0xf]
  %v4831 = vld [vmem:[%s4829] ss:$8 sm:$0xf0]
  %v4832 = vor.u32 %v4830, %v4831
  %v4841 = vlaneseq
  %v4842 = vshrl.u32 %v4841, 7
  %v4843 = vsub.s32 0, %v4842
  %v4844 = vrot.slane %v4804, %v4843
  %v4845 = vlaneseq
  %v4846 = vshrl.u32 %v4845, 7
  %v4847 = vsub.s32 1, %v4846
  %v4848 = vrot.slane %v4804, %v4847
  %v4849 = vlaneseq
  %v4850 = vshrl.u32 %v4849, 7
  %v4851 = vsub.s32 2, %v4850
  %v4852 = vrot.slane %v4804, %v4851
  %v4853 = vlaneseq
  %v4854 = vshrl.u32 %v4853, 7
  %v4855 = vsub.s32 3, %v4854
  %v4856 = vrot.slane %v4804, %v4855
  %v4857 = vlaneseq
  %v4858 = vshrl.u32 %v4857, 7
  %v4859 = vsub.s32 4, %v4858
  %v4860 = vrot.slane %v4804, %v4859
  %v4861 = vlaneseq
  %v4862 = vshrl.u32 %v4861, 7
  %v4863 = vsub.s32 5, %v4862
  %v4864 = vrot.slane %v4804, %v4863
  %v4865 = vlaneseq
  %v4866 = vshrl.u32 %v4865, 7
  %v4867 = vsub.s32 6, %v4866
  %v4868 = vrot.slane %v4804, %v4867
  %v4869 = vlaneseq
  %v4870 = vshrl.u32 %v4869, 7
  %v4871 = vsub.s32 7, %v4870
  %v4872 = vrot.slane %v4804, %v4871
  %v4873 = vlaneseq
  %v4874 = vshrl.u32 %v4873, 7
  %v4875 = vsub.s32 0, %v4874
  %v4876 = vrot.slane %v4808, %v4875
  %v4877 = vlaneseq
  %v4878 = vshrl.u32 %v4877, 7
  %v4879 = vsub.s32 1, %v4878
  %v4880 = vrot.slane %v4808, %v4879
  %v4881 = vlaneseq
  %v4882 = vshrl.u32 %v4881, 7
  %v4883 = vsub.s32 2, %v4882
  %v4884 = vrot.slane %v4808, %v4883
  %v4885 = vlaneseq
  %v4886 = vshrl.u32 %v4885, 7
  %v4887 = vsub.s32 3, %v4886
  %v4888 = vrot.slane %v4808, %v4887
  %v4889 = vlaneseq
  %v4890 = vshrl.u32 %v4889, 7
  %v4891 = vsub.s32 4, %v4890
  %v4892 = vrot.slane %v4808, %v4891
  %v4893 = vlaneseq
  %v4894 = vshrl.u32 %v4893, 7
  %v4895 = vsub.s32 5, %v4894
  %v4896 = vrot.slane %v4808, %v4895
  %v4897 = vlaneseq
  %v4898 = vshrl.u32 %v4897, 7
  %v4899 = vsub.s32 6, %v4898
  %v4900 = vrot.slane %v4808, %v4899
  %v4901 = vlaneseq
  %v4902 = vshrl.u32 %v4901, 7
  %v4903 = vsub.s32 7, %v4902
  %v4904 = vrot.slane %v4808, %v4903
  %v4905 = vlaneseq
  %v4906 = vshrl.u32 %v4905, 7
  %v4907 = vsub.s32 0, %v4906
  %v4908 = vrot.slane %v4812, %v4907
  %v4909 = vlaneseq
  %v4910 = vshrl.u32 %v4909, 7
  %v4911 = vsub.s32 1, %v4910
  %v4912 = vrot.slane %v4812, %v4911
  %v4913 = vlaneseq
  %v4914 = vshrl.u32 %v4913, 7
  %v4915 = vsub.s32 2, %v4914
  %v4916 = vrot.slane %v4812, %v4915
  %v4917 = vlaneseq
  %v4918 = vshrl.u32 %v4917, 7
  %v4919 = vsub.s32 3, %v4918
  %v4920 = vrot.slane %v4812, %v4919
  %v4921 = vlaneseq
  %v4922 = vshrl.u32 %v4921, 7
  %v4923 = vsub.s32 4, %v4922
  %v4924 = vrot.slane %v4812, %v4923
  %v4925 = vlaneseq
  %v4926 = vshrl.u32 %v4925, 7
  %v4927 = vsub.s32 5, %v4926
  %v4928 = vrot.slane %v4812, %v4927
  %v4929 = vlaneseq
  %v4930 = vshrl.u32 %v4929, 7
  %v4931 = vsub.s32 6, %v4930
  %v4932 = vrot.slane %v4812, %v4931
  %v4933 = vlaneseq
  %v4934 = vshrl.u32 %v4933, 7
  %v4935 = vsub.s32 7, %v4934
  %v4936 = vrot.slane %v4812, %v4935
  %v4937 = vlaneseq
  %v4938 = vshrl.u32 %v4937, 7
  %v4939 = vsub.s32 0, %v4938
  %v4940 = vrot.slane %v4816, %v4939
  %v4941 = vlaneseq
  %v4942 = vshrl.u32 %v4941, 7
  %v4943 = vsub.s32 1, %v4942
  %v4944 = vrot.slane %v4816, %v4943
  %v4945 = vlaneseq
  %v4946 = vshrl.u32 %v4945, 7
  %v4947 = vsub.s32 2, %v4946
  %v4948 = vrot.slane %v4816, %v4947
  %v4949 = vlaneseq
  %v4950 = vshrl.u32 %v4949, 7
  %v4951 = vsub.s32 3, %v4950
  %v4952 = vrot.slane %v4816, %v4951
  %v4953 = vlaneseq
  %v4954 = vshrl.u32 %v4953, 7
  %v4955 = vsub.s32 4, %v4954
  %v4956 = vrot.slane %v4816, %v4955
  %v4957 = vlaneseq
  %v4958 = vshrl.u32 %v4957, 7
  %v4959 = vsub.s32 5, %v4958
  %v4960 = vrot.slane %v4816, %v4959
  %v4961 = vlaneseq
  %v4962 = vshrl.u32 %v4961, 7
  %v4963 = vsub.s32 6, %v4962
  %v4964 = vrot.slane %v4816, %v4963
  %v4965 = vlaneseq
  %v4966 = vshrl.u32 %v4965, 7
  %v4967 = vsub.s32 7, %v4966
  %v4968 = vrot.slane %v4816, %v4967
  %v4969 = vlaneseq
  %v4970 = vshrl.u32 %v4969, 7
  %v4971 = vsub.s32 0, %v4970
  %v4972 = vrot.slane %v4820, %v4971
  %v4973 = vlaneseq
  %v4974 = vshrl.u32 %v4973, 7
  %v4975 = vsub.s32 1, %v4974
  %v4976 = vrot.slane %v4820, %v4975
  %v4977 = vlaneseq
  %v4978 = vshrl.u32 %v4977, 7
  %v4979 = vsub.s32 2, %v4978
  %v4980 = vrot.slane %v4820, %v4979
  %v4981 = vlaneseq
  %v4982 = vshrl.u32 %v4981, 7
  %v4983 = vsub.s32 3, %v4982
  %v4984 = vrot.slane %v4820, %v4983
  %v4985 = vlaneseq
  %v4986 = vshrl.u32 %v4985, 7
  %v4987 = vsub.s32 4, %v4986
  %v4988 = vrot.slane %v4820, %v4987
  %v4989 = vlaneseq
  %v4990 = vshrl.u32 %v4989, 7
  %v4991 = vsub.s32 5, %v4990
  %v4992 = vrot.slane %v4820, %v4991
  %v4993 = vlaneseq
  %v4994 = vshrl.u32 %v4993, 7
  %v4995 = vsub.s32 6, %v4994
  %v4996 = vrot.slane %v4820, %v4995
  %v4997 = vlaneseq
  %v4998 = vshrl.u32 %v4997, 7
  %v4999 = vsub.s32 7, %v4998
  %v5000 = vrot.slane %v4820, %v4999
  %v5001 = vlaneseq
  %v5002 = vshrl.u32 %v5001, 7
  %v5003 = vsub.s32 0, %v5002
  %v5004 = vrot.slane %v4824, %v5003
  %v5005 = vlaneseq
  %v5006 = vshrl.u32 %v5005, 7
  %v5007 = vsub.s32 1, %v5006
  %v5008 = vrot.slane %v4824, %v5007
  %v5009 = vlaneseq
  %v5010 = vshrl.u32 %v5009, 7
  %v5011 = vsub.s32 2, %v5010
  %v5012 = vrot.slane %v4824, %v5011
  %v5013 = vlaneseq
  %v5014 = vshrl.u32 %v5013, 7
  %v5015 = vsub.s32 3, %v5014
  %v5016 = vrot.slane %v4824, %v5015
  %v5017 = vlaneseq
  %v5018 = vshrl.u32 %v5017, 7
  %v5019 = vsub.s32 4, %v5018
  %v5020 = vrot.slane %v4824, %v5019
  %v5021 = vlaneseq
  %v5022 = vshrl.u32 %v5021, 7
  %v5023 = vsub.s32 5, %v5022
  %v5024 = vrot.slane %v4824, %v5023
  %v5025 = vlaneseq
  %v5026 = vshrl.u32 %v5025, 7
  %v5027 = vsub.s32 6, %v5026
  %v5028 = vrot.slane %v4824, %v5027
  %v5029 = vlaneseq
  %v5030 = vshrl.u32 %v5029, 7
  %v5031 = vsub.s32 7, %v5030
  %v5032 = vrot.slane %v4824, %v5031
  %v5033 = vlaneseq
  %v5034 = vshrl.u32 %v5033, 7
  %v5035 = vsub.s32 0, %v5034
  %v5036 = vrot.slane %v4828, %v5035
  %v5037 = vlaneseq
  %v5038 = vshrl.u32 %v5037, 7
  %v5039 = vsub.s32 1, %v5038
  %v5040 = vrot.slane %v4828, %v5039
  %v5041 = vlaneseq
  %v5042 = vshrl.u32 %v5041, 7
  %v5043 = vsub.s32 2, %v5042
  %v5044 = vrot.slane %v4828, %v5043
  %v5045 = vlaneseq
  %v5046 = vshrl.u32 %v5045, 7
  %v5047 = vsub.s32 3, %v5046
  %v5048 = vrot.slane %v4828, %v5047
  %v5049 = vlaneseq
  %v5050 = vshrl.u32 %v5049, 7
  %v5051 = vsub.s32 4, %v5050
  %v5052 = vrot.slane %v4828, %v5051
  %v5053 = vlaneseq
  %v5054 = vshrl.u32 %v5053, 7
  %v5055 = vsub.s32 5, %v5054
  %v5056 = vrot.slane %v4828, %v5055
  %v5057 = vlaneseq
  %v5058 = vshrl.u32 %v5057, 7
  %v5059 = vsub.s32 6, %v5058
  %v5060 = vrot.slane %v4828, %v5059
  %v5061 = vlaneseq
  %v5062 = vshrl.u32 %v5061, 7
  %v5063 = vsub.s32 7, %v5062
  %v5064 = vrot.slane %v4828, %v5063
  %v5065 = vlaneseq
  %v5066 = vshrl.u32 %v5065, 7
  %v5067 = vsub.s32 0, %v5066
  %v5068 = vrot.slane %v4832, %v5067
  %v5069 = vlaneseq
  %v5070 = vshrl.u32 %v5069, 7
  %v5071 = vsub.s32 1, %v5070
  %v5072 = vrot.slane %v4832, %v5071
  %v5073 = vlaneseq
  %v5074 = vshrl.u32 %v5073, 7
  %v5075 = vsub.s32 2, %v5074
  %v5076 = vrot.slane %v4832, %v5075
  %v5077 = vlaneseq
  %v5078 = vshrl.u32 %v5077, 7
  %v5079 = vsub.s32 3, %v5078
  %v5080 = vrot.slane %v4832, %v5079
  %v5081 = vlaneseq
  %v5082 = vshrl.u32 %v5081, 7
  %v5083 = vsub.s32 4, %v5082
  %v5084 = vrot.slane %v4832, %v5083
  %v5085 = vlaneseq
  %v5086 = vshrl.u32 %v5085, 7
  %v5087 = vsub.s32 5, %v5086
  %v5088 = vrot.slane %v4832, %v5087
  %v5089 = vlaneseq
  %v5090 = vshrl.u32 %v5089, 7
  %v5091 = vsub.s32 6, %v5090
  %v5092 = vrot.slane %v4832, %v5091
  %v5093 = vlaneseq
  %v5094 = vshrl.u32 %v5093, 7
  %v5095 = vsub.s32 7, %v5094
  %v5096 = vrot.slane %v4832, %v5095
  %v5161 = vpack.c.bf16 %v4844, %v4844
  %v5162 = vpack.c.bf16 %v4848, %v4848
  %v5163 = vpack.c.bf16 %v4852, %v4852
  %v5164 = vpack.c.bf16 %v4856, %v4856
  %v5165 = vpack.c.bf16 %v4860, %v4860
  %v5166 = vpack.c.bf16 %v4864, %v4864
  %v5167 = vpack.c.bf16 %v4868, %v4868
  %v5168 = vpack.c.bf16 %v4872, %v4872
  %v5169 = vpack.c.bf16 %v4876, %v4876
  %v5170 = vpack.c.bf16 %v4880, %v4880
  %v5171 = vpack.c.bf16 %v4884, %v4884
  %v5172 = vpack.c.bf16 %v4888, %v4888
  %v5173 = vpack.c.bf16 %v4892, %v4892
  %v5174 = vpack.c.bf16 %v4896, %v4896
  %v5175 = vpack.c.bf16 %v4900, %v4900
  %v5176 = vpack.c.bf16 %v4904, %v4904
  %v5177 = vpack.c.bf16 %v4908, %v4908
  %v5178 = vpack.c.bf16 %v4912, %v4912
  %v5179 = vpack.c.bf16 %v4916, %v4916
  %v5180 = vpack.c.bf16 %v4920, %v4920
  %v5181 = vpack.c.bf16 %v4924, %v4924
  %v5182 = vpack.c.bf16 %v4928, %v4928
  %v5183 = vpack.c.bf16 %v4932, %v4932
  %v5184 = vpack.c.bf16 %v4936, %v4936
  %v5185 = vpack.c.bf16 %v4940, %v4940
  %v5186 = vpack.c.bf16 %v4944, %v4944
  %v5187 = vpack.c.bf16 %v4948, %v4948
  %v5188 = vpack.c.bf16 %v4952, %v4952
  %v5189 = vpack.c.bf16 %v4956, %v4956
  %v5190 = vpack.c.bf16 %v4960, %v4960
  %v5191 = vpack.c.bf16 %v4964, %v4964
  %v5192 = vpack.c.bf16 %v4968, %v4968
  %v5193 = vpack.c.bf16 %v4972, %v4972
  %v5194 = vpack.c.bf16 %v4976, %v4976
  %v5195 = vpack.c.bf16 %v4980, %v4980
  %v5196 = vpack.c.bf16 %v4984, %v4984
  %v5197 = vpack.c.bf16 %v4988, %v4988
  %v5198 = vpack.c.bf16 %v4992, %v4992
  %v5199 = vpack.c.bf16 %v4996, %v4996
  %v5200 = vpack.c.bf16 %v5000, %v5000
  %v5201 = vpack.c.bf16 %v5004, %v5004
  %v5202 = vpack.c.bf16 %v5008, %v5008
  %v5203 = vpack.c.bf16 %v5012, %v5012
  %v5204 = vpack.c.bf16 %v5016, %v5016
  %v5205 = vpack.c.bf16 %v5020, %v5020
  %v5206 = vpack.c.bf16 %v5024, %v5024
  %v5207 = vpack.c.bf16 %v5028, %v5028
  %v5208 = vpack.c.bf16 %v5032, %v5032
  %v5209 = vpack.c.bf16 %v5036, %v5036
  %v5210 = vpack.c.bf16 %v5040, %v5040
  %v5211 = vpack.c.bf16 %v5044, %v5044
  %v5212 = vpack.c.bf16 %v5048, %v5048
  %v5213 = vpack.c.bf16 %v5052, %v5052
  %v5214 = vpack.c.bf16 %v5056, %v5056
  %v5215 = vpack.c.bf16 %v5060, %v5060
  %v5216 = vpack.c.bf16 %v5064, %v5064
  %v5217 = vpack.c.bf16 %v5068, %v5068
  %v5218 = vpack.c.bf16 %v5072, %v5072
  %v5219 = vpack.c.bf16 %v5076, %v5076
  %v5220 = vpack.c.bf16 %v5080, %v5080
  %v5221 = vpack.c.bf16 %v5084, %v5084
  %v5222 = vpack.c.bf16 %v5088, %v5088
  %v5223 = vpack.c.bf16 %v5092, %v5092
  %v5224 = vpack.c.bf16 %v5096, %v5096
  %v5289 = vunpack.c.l.b16 %v5161
  %v5290 = vunpack.c.l.b16 %v5162
  %v5291 = vunpack.c.l.b16 %v5163
  %v5292 = vunpack.c.l.b16 %v5164
  %v5293 = vunpack.c.l.b16 %v5165
  %v5294 = vunpack.c.l.b16 %v5166
  %v5295 = vunpack.c.l.b16 %v5167
  %v5296 = vunpack.c.l.b16 %v5168
  %v5297 = vunpack.c.l.b16 %v5169
  %v5298 = vunpack.c.l.b16 %v5170
  %v5299 = vunpack.c.l.b16 %v5171
  %v5300 = vunpack.c.l.b16 %v5172
  %v5301 = vunpack.c.l.b16 %v5173
  %v5302 = vunpack.c.l.b16 %v5174
  %v5303 = vunpack.c.l.b16 %v5175
  %v5304 = vunpack.c.l.b16 %v5176
  %v5305 = vunpack.c.l.b16 %v5177
  %v5306 = vunpack.c.l.b16 %v5178
  %v5307 = vunpack.c.l.b16 %v5179
  %v5308 = vunpack.c.l.b16 %v5180
  %v5309 = vunpack.c.l.b16 %v5181
  %v5310 = vunpack.c.l.b16 %v5182
  %v5311 = vunpack.c.l.b16 %v5183
  %v5312 = vunpack.c.l.b16 %v5184
  %v5313 = vunpack.c.l.b16 %v5185
  %v5314 = vunpack.c.l.b16 %v5186
  %v5315 = vunpack.c.l.b16 %v5187
  %v5316 = vunpack.c.l.b16 %v5188
  %v5317 = vunpack.c.l.b16 %v5189
  %v5318 = vunpack.c.l.b16 %v5190
  %v5319 = vunpack.c.l.b16 %v5191
  %v5320 = vunpack.c.l.b16 %v5192
  %v5321 = vunpack.c.l.b16 %v5193
  %v5322 = vunpack.c.l.b16 %v5194
  %v5323 = vunpack.c.l.b16 %v5195
  %v5324 = vunpack.c.l.b16 %v5196
  %v5325 = vunpack.c.l.b16 %v5197
  %v5326 = vunpack.c.l.b16 %v5198
  %v5327 = vunpack.c.l.b16 %v5199
  %v5328 = vunpack.c.l.b16 %v5200
  %v5329 = vunpack.c.l.b16 %v5201
  %v5330 = vunpack.c.l.b16 %v5202
  %v5331 = vunpack.c.l.b16 %v5203
  %v5332 = vunpack.c.l.b16 %v5204
  %v5333 = vunpack.c.l.b16 %v5205
  %v5334 = vunpack.c.l.b16 %v5206
  %v5335 = vunpack.c.l.b16 %v5207
  %v5336 = vunpack.c.l.b16 %v5208
  %v5337 = vunpack.c.l.b16 %v5209
  %v5338 = vunpack.c.l.b16 %v5210
  %v5339 = vunpack.c.l.b16 %v5211
  %v5340 = vunpack.c.l.b16 %v5212
  %v5341 = vunpack.c.l.b16 %v5213
  %v5342 = vunpack.c.l.b16 %v5214
  %v5343 = vunpack.c.l.b16 %v5215
  %v5344 = vunpack.c.l.b16 %v5216
  %v5345 = vunpack.c.l.b16 %v5217
  %v5346 = vunpack.c.l.b16 %v5218
  %v5347 = vunpack.c.l.b16 %v5219
  %v5348 = vunpack.c.l.b16 %v5220
  %v5349 = vunpack.c.l.b16 %v5221
  %v5350 = vunpack.c.l.b16 %v5222
  %v5351 = vunpack.c.l.b16 %v5223
  %v5352 = vunpack.c.l.b16 %v5224
  %v5353 = vrot.slane %v5297, 7
  %v5354 = vsel %vm710, %v5353, %v5289
  %v5355 = vrot.slane %v5305, 6
  %v5356 = vsel %vm713, %v5355, %v5354
  %v5357 = vrot.slane %v5313, 5
  %v5358 = vsel %vm716, %v5357, %v5356
  %v5359 = vrot.slane %v5321, 4
  %v5360 = vsel %vm719, %v5359, %v5358
  %v5361 = vrot.slane %v5329, 3
  %v5362 = vsel %vm722, %v5361, %v5360
  %v5363 = vrot.slane %v5337, 2
  %v5364 = vsel %vm725, %v5363, %v5362
  %v5365 = vrot.slane %v5345, 1
  %v5366 = vsel %vm728, %v5365, %v5364
  %v5367 = vrot.slane %v5298, 7
  %v5368 = vsel %vm710, %v5367, %v5290
  %v5369 = vrot.slane %v5306, 6
  %v5370 = vsel %vm713, %v5369, %v5368
  %v5371 = vrot.slane %v5314, 5
  %v5372 = vsel %vm716, %v5371, %v5370
  %v5373 = vrot.slane %v5322, 4
  %v5374 = vsel %vm719, %v5373, %v5372
  %v5375 = vrot.slane %v5330, 3
  %v5376 = vsel %vm722, %v5375, %v5374
  %v5377 = vrot.slane %v5338, 2
  %v5378 = vsel %vm725, %v5377, %v5376
  %v5379 = vrot.slane %v5346, 1
  %v5380 = vsel %vm728, %v5379, %v5378
  %v5381 = vrot.slane %v5299, 7
  %v5382 = vsel %vm710, %v5381, %v5291
  %v5383 = vrot.slane %v5307, 6
  %v5384 = vsel %vm713, %v5383, %v5382
  %v5385 = vrot.slane %v5315, 5
  %v5386 = vsel %vm716, %v5385, %v5384
  %v5387 = vrot.slane %v5323, 4
  %v5388 = vsel %vm719, %v5387, %v5386
  %v5389 = vrot.slane %v5331, 3
  %v5390 = vsel %vm722, %v5389, %v5388
  %v5391 = vrot.slane %v5339, 2
  %v5392 = vsel %vm725, %v5391, %v5390
  %v5393 = vrot.slane %v5347, 1
  %v5394 = vsel %vm728, %v5393, %v5392
  %v5395 = vrot.slane %v5300, 7
  %v5396 = vsel %vm710, %v5395, %v5292
  %v5397 = vrot.slane %v5308, 6
  %v5398 = vsel %vm713, %v5397, %v5396
  %v5399 = vrot.slane %v5316, 5
  %v5400 = vsel %vm716, %v5399, %v5398
  %v5401 = vrot.slane %v5324, 4
  %v5402 = vsel %vm719, %v5401, %v5400
  %v5403 = vrot.slane %v5332, 3
  %v5404 = vsel %vm722, %v5403, %v5402
  %v5405 = vrot.slane %v5340, 2
  %v5406 = vsel %vm725, %v5405, %v5404
  %v5407 = vrot.slane %v5348, 1
  %v5408 = vsel %vm728, %v5407, %v5406
  %v5409 = vrot.slane %v5301, 7
  %v5410 = vsel %vm710, %v5409, %v5293
  %v5411 = vrot.slane %v5309, 6
  %v5412 = vsel %vm713, %v5411, %v5410
  %v5413 = vrot.slane %v5317, 5
  %v5414 = vsel %vm716, %v5413, %v5412
  %v5415 = vrot.slane %v5325, 4
  %v5416 = vsel %vm719, %v5415, %v5414
  %v5417 = vrot.slane %v5333, 3
  %v5418 = vsel %vm722, %v5417, %v5416
  %v5419 = vrot.slane %v5341, 2
  %v5420 = vsel %vm725, %v5419, %v5418
  %v5421 = vrot.slane %v5349, 1
  %v5422 = vsel %vm728, %v5421, %v5420
  %v5423 = vrot.slane %v5302, 7
  %v5424 = vsel %vm710, %v5423, %v5294
  %v5425 = vrot.slane %v5310, 6
  %v5426 = vsel %vm713, %v5425, %v5424
  %v5427 = vrot.slane %v5318, 5
  %v5428 = vsel %vm716, %v5427, %v5426
  %v5429 = vrot.slane %v5326, 4
  %v5430 = vsel %vm719, %v5429, %v5428
  %v5431 = vrot.slane %v5334, 3
  %v5432 = vsel %vm722, %v5431, %v5430
  %v5433 = vrot.slane %v5342, 2
  %v5434 = vsel %vm725, %v5433, %v5432
  %v5435 = vrot.slane %v5350, 1
  %v5436 = vsel %vm728, %v5435, %v5434
  %v5437 = vrot.slane %v5303, 7
  %v5438 = vsel %vm710, %v5437, %v5295
  %v5439 = vrot.slane %v5311, 6
  %v5440 = vsel %vm713, %v5439, %v5438
  %v5441 = vrot.slane %v5319, 5
  %v5442 = vsel %vm716, %v5441, %v5440
  %v5443 = vrot.slane %v5327, 4
  %v5444 = vsel %vm719, %v5443, %v5442
  %v5445 = vrot.slane %v5335, 3
  %v5446 = vsel %vm722, %v5445, %v5444
  %v5447 = vrot.slane %v5343, 2
  %v5448 = vsel %vm725, %v5447, %v5446
  %v5449 = vrot.slane %v5351, 1
  %v5450 = vsel %vm728, %v5449, %v5448
  %v5451 = vrot.slane %v5304, 7
  %v5452 = vsel %vm710, %v5451, %v5296
  %v5453 = vrot.slane %v5312, 6
  %v5454 = vsel %vm713, %v5453, %v5452
  %v5455 = vrot.slane %v5320, 5
  %v5456 = vsel %vm716, %v5455, %v5454
  %v5457 = vrot.slane %v5328, 4
  %v5458 = vsel %vm719, %v5457, %v5456
  %v5459 = vrot.slane %v5336, 3
  %v5460 = vsel %vm722, %v5459, %v5458
  %v5461 = vrot.slane %v5344, 2
  %v5462 = vsel %vm725, %v5461, %v5460
  %v5463 = vrot.slane %v5352, 1
  %v5464 = vsel %vm728, %v5463, %v5462
  %v5465 = vpack.c.b16 %v5366, %v5366
  %v5466 = vpack.c.b16 %v5380, %v5380
  %v5467 = vpack.c.b16 %v5394, %v5394
  %v5468 = vpack.c.b16 %v5408, %v5408
  %v5469 = vpack.c.b16 %v5422, %v5422
  %v5470 = vpack.c.b16 %v5436, %v5436
  %v5471 = vpack.c.b16 %v5450, %v5450
  %v5472 = vpack.c.b16 %v5464, %v5464
  %5481 = vmatprep.subr.bf16.mxu0 0
  %5482 = vmatpush1.bf16.msra.mxu0 %v1107
  %5483 = vmatprep.subr.bf16.mxu0 0
  %5484 = vmatpush1.bf16.msra.mxu0 %v1106
  %5485 = vmatprep.subr.bf16.mxu0 0
  %5486 = vmatpush1.bf16.msra.mxu0 %v1105
  %5487 = vmatprep.subr.bf16.mxu0 0
  %5488 = vmatpush1.bf16.msra.mxu0 %v1104
  %5489 = vmatprep.subr.bf16.mxu0 0
  %5490 = vmatpush1.bf16.msra.mxu0 %v1103
  %5491 = vmatprep.subr.bf16.mxu0 0
  %5492 = vmatpush1.bf16.msra.mxu0 %v1102
  %5493 = vmatprep.subr.bf16.mxu0 0
  %5494 = vmatpush1.bf16.msra.mxu0 %v1101
  %5495 = vmatprep.subr.bf16.mxu0 0
  %5496 = vmatpush1.bf16.msra.mxu0 %v1100
  %5497 = vmatprep.subr.bf16.mxu0 0
  %5498 = vmatpush2.bf16.msra.mxu0 %v1115
  %5499 = vmatprep.subr.bf16.mxu0 0
  %5500 = vmatpush2.bf16.msra.mxu0 %v1114
  %5501 = vmatprep.subr.bf16.mxu0 0
  %5502 = vmatpush2.bf16.msra.mxu0 %v1113
  %5503 = vmatprep.subr.bf16.mxu0 0
  %5504 = vmatpush2.bf16.msra.mxu0 %v1112
  %5505 = vmatprep.subr.bf16.mxu0 0
  %5506 = vmatpush2.bf16.msra.mxu0 %v1111
  %5507 = vmatprep.subr.bf16.mxu0 0
  %5508 = vmatpush2.bf16.msra.mxu0 %v1110
  %5509 = vmatprep.subr.bf16.mxu0 0
  %5510 = vmatpush2.bf16.msra.mxu0 %v1109
  %5511 = vmatprep.subr.bf16.mxu0 0
  %5512 = vmatpush2.bf16.msra.mxu0 %v1108
  %5513 = vmatprep.mubr.bf16.mxu0 %v5466
  %5514 = vmatmul.mubr.bf16.gmra.mxu0 %v5465
  %v5515 = vpop.f32.mrf.mxu0
  %v5516 = vadd.f32 %v579, %v5515
  %v5517 = vpop.f32.mrf.mxu0
  %v5518 = vpop.f32.mrf.mxu0
  %v5519 = vpop.f32.mrf.mxu0
  %5520 = vdwg.mxu0
  %5521 = vmatprep.subr.bf16.mxu0 0
  %5522 = vmatpush1.bf16.msra.mxu0 %v1123
  %5523 = vmatprep.subr.bf16.mxu0 0
  %5524 = vmatpush1.bf16.msra.mxu0 %v1122
  %5525 = vmatprep.subr.bf16.mxu0 0
  %5526 = vmatpush1.bf16.msra.mxu0 %v1121
  %5527 = vmatprep.subr.bf16.mxu0 0
  %5528 = vmatpush1.bf16.msra.mxu0 %v1120
  %5529 = vmatprep.subr.bf16.mxu0 0
  %5530 = vmatpush1.bf16.msra.mxu0 %v1119
  %5531 = vmatprep.subr.bf16.mxu0 0
  %5532 = vmatpush1.bf16.msra.mxu0 %v1118
  %5533 = vmatprep.subr.bf16.mxu0 0
  %5534 = vmatpush1.bf16.msra.mxu0 %v1117
  %5535 = vmatprep.subr.bf16.mxu0 0
  %5536 = vmatpush1.bf16.msra.mxu0 %v1116
  %5537 = vmatprep.subr.bf16.mxu0 0
  %5538 = vmatpush2.bf16.msra.mxu0 %v1131
  %5539 = vmatprep.subr.bf16.mxu0 0
  %5540 = vmatpush2.bf16.msra.mxu0 %v1130
  %5541 = vmatprep.subr.bf16.mxu0 0
  %5542 = vmatpush2.bf16.msra.mxu0 %v1129
  %5543 = vmatprep.subr.bf16.mxu0 0
  %5544 = vmatpush2.bf16.msra.mxu0 %v1128
  %5545 = vmatprep.subr.bf16.mxu0 0
  %5546 = vmatpush2.bf16.msra.mxu0 %v1127
  %5547 = vmatprep.subr.bf16.mxu0 0
  %5548 = vmatpush2.bf16.msra.mxu0 %v1126
  %5549 = vmatprep.subr.bf16.mxu0 0
  %5550 = vmatpush2.bf16.msra.mxu0 %v1125
  %5551 = vmatprep.subr.bf16.mxu0 0
  %5552 = vmatpush2.bf16.msra.mxu0 %v1124
  %5553 = vmatprep.mubr.bf16.mxu0 %v5468
  %5554 = vmatmul.mubr.bf16.gmra.mxu0 %v5467
  %v5555 = vpop.f32.mrf.mxu0
  %v5556 = vadd.f32 %v5516, %v5555
  %v5557 = vpop.f32.mrf.mxu0
  %v5558 = vpop.f32.mrf.mxu0
  %v5559 = vpop.f32.mrf.mxu0
  %5560 = vdwg.mxu0
  %5561 = vmatprep.subr.bf16.mxu0 0
  %5562 = vmatpush1.bf16.msra.mxu0 %v1139
  %5563 = vmatprep.subr.bf16.mxu0 0
  %5564 = vmatpush1.bf16.msra.mxu0 %v1138
  %5565 = vmatprep.subr.bf16.mxu0 0
  %5566 = vmatpush1.bf16.msra.mxu0 %v1137
  %5567 = vmatprep.subr.bf16.mxu0 0
  %5568 = vmatpush1.bf16.msra.mxu0 %v1136
  %5569 = vmatprep.subr.bf16.mxu0 0
  %5570 = vmatpush1.bf16.msra.mxu0 %v1135
  %5571 = vmatprep.subr.bf16.mxu0 0
  %5572 = vmatpush1.bf16.msra.mxu0 %v1134
  %5573 = vmatprep.subr.bf16.mxu0 0
  %5574 = vmatpush1.bf16.msra.mxu0 %v1133
  %5575 = vmatprep.subr.bf16.mxu0 0
  %5576 = vmatpush1.bf16.msra.mxu0 %v1132
  %5577 = vmatprep.subr.bf16.mxu0 0
  %5578 = vmatpush2.bf16.msra.mxu0 %v1147
  %5579 = vmatprep.subr.bf16.mxu0 0
  %5580 = vmatpush2.bf16.msra.mxu0 %v1146
  %5581 = vmatprep.subr.bf16.mxu0 0
  %5582 = vmatpush2.bf16.msra.mxu0 %v1145
  %5583 = vmatprep.subr.bf16.mxu0 0
  %5584 = vmatpush2.bf16.msra.mxu0 %v1144
  %5585 = vmatprep.subr.bf16.mxu0 0
  %5586 = vmatpush2.bf16.msra.mxu0 %v1143
  %5587 = vmatprep.subr.bf16.mxu0 0
  %5588 = vmatpush2.bf16.msra.mxu0 %v1142
  %5589 = vmatprep.subr.bf16.mxu0 0
  %5590 = vmatpush2.bf16.msra.mxu0 %v1141
  %5591 = vmatprep.subr.bf16.mxu0 0
  %5592 = vmatpush2.bf16.msra.mxu0 %v1140
  %5593 = vmatprep.mubr.bf16.mxu0 %v5470
  %5594 = vmatmul.mubr.bf16.gmra.mxu0 %v5469
  %v5595 = vpop.f32.mrf.mxu0
  %v5596 = vadd.f32 %v5556, %v5595
  %v5597 = vpop.f32.mrf.mxu0
  %v5598 = vpop.f32.mrf.mxu0
  %v5599 = vpop.f32.mrf.mxu0
  %5600 = vdwg.mxu0
  %5601 = vmatprep.subr.bf16.mxu0 0
  %5602 = vmatpush1.bf16.msra.mxu0 %v1155
  %5603 = vmatprep.subr.bf16.mxu0 0
  %5604 = vmatpush1.bf16.msra.mxu0 %v1154
  %5605 = vmatprep.subr.bf16.mxu0 0
  %5606 = vmatpush1.bf16.msra.mxu0 %v1153
  %5607 = vmatprep.subr.bf16.mxu0 0
  %5608 = vmatpush1.bf16.msra.mxu0 %v1152
  %5609 = vmatprep.subr.bf16.mxu0 0
  %5610 = vmatpush1.bf16.msra.mxu0 %v1151
  %5611 = vmatprep.subr.bf16.mxu0 0
  %5612 = vmatpush1.bf16.msra.mxu0 %v1150
  %5613 = vmatprep.subr.bf16.mxu0 0
  %5614 = vmatpush1.bf16.msra.mxu0 %v1149
  %5615 = vmatprep.subr.bf16.mxu0 0
  %5616 = vmatpush1.bf16.msra.mxu0 %v1148
  %5617 = vmatprep.subr.bf16.mxu0 0
  %5618 = vmatpush2.bf16.msra.mxu0 %v1163
  %5619 = vmatprep.subr.bf16.mxu0 0
  %5620 = vmatpush2.bf16.msra.mxu0 %v1162
  %5621 = vmatprep.subr.bf16.mxu0 0
  %5622 = vmatpush2.bf16.msra.mxu0 %v1161
  %5623 = vmatprep.subr.bf16.mxu0 0
  %5624 = vmatpush2.bf16.msra.mxu0 %v1160
  %5625 = vmatprep.subr.bf16.mxu0 0
  %5626 = vmatpush2.bf16.msra.mxu0 %v1159
  %5627 = vmatprep.subr.bf16.mxu0 0
  %5628 = vmatpush2.bf16.msra.mxu0 %v1158
  %5629 = vmatprep.subr.bf16.mxu0 0
  %5630 = vmatpush2.bf16.msra.mxu0 %v1157
  %5631 = vmatprep.subr.bf16.mxu0 0
  %5632 = vmatpush2.bf16.msra.mxu0 %v1156
  %5633 = vmatprep.mubr.bf16.mxu0 %v5472
  %5634 = vmatmul.mubr.bf16.gmra.mxu0 %v5471
  %v5635 = vpop.f32.mrf.mxu0
  %v5636 = vadd.f32 %v5596, %v5635
  %v5637 = vpop.f32.mrf.mxu0
  %v5638 = vpop.f32.mrf.mxu0
  %v5639 = vpop.f32.mrf.mxu0
  %5640 = vdwg.mxu0
  %v5641 = vmax.f32 %v5636, 0.0
  %s5642 = scalar_lea.vmem %s3, 5
  %v5643 = vld [vmem:[%s5642] sm:$0x1]
  %v5645 = vlaneseq
  %v5646 = vshrl.u32 %v5645, 7
  %v5647 = vsub.s32 0, %v5646
  %v5648 = vrot.slane %v5643, %v5647
  %v5650 = vmul.f32 %v5641, %v5648
  %v5651 = vadd.f32 %v4800, %v5650
  %vm5652 = vcmask 195584
  %v5653 = vsel %vm5652, %v5651, 0.0
  %5654 = vadd.xlane.f32.xlu0 %v5653
  %v5655 = vpop.xlane.xlu0 %5654
  %v5656 = vld [vmem:[#allocation2] sm:$0x1]
  %s5657 = vtos %v5656
  %v5658 = vstv %s5657
  %v5659 = vadd.f32 %v5655, %v5658
  %vm5660 = vcmask 7168
  %5661 = vst.msk [vmem:[%s5] sm:$0xff] %vm5660, %v5659
  // Predicated region
  $region22: #{tpu_custom_call.1} parent=0 // pred_check
    _
  $region23: #{tpu_custom_call.1} parent=0 // pred_check_branch
    %5663 = sbr.rel (0) target = $region25
  $region24: #{tpu_custom_call.1} parent=0 // pred_region
    _
  $region25: #{tpu_custom_call.1} parent=0 // pred_fallthru
    _
  // Predicated region
  $region26: #{tpu_custom_call.1} parent=0 // pred_check
    _
  $region27: #{tpu_custom_call.1} parent=0 // pred_check_branch
    %5665 = sbr.rel (0) target = $region29
  $region28: #{tpu_custom_call.1} parent=0 // pred_region
    _
  $region29: #{tpu_custom_call.1} parent=0 // pred_fallthru
    _

</llo_original>
